<compile_context>
chip_gen: v6e
topology: v6e:2x2x1
jax: 0.10.0
libtpu: 0.0.40
codegen_flags: <defaults>
</compile_context>

<pallas_src>
import functools

import jax
import jax.numpy as jnp
from jax.experimental import pallas as pl
from jax.experimental.pallas import tpu as pltpu

PAD_ID = 1
EPS = 1e-10
LANES = 128  # pad the tiny class dim up to a full lane width


def _classifier_kernel(ids_ref, tab_ref, w_ref, b_ref, *rest,
                       vocab, pad_id, with_loss, loss_col):
    # ids_ref:    [tb, ts]   int32 token ids for this (batch, seq) tile
    # tab_ref:    [V, H]     bf16 embedding table (VMEM-resident, const index)
    # w_ref:      [H, Cp]    f32 head weight (C padded to Cp=128 lanes)
    # b_ref:      [1, Cp]    f32 head bias (padded)
    # labels_ref: [tb, 1]    f32 labels               (only if with_loss)
    # p_ref:      [tb, Cp]   f32 output slab: sigmoid probs (+ loss in col C)
    # counts_ref: [tb, V]    f32 scratch: per-example token histogram
    if with_loss:
        labels_ref, p_ref, counts_ref = rest
    else:
        labels_ref = None
        p_ref, counts_ref = rest

    s = pl.program_id(1)
    ns = pl.num_programs(1)

    @pl.when(s == 0)
    def _():
        counts_ref[...] = jnp.zeros_like(counts_ref)

    # --- histogram accumulation for this sequence tile ------------------
    ids = ids_ref[...]                                          # [tb, ts]
    tb, ts = ids.shape
    v_iota = jax.lax.broadcasted_iota(jnp.int32, (tb, ts, vocab), 2)
    onehot = (ids[:, :, None] == v_iota).astype(jnp.float32)    # [tb, ts, V]
    counts_ref[...] += jnp.sum(onehot, axis=1)                  # [tb, V]

    # --- finalize: pool, head, sigmoid, (loss) ---------------------------
    @pl.when(s == ns - 1)
    def _():
        counts = counts_ref[...]                                # [tb, V]
        col_v = jax.lax.broadcasted_iota(jnp.int32, counts.shape, 1)
        counts_m = jnp.where(col_v == pad_id, 0.0, counts)      # drop PAD
        cnt = jnp.sum(counts_m, axis=-1, keepdims=True)         # [tb, 1]

        # masked embedding sum == counts_m @ table  (MXU, once per batch tile)
        table = tab_ref[...].astype(jnp.float32)                # [V, H]
        pooled = jnp.dot(counts_m, table,
                         preferred_element_type=jnp.float32)
        pooled = pooled / jnp.maximum(cnt, 1.0)                 # [tb, H]

        # classification head (lane-padded Cp)
        logits = jnp.dot(pooled, w_ref[...],
                         preferred_element_type=jnp.float32) + b_ref[...]

        # sigmoid (dropout disabled: dropout_probability == 0)
        p = 1.0 / (1.0 + jnp.exp(-logits))                      # [tb, Cp]

        if with_loss:
            labels = labels_ref[...]                            # [tb, 1]
            p0 = p[:, 0:1]                                      # [tb, 1]
            per_ex = (jnp.log(p0 + EPS) * labels
                      + jnp.log((1.0 - p0) + EPS) * (1.0 - labels))
            # fold per-example loss term into the spare padded lane `loss_col`
            col = jax.lax.broadcasted_iota(jnp.int32, p.shape, 1)
            p = jnp.where(col == loss_col, per_ex, p)

        p_ref[...] = p


def default_classifier_forward(inputs, labels, emb_table, w, b,
                               *, tb=8, ts=512):
    """Mirrors DefaultClassifier.forward.
    Returns (loss, p) if labels is given, else p."""
    B, S = inputs.shape
    V, H = emb_table.shape
    C = w.shape[1]
    Cp = LANES
    assert C < Cp, "need at least one spare lane for the loss column"
    assert V % 128 == 0 and H % 128 == 0, "toy table must be lane-aligned"

    with_loss = labels is not None

    # Tile selection + padding (PAD_ID overhang is dropped by the histogram).
    tb = max(8, min(tb, B) // 8 * 8)
    ts = min(ts, S)
    Bp = -(-B // tb) * tb
    Sp = -(-S // ts) * ts
    nb, nseq = Bp // tb, Sp // ts

    ids = jnp.pad(inputs.astype(jnp.int32), ((0, Bp - B), (0, Sp - S)),
                  constant_values=PAD_ID)
    tab = emb_table.astype(jnp.bfloat16)

    # Lane-pad the tiny head so in-kernel stores are lane-dense.
    w_pad = jnp.zeros((H, Cp), jnp.float32).at[:, :C].set(w.astype(jnp.float32))
    b_pad = jnp.zeros((1, Cp), jnp.float32).at[0, :C].set(b.astype(jnp.float32))

    kernel = functools.partial(_classifier_kernel, vocab=V, pad_id=PAD_ID,
                               with_loss=with_loss, loss_col=C)

    in_specs = [
        pl.BlockSpec((tb, ts), lambda bi, si: (bi, si)),     # ids (streamed)
        pl.BlockSpec((V, H), lambda bi, si: (0, 0)),         # emb table (VMEM)
        pl.BlockSpec((H, Cp), lambda bi, si: (0, 0)),        # head weight
        pl.BlockSpec((1, Cp), lambda bi, si: (0, 0)),        # head bias
    ]
    args = [ids, tab, w_pad, b_pad]
    if with_loss:
        labels_arr = jnp.pad(labels.astype(jnp.float32).reshape(B, 1),
                             ((0, Bp - B), (0, 0)))
        in_specs.append(pl.BlockSpec((tb, 1), lambda bi, si: (bi, 0)))
        args.append(labels_arr)

    p_pad = pl.pallas_call(
        kernel,
        out_shape=jax.ShapeDtypeStruct((Bp, Cp), jnp.float32),
        grid_spec=pltpu.PrefetchScalarGridSpec(
            num_scalar_prefetch=0,
            grid=(nb, nseq),
            in_specs=in_specs,
            out_specs=pl.BlockSpec((tb, Cp), lambda bi, si: (bi, 0)),
            scratch_shapes=[pltpu.VMEM((tb, V), jnp.float32)],  # histogram acc
        ),
        compiler_params=pltpu.CompilerParams(
            dimension_semantics=("parallel", "arbitrary"),
            vmem_limit_bytes=48 * 1024 * 1024),
    )(*args)

    p = p_pad[:B, :C]
    if not with_loss:
        return p
    loss = -jnp.mean(p_pad[:B, C])   # cross-tile mean outside (parallel-safe)
    return loss, p


def _reference(inputs, labels, emb_table, w, b):
    emb = emb_table.astype(jnp.float32)[inputs]
    mask = (inputs != PAD_ID).astype(jnp.float32)
    pooled = (emb * mask[:, :, None]).sum(1) / jnp.maximum(
        mask.sum(1, keepdims=True), 1.0)
    logits = pooled @ w + b
    p = 1.0 / (1.0 + jnp.exp(-logits))
    lab = labels.astype(jnp.float32)
    loss = -(jnp.log(p[:, 0] + EPS) * lab
             + jnp.log((1 - p)[:, 0] + EPS) * (1 - lab)).mean()
    return loss, p


if __name__ == "__main__":
    # Small but tile-aligned toy shapes: 2 batch tiles (keeps v7x megacore fed).
    B, S, H, C, VOCAB = 16, 256, 128, 2, 256

    key = jax.random.PRNGKey(0)
    k_emb, k_w, k_b, k_ids, k_len, k_lab = jax.random.split(key, 6)

    # Deterministic synthetic parameters (embeddings live in bf16).
    emb_table = (jax.random.normal(k_emb, (VOCAB, H), jnp.float32)
                 * 0.02).astype(jnp.bfloat16)
    w = jax.random.normal(k_w, (H, C), jnp.float32) * 0.1
    b = jax.random.normal(k_b, (C,), jnp.float32) * 0.01

    # Token ids in [2, VOCAB); pad each sequence tail with PAD_ID (=1).
    inputs = jax.random.randint(k_ids, (B, S), 2, VOCAB, dtype=jnp.int32)
    lens = jax.random.randint(k_len, (B, 1), S // 4, S + 1, dtype=jnp.int32)
    inputs = jnp.where(jnp.arange(S)[None, :] < lens, inputs, PAD_ID)
    labels = jax.random.randint(k_lab, (B,), 0, 2, dtype=jnp.int32)

    loss, p = default_classifier_forward(inputs, labels, emb_table, w, b)
    loss = jax.block_until_ready(loss)
    p = jax.block_until_ready(p)

    ref_loss, ref_p = _reference(inputs, labels, emb_table, w, b)
    assert p.shape == (B, C)
    assert jnp.allclose(p, ref_p, atol=2e-5), (p, ref_p)
    assert jnp.allclose(loss, ref_loss, atol=2e-5), (loss, ref_loss)

    # labels=None path returns probabilities only (no labels DMA, no loss ops).
    p_only = jax.block_until_ready(
        default_classifier_forward(inputs, None, emb_table, w, b))
    assert jnp.allclose(p_only, ref_p, atol=2e-5)

    print("KERNEL_OK")
</pallas_src>

<mosaic_0001>
module attributes {stable_mosaic.version = 11 : i64} {
  func.func @_classifier_kernel(%arg0: i32, %arg1: i32, %arg2: memref<8x256xi32, #tpu.memory_space<vmem>>, %arg3: memref<256x128xbf16, #tpu.memory_space<vmem>>, %arg4: memref<128x128xf32, #tpu.memory_space<vmem>>, %arg5: memref<1x128xf32, #tpu.memory_space<vmem>>, %arg6: memref<8x1xf32, #tpu.memory_space<vmem>>, %arg7: memref<8x128xf32, #tpu.memory_space<vmem>>, %arg8: memref<8x256xf32, #tpu.memory_space<vmem>>) attributes {dimension_semantics = [#tpu.dimension_semantics<parallel>, #tpu.dimension_semantics<arbitrary>], iteration_bounds = array<i64: 2, 1>, scalar_prefetch = 0 : i64, scratch_operands = 1 : i64, tpu.core_type = #tpu.core_type<tc>, window_params = [{transform_indices = @transform_0, window_bounds = array<i64: 8, 256>}, {pipeline_mode = #tpu.pipeline_mode<synchronous>, transform_indices = @transform_1, window_bounds = array<i64: 256, 128>}, {pipeline_mode = #tpu.pipeline_mode<synchronous>, transform_indices = @transform_2, window_bounds = array<i64: 128, 128>}, {pipeline_mode = #tpu.pipeline_mode<synchronous>, transform_indices = @transform_3, window_bounds = array<i64: 1, 128>}, {transform_indices = @transform_4, window_bounds = array<i64: 8, 1>}, {transform_indices = @transform_5, window_bounds = array<i64: 8, 128>}]} {
    %c0_i32 = arith.constant 0 : i32
    %0 = arith.cmpi eq, %arg1, %c0_i32 : i32
    %1 = arith.extui %0 : i1 to i32
    %c0_i32_0 = arith.constant 0 : i32
    %2 = arith.cmpi ne, %1, %c0_i32_0 : i32
    scf.if %2 {
      %cst_8 = arith.constant 0.000000e+00 : f32
      %17 = vector.broadcast %cst_8 : f32 to vector<8x256xf32>
      %c0_9 = arith.constant 0 : index
      %c0_10 = arith.constant 0 : index
      %18 = vector.load %arg8[%c0_9, %c0_10] : memref<8x256xf32, #tpu.memory_space<vmem>>, vector<8x256xf32>
      tpu.vector_store %arg8[%c0_9, %c0_10], %17 {strides = array<i32>} : memref<8x256xf32, #tpu.memory_space<vmem>>, vector<8x256xf32>,
    } else {
    }
    %c0 = arith.constant 0 : index
    %c0_1 = arith.constant 0 : index
    %3 = vector.load %arg2[%c0, %c0_1] : memref<8x256xi32, #tpu.memory_space<vmem>>, vector<8x256xi32>
    %4 = tpu.iota {dimensions = array<i32: 2>} : vector<8x256x256xi32>
    %5 = vector.shape_cast %3 : vector<8x256xi32> to vector<8x256x1xi32>
    %6 = vector.broadcast %5 : vector<8x256x1xi32> to vector<8x256x256xi32>
    %7 = arith.cmpi eq, %6, %4 : vector<8x256x256xi32>
    %8 = arith.extui %7 : vector<8x256x256xi1> to vector<8x256x256xi32>
    %9 = arith.sitofp %8 : vector<8x256x256xi32> to vector<8x256x256xf32>
    %c0_2 = arith.constant 0 : index
    %c0_3 = arith.constant 0 : index
    %10 = vector.load %arg8[%c0_2, %c0_3] : memref<8x256xf32, #tpu.memory_space<vmem>>, vector<8x256xf32>
    %cst = arith.constant dense<0.000000e+00> : vector<8x256xf32>
    %11 = vector.multi_reduction <add>, %9, %cst [1] : vector<8x256x256xf32> to vector<8x256xf32>
    %12 = arith.addf %10, %11 : vector<8x256xf32>
    %c0_4 = arith.constant 0 : index
    %c0_5 = arith.constant 0 : index
    %13 = vector.load %arg8[%c0_4, %c0_5] : memref<8x256xf32, #tpu.memory_space<vmem>>, vector<8x256xf32>
    tpu.vector_store %arg8[%c0_4, %c0_5], %12 {strides = array<i32>} : memref<8x256xf32, #tpu.memory_space<vmem>>, vector<8x256xf32>,
    %c0_i32_6 = arith.constant 0 : i32
    %14 = arith.cmpi eq, %arg1, %c0_i32_6 : i32
    %15 = arith.extui %14 : i1 to i32
    %c0_i32_7 = arith.constant 0 : i32
    %16 = arith.cmpi ne, %15, %c0_i32_7 : i32
    scf.if %16 {
      %c0_8 = arith.constant 0 : index
      %c0_9 = arith.constant 0 : index
      %17 = vector.load %arg8[%c0_8, %c0_9] : memref<8x256xf32, #tpu.memory_space<vmem>>, vector<8x256xf32>
      %18 = tpu.iota {dimensions = array<i32: 1>} : vector<8x256xi32>
      %c1_i32 = arith.constant 1 : i32
      %19 = vector.broadcast %c1_i32 : i32 to vector<8x256xi32>
      %20 = arith.cmpi eq, %18, %19 : vector<8x256xi32>
      %cst_10 = arith.constant 0.000000e+00 : f32
      %21 = vector.broadcast %cst_10 : f32 to vector<8x256xf32>
      %22 = arith.select %20, %21, %17 : vector<8x256xi1>, vector<8x256xf32>
      %cst_11 = arith.constant dense<0.000000e+00> : vector<8xf32>
      %23 = vector.multi_reduction <add>, %22, %cst_11 [1] : vector<8x256xf32> to vector<8xf32>
      %24 = vector.shape_cast %23 : vector<8xf32> to vector<8x1xf32>
      %c0_12 = arith.constant 0 : index
      %c0_13 = arith.constant 0 : index
      %25 = vector.load %arg3[%c0_12, %c0_13] : memref<256x128xbf16, #tpu.memory_space<vmem>>, vector<256x128xbf16>
      %26 = arith.extf %25 : vector<256x128xbf16> to vector<256x128xf32>
      %cst_14 = arith.constant dense<0.000000e+00> : vector<8x128xf32>
      %27 = tpu.matmul %22, %26, %cst_14 {dimension_numbers = #tpu.dot_dimension_numbers<[1], [0], [0], [1], [0, 0, 1, 1], [], []>} : vector<8x256xf32>, vector<256x128xf32>, vector<8x128xf32> -> vector<8x128xf32>
      %cst_15 = arith.constant 1.000000e+00 : f32
      %28 = vector.broadcast %cst_15 : f32 to vector<8x1xf32>
      %29 = arith.maximumf %24, %28 : vector<8x1xf32>
      %30 = vector.broadcast %29 : vector<8x1xf32> to vector<8x128xf32>
      %31 = arith.divf %27, %30 : vector<8x128xf32>
      %c0_16 = arith.constant 0 : index
      %c0_17 = arith.constant 0 : index
      %32 = vector.load %arg4[%c0_16, %c0_17] : memref<128x128xf32, #tpu.memory_space<vmem>>, vector<128x128xf32>
      %cst_18 = arith.constant dense<0.000000e+00> : vector<8x128xf32>
      %33 = tpu.matmul %31, %32, %cst_18 {dimension_numbers = #tpu.dot_dimension_numbers<[1], [0], [0], [1], [0, 0, 1, 1], [], []>} : vector<8x128xf32>, vector<128x128xf32>, vector<8x128xf32> -> vector<8x128xf32>
      %c0_19 = arith.constant 0 : index
      %c0_20 = arith.constant 0 : index
      %34 = vector.load %arg5[%c0_19, %c0_20] : memref<1x128xf32, #tpu.memory_space<vmem>>, vector<1x128xf32>
      %35 = vector.broadcast %34 : vector<1x128xf32> to vector<8x128xf32>
      %36 = arith.addf %33, %35 : vector<8x128xf32>
      %cst_21 = arith.constant 0.000000e+00 : f32
      %37 = vector.broadcast %cst_21 : f32 to vector<8x128xf32>
      %38 = arith.subf %37, %36 : vector<8x128xf32>
      %39 = math.exp %38 : vector<8x128xf32>
      %cst_22 = arith.constant 1.000000e+00 : f32
      %40 = vector.broadcast %cst_22 : f32 to vector<8x128xf32>
      %41 = arith.addf %40, %39 : vector<8x128xf32>
      %cst_23 = arith.constant 1.000000e+00 : f32
      %42 = vector.broadcast %cst_23 : f32 to vector<8x128xf32>
      %43 = arith.divf %42, %41 : vector<8x128xf32>
      %c0_24 = arith.constant 0 : index
      %c0_25 = arith.constant 0 : index
      %44 = vector.load %arg6[%c0_24, %c0_25] : memref<8x1xf32, #tpu.memory_space<vmem>>, vector<8x1xf32>
      %45 = vector.extract_strided_slice %43 {offsets = [0, 0], sizes = [8, 1], strides = [1, 1]} : vector<8x128xf32> to vector<8x1xf32>
      %cst_26 = arith.constant 1.000000e-10 : f32
      %46 = vector.broadcast %cst_26 : f32 to vector<8x1xf32>
      %47 = arith.addf %45, %46 : vector<8x1xf32>
      %48 = math.log %47 : vector<8x1xf32>
      %49 = arith.mulf %48, %44 : vector<8x1xf32>
      %cst_27 = arith.constant 1.000000e+00 : f32
      %50 = vector.broadcast %cst_27 : f32 to vector<8x1xf32>
      %51 = arith.subf %50, %45 : vector<8x1xf32>
      %cst_28 = arith.constant 1.000000e-10 : f32
      %52 = vector.broadcast %cst_28 : f32 to vector<8x1xf32>
      %53 = arith.addf %51, %52 : vector<8x1xf32>
      %54 = math.log %53 : vector<8x1xf32>
      %cst_29 = arith.constant 1.000000e+00 : f32
      %55 = vector.broadcast %cst_29 : f32 to vector<8x1xf32>
      %56 = arith.subf %55, %44 : vector<8x1xf32>
      %57 = arith.mulf %54, %56 : vector<8x1xf32>
      %58 = arith.addf %49, %57 : vector<8x1xf32>
      %59 = tpu.iota {dimensions = array<i32: 1>} : vector<8x128xi32>
      %c2_i32 = arith.constant 2 : i32
      %60 = vector.broadcast %c2_i32 : i32 to vector<8x128xi32>
      %61 = arith.cmpi eq, %59, %60 : vector<8x128xi32>
      %62 = vector.shape_cast %58 : vector<8x1xf32> to vector<8x1xf32>
      %63 = vector.broadcast %62 : vector<8x1xf32> to vector<8x128xf32>
      %64 = arith.select %61, %63, %43 : vector<8x128xi1>, vector<8x128xf32>
      %c0_30 = arith.constant 0 : index
      %c0_31 = arith.constant 0 : index
      %65 = vector.load %arg7[%c0_30, %c0_31] : memref<8x128xf32, #tpu.memory_space<vmem>>, vector<8x128xf32>
      tpu.vector_store %arg7[%c0_30, %c0_31], %64 {strides = array<i32>} : memref<8x128xf32, #tpu.memory_space<vmem>>, vector<8x128xf32>,
    } else {
    }
    return
  }
  func.func @transform_0(%arg0: i32, %arg1: i32) -> (i32, i32) {
    %c0_i32 = arith.constant 0 : i32
    return %arg0, %arg1 : i32, i32
  }
  func.func @transform_1(%arg0: i32, %arg1: i32) -> (i32, i32) {
    %c0_i32 = arith.constant 0 : i32
    %c0_i32_0 = arith.constant 0 : i32
    %c0_i32_1 = arith.constant 0 : i32
    return %c0_i32, %c0_i32_0 : i32, i32
  }
  func.func @transform_2(%arg0: i32, %arg1: i32) -> (i32, i32) {
    %c0_i32 = arith.constant 0 : i32
    %c0_i32_0 = arith.constant 0 : i32
    %c0_i32_1 = arith.constant 0 : i32
    return %c0_i32, %c0_i32_0 : i32, i32
  }
  func.func @transform_3(%arg0: i32, %arg1: i32) -> (i32, i32) {
    %c0_i32 = arith.constant 0 : i32
    %c0_i32_0 = arith.constant 0 : i32
    %c0_i32_1 = arith.constant 0 : i32
    return %c0_i32, %c0_i32_0 : i32, i32
  }
  func.func @transform_4(%arg0: i32, %arg1: i32) -> (i32, i32) {
    %c0_i32 = arith.constant 0 : i32
    %c0_i32_0 = arith.constant 0 : i32
    return %arg0, %c0_i32 : i32, i32
  }
  func.func @transform_5(%arg0: i32, %arg1: i32) -> (i32, i32) {
    %c0_i32 = arith.constant 0 : i32
    %c0_i32_0 = arith.constant 0 : i32
    return %arg0, %c0_i32 : i32, i32
  }
}

</mosaic_0001>

<llo_original>
// kernel: tpu_custom_call.1
$region0: #{tpu_custom_call.1}
  #allocation0 [shape = 'u32[]', space=smem, size = 0x4, offset = 0x4, fixed_abs, tag = 'smem constant byte address 0x4 - core index']
  #allocation1 [shape = 'u32[144,128]{1,0:T(1,128)}', space=vmem, size = 0x12000, scoped, tag = 'internal scratch']
  #allocation2 [shape = 'f32[8,256]{1,0:T(8,128)}', space=vmem, size = 0x2000, scoped, tag = 'scratch operand']
  %s0 = inlined_call_operand.hbm [shape: s32[16,256], index: 0, kind: input, shape index: {}]
  %s1 = inlined_call_operand.hbm [shape: bf16[256,128], index: 1, kind: input, shape index: {}]
  %s2 = inlined_call_operand.hbm [shape: f32[128,128], index: 2, kind: input, shape index: {}]
  %s3 = inlined_call_operand.vmem [shape: f32[1,128], index: 3, kind: input, shape index: {}]
  %s4 = inlined_call_operand.vmem [shape: f32[16,1], index: 4, kind: input, shape index: {}]
  %s5 = inlined_call_operand.hbm [shape: f32[16,128], index: 5, kind: output, shape index: {}]
  %s6 = sld [smem:[#allocation0]]
  $region73: #{tpu_custom_call.1} parent=0
    _
  %s8 = ssub.s32 1, %s6
  %s9 = scalar_select 0, %s8, %s6
  $region1: #{tpu_custom_call.1} parent=0
    #allocation3 [shape = 'u8[16384]{0}', space=vmem, size = 0x4000, scoped, tag = 'input window, operand 0']
    #allocation4 [shape = 's32[2]{0}', space=sflag, size = 0x8, scoped, tag = 'scoped memory for tpu_custom_call.1']
    #allocation5 [shape = 's32[2]{0}', space=sflag, size = 0x8, scoped, tag = 'scoped memory for tpu_custom_call.1']
    #allocation6 [shape = 'u8[65536]{0}', space=vmem, size = 0x10000, scoped, tag = 'input window, operand 1, single buffered']
    #allocation7 [shape = 's32[1]{0}', space=sflag, size = 0x4, scoped, tag = 'scoped memory for tpu_custom_call.1']
    #allocation8 [shape = 'u8[65536]{0}', space=vmem, size = 0x10000, scoped, tag = 'input window, operand 2, single buffered']
    #allocation9 [shape = 'u8[8192]{0}', space=vmem, size = 0x2000, scoped, tag = 'output window, operand 0']
    %10 = vsyncpa [#allocation4], 0
    %s11 = scalar_lea.sflag [#allocation4], 1
    %12 = vsyncpa %s11, 0
    %13 = vsyncpa [#allocation7], 0
    %14 = vsyncpa [#allocation5], 0
    %s15 = scalar_lea.sflag [#allocation5], 1
    %16 = vsyncpa %s15, 0
    loop: start=0, step=1, limit=4
    $region2: #{tpu_custom_call.1} parent=1 // loop_pre_header
      _
    $region3: #{tpu_custom_call.1} parent=1 // loop_header
      %s18 = sphi 0, %s22
      %p19 = scmp.ge.s32.totalorder %s18, 4
      %s25 = sphi 0, %s37
      %s26 = sphi 0, %s33
      %s27 = sphi 0, %s25
      %s28 = sphi 0, %s26
      %s29 = sphi 0, %s27
      %s30 = sphi 0, %s28
      %s42 = sphi 0, %s44
      %s45 = sphi 0, %s42
      %s46 = sphi 0, %s45
      %s62 = sphi 0, %s46
      %s66 = sphi 0, %s66
      %s68 = sphi 0, %s66
      %s69 = sphi 0, %s68
      %s83 = sphi 0, %s69
      %s87 = sphi 0, %s87
      %s89 = sphi 0, %s87
      %s90 = sphi 0, %s89
      %s104 = sphi 0, %s90
      %s108 = sphi 0, %s108
      %s110 = sphi 0, %s108
      %s111 = sphi 0, %s110
      %s125 = sphi 0, %s111
      %s131 = sphi 0, %s133
      %s134 = sphi 0, %s131
      %s135 = sphi 0, %s134
      %s151 = sphi 0, %s135
      %s157 = sphi 0, %s159
      %s160 = sphi 0, %s157
      %s161 = sphi 0, %s160
      %s177 = sphi 0, %s161
    $region4: #{tpu_custom_call.1} parent=1 // loop_header_branch
      %21 = sbr.rel (%p19) target = $region8
    $region5: #{tpu_custom_call.1} parent=1 // loop_body
      %s23 = ssub.s32 %s18, 1
      %s24 = ssub.s32 %s18, 2
      %s31 = sadd.s32 1, %s26
      %p32 = scmp.ge.s32.totalorder %s31, 1
      %s33 = scalar_select %p32, 0, %s31
      %s34 = sadd.s32 1, %s25
      %s35 = scalar_select %p32, %s34, %s25
      %p36 = scmp.ge.s32.totalorder %s35, 2
      %s37 = scalar_select %p36, 0, %s35
      %s38 = ssub.s32 %s25, %s37
      %s39 = ssub.s32 %s26, %s33
      %s40 = sor.u32 %s38, %s39
      %p41 = scmp.eq.s32.totalorder %s40, 0
      %s43 = sadd.s32 %s42, 1
      %s44 = scalar_select %p41, %s42, %s43
      %p47 = pneg %p41
      %p48 = scmp.eq.s32.totalorder %s18, 1
      %p49 = por %p47, %p48
      %p50 = scmp.ne.s32.totalorder %s42, %s45
      %p51 = scmp.eq.s32.totalorder %s18, 0
      %p52 = por %p50, %p51
      %p53 = scmp.ne.s32.totalorder %s42, %s45
      %p54 = scmp.eq.s32.totalorder %s23, 1
      %p55 = por %p53, %p54
      %p56 = scmp.ne.s32.totalorder %s45, %s46
      %p57 = scmp.eq.s32.totalorder %s23, 0
      %p58 = por %p56, %p57
      %p59 = scmp.ne.s32.totalorder %s45, %s46
      %p60 = scmp.eq.s32.totalorder %s24, 1
      %p61 = por %p59, %p60
      %p63 = scmp.ne.s32.totalorder %s46, %s62
      %p64 = scmp.eq.s32.totalorder %s24, 0
      %p65 = por %p63, %p64
      %s67 = sadd.s32 %s66, 1
      %p70 = scmp.eq.s32.totalorder %s18, 1
      %p71 = scmp.ne.s32.totalorder %s66, %s68
      %p72 = scmp.eq.s32.totalorder %s18, 0
      %p73 = por %p71, %p72
      %p74 = scmp.ne.s32.totalorder %s66, %s68
      %p75 = scmp.eq.s32.totalorder %s23, 1
      %p76 = por %p74, %p75
      %p77 = scmp.ne.s32.totalorder %s68, %s69
      %p78 = scmp.eq.s32.totalorder %s23, 0
      %p79 = por %p77, %p78
      %p80 = scmp.ne.s32.totalorder %s68, %s69
      %p81 = scmp.eq.s32.totalorder %s24, 1
      %p82 = por %p80, %p81
      %p84 = scmp.ne.s32.totalorder %s69, %s83
      %p85 = scmp.eq.s32.totalorder %s24, 0
      %p86 = por %p84, %p85
      %s88 = sadd.s32 %s87, 1
      %p91 = scmp.eq.s32.totalorder %s18, 1
      %p92 = scmp.ne.s32.totalorder %s87, %s89
      %p93 = scmp.eq.s32.totalorder %s18, 0
      %p94 = por %p92, %p93
      %p95 = scmp.ne.s32.totalorder %s87, %s89
      %p96 = scmp.eq.s32.totalorder %s23, 1
      %p97 = por %p95, %p96
      %p98 = scmp.ne.s32.totalorder %s89, %s90
      %p99 = scmp.eq.s32.totalorder %s23, 0
      %p100 = por %p98, %p99
      %p101 = scmp.ne.s32.totalorder %s89, %s90
      %p102 = scmp.eq.s32.totalorder %s24, 1
      %p103 = por %p101, %p102
      %p105 = scmp.ne.s32.totalorder %s90, %s104
      %p106 = scmp.eq.s32.totalorder %s24, 0
      %p107 = por %p105, %p106
      %s109 = sadd.s32 %s108, 1
      %p112 = scmp.eq.s32.totalorder %s18, 1
      %p113 = scmp.ne.s32.totalorder %s108, %s110
      %p114 = scmp.eq.s32.totalorder %s18, 0
      %p115 = por %p113, %p114
      %p116 = scmp.ne.s32.totalorder %s108, %s110
      %p117 = scmp.eq.s32.totalorder %s23, 1
      %p118 = por %p116, %p117
      %p119 = scmp.ne.s32.totalorder %s110, %s111
      %p120 = scmp.eq.s32.totalorder %s23, 0
      %p121 = por %p119, %p120
      %p122 = scmp.ne.s32.totalorder %s110, %s111
      %p123 = scmp.eq.s32.totalorder %s24, 1
      %p124 = por %p122, %p123
      %p126 = scmp.ne.s32.totalorder %s111, %s125
      %p127 = scmp.eq.s32.totalorder %s24, 0
      %p128 = por %p126, %p127
      %s129 = ssub.s32 %s25, %s37
      %p130 = scmp.eq.s32.totalorder %s129, 0
      %s132 = sadd.s32 %s131, 1
      %s133 = scalar_select %p130, %s131, %s132
      %p136 = pneg %p130
      %p137 = scmp.eq.s32.totalorder %s18, 1
      %p138 = por %p136, %p137
      %p139 = scmp.ne.s32.totalorder %s131, %s134
      %p140 = scmp.eq.s32.totalorder %s18, 0
      %p141 = por %p139, %p140
      %p142 = scmp.ne.s32.totalorder %s131, %s134
      %p143 = scmp.eq.s32.totalorder %s23, 1
      %p144 = por %p142, %p143
      %p145 = scmp.ne.s32.totalorder %s134, %s135
      %p146 = scmp.eq.s32.totalorder %s23, 0
      %p147 = por %p145, %p146
      %p148 = scmp.ne.s32.totalorder %s134, %s135
      %p149 = scmp.eq.s32.totalorder %s24, 1
      %p150 = por %p148, %p149
      %p152 = scmp.ne.s32.totalorder %s135, %s151
      %p153 = scmp.eq.s32.totalorder %s24, 0
      %p154 = por %p152, %p153
      %s155 = ssub.s32 %s25, %s37
      %p156 = scmp.eq.s32.totalorder %s155, 0
      %s158 = sadd.s32 %s157, 1
      %s159 = scalar_select %p156, %s157, %s158
      %p162 = pneg %p156
      %p163 = scmp.eq.s32.totalorder %s18, 1
      %p164 = por %p162, %p163
      %p165 = scmp.ne.s32.totalorder %s157, %s160
      %p166 = scmp.eq.s32.totalorder %s18, 0
      %p167 = por %p165, %p166
      %p168 = scmp.ne.s32.totalorder %s157, %s160
      %p169 = scmp.eq.s32.totalorder %s23, 1
      %p170 = por %p168, %p169
      %p171 = scmp.ne.s32.totalorder %s160, %s161
      %p172 = scmp.eq.s32.totalorder %s23, 0
      %p173 = por %p171, %p172
      %p174 = scmp.ne.s32.totalorder %s160, %s161
      %p175 = scmp.eq.s32.totalorder %s24, 1
      %p176 = por %p174, %p175
      %p178 = scmp.ne.s32.totalorder %s161, %s177
      %p179 = scmp.eq.s32.totalorder %s24, 0
      %p180 = por %p178, %p179
      %p181 = scmp.le.s32.totalorder 1, %s18
      %p182 = scmp.lt.s32.totalorder %s18, 3
      %p183 = pnand %p181, %p182
      %p184 = pneg %p183
      // Predicated region
      $region9: #{tpu_custom_call.1} parent=5 // pred_check
        _
      $region10: #{tpu_custom_call.1} parent=5 // pred_check_branch
        %186 = sbr.rel (%p183) target = $region12
      $region11: #{tpu_custom_call.1} parent=5 // pred_region
        %s187 = ssub.s32 %s18, 1
        // Predicated region
        $region13: #{tpu_custom_call.1} parent=11 // pred_check
          %p188 = pneg %p79
        $region14: #{tpu_custom_call.1} parent=11 // pred_check_branch
          %190 = sbr.rel (%p188) target = $region16
        $region15: #{tpu_custom_call.1} parent=11 // pred_region
          %s192 = ssub.s32 2048, 2048
          %193 = vsyncadd [#allocation7], %s192
          %s194 = sshll.u32 [#allocation6], 4
          %s195 = int_to_ptr.vmem [resolvable:$true] %s194
          %200 = dma.hbm_to_vmem [thread:$0]  %s1, 2048, %s195, [#allocation7], 64, 64, 4
        $region16: #{tpu_custom_call.1} parent=11 // pred_fallthru
          _
        // Predicated region
        $region17: #{tpu_custom_call.1} parent=11 // pred_check
          %p201 = pneg %p100
        $region18: #{tpu_custom_call.1} parent=11 // pred_check_branch
          %203 = sbr.rel (%p201) target = $region20
        $region19: #{tpu_custom_call.1} parent=11 // pred_region
          %s205 = ssub.s32 2048, 2048
          %206 = vsyncadd [#allocation7], %s205
          %s207 = sshll.u32 [#allocation8], 4
          %s208 = int_to_ptr.vmem [resolvable:$true] %s207
          %213 = dma.hbm_to_vmem [thread:$0]  %s2, 2048, %s208, [#allocation7], 128, 128, 8
        $region20: #{tpu_custom_call.1} parent=11 // pred_fallthru
          _
        // Predicated region
        $region21: #{tpu_custom_call.1} parent=11 // pred_check
          %p214 = pneg %p121
        $region22: #{tpu_custom_call.1} parent=11 // pred_check_branch
          %216 = sbr.rel (%p214) target = $region24
        $region23: #{tpu_custom_call.1} parent=11 // pred_region
          _
        $region24: #{tpu_custom_call.1} parent=11 // pred_fallthru
          _
      $region12: #{tpu_custom_call.1} parent=5 // pred_fallthru
        _
      %p217 = scmp.lt.s32.totalorder %s18, 2
      // Predicated region
      $region25: #{tpu_custom_call.1} parent=5 // pred_check
        %p218 = pneg %p217
      $region26: #{tpu_custom_call.1} parent=5 // pred_check_branch
        %220 = sbr.rel (%p218) target = $region28
      $region27: #{tpu_custom_call.1} parent=5 // pred_region
        // Predicated region
        $region29: #{tpu_custom_call.1} parent=27 // pred_check
          %p221 = pneg %p52
        $region30: #{tpu_custom_call.1} parent=27 // pred_check_branch
          %223 = sbr.rel (%p221) target = $region32
        $region31: #{tpu_custom_call.1} parent=27 // pred_region
          %s224 = sand.u32 %s42, 1
          %s225 = scalar_lea.sflag [#allocation4], %s224
          %s226 = sand.u32 %s42, 1
          %s227 = smul.addr %s226, 16
          %s228 = scalar_lea.vmem [#allocation3], %s227
          %s229 = smul.u32 2, %s26
          %s231 = ssub.s32 256, 256
          %232 = vsyncadd %s225, %s231
          %s233 = smul.addr %s25, 2
          %s234 = sadd.s32 %s229, %s233
          %s235 = smul.addr %s234, 128
          %s236 = scalar_lea.hbm %s0, %s235
          %s238 = sshll.u32 %s228, 4
          %s239 = int_to_ptr.vmem [resolvable:$true] %s238
          %241 = dma.hbm_to_vmem [thread:$0]  %s236, 256, %s239, %s225
        $region32: #{tpu_custom_call.1} parent=27 // pred_fallthru
          _
        // Predicated region
        $region33: #{tpu_custom_call.1} parent=27 // pred_check
          %p242 = pneg %p141
        $region34: #{tpu_custom_call.1} parent=27 // pred_check_branch
          %244 = sbr.rel (%p242) target = $region36
        $region35: #{tpu_custom_call.1} parent=27 // pred_region
          %p245 = scmp.lt.s32.totalorder %s25, 1
          %s246 = scalar_select %p245, %s25, 1
          %s247 = smul.addr %s246, 8
          %s248 = scalar_lea.vmem %s4, %s247
        $region36: #{tpu_custom_call.1} parent=27 // pred_fallthru
          _
      $region28: #{tpu_custom_call.1} parent=5 // pred_fallthru
        _
      %p249 = scmp.le.s32.totalorder 1, %s18
      %p250 = scmp.lt.s32.totalorder %s18, 3
      %p251 = pnand %p249, %p250
      %p252 = pneg %p251
      // Predicated region
      $region37: #{tpu_custom_call.1} parent=5 // pred_check
        _
      $region38: #{tpu_custom_call.1} parent=5 // pred_check_branch
        %254 = sbr.rel (%p251) target = $region40
      $region39: #{tpu_custom_call.1} parent=5 // pred_region
        %s255 = ssub.s32 %s18, 1
        %s256 = sand.u32 %s45, 1
        %s257 = scalar_lea.sflag [#allocation4], %s256
        %s258 = sand.u32 %s45, 1
        %s259 = smul.addr %s258, 16
        %s260 = scalar_lea.vmem [#allocation3], %s259
        // Predicated region
        $region41: #{tpu_custom_call.1} parent=39 // pred_check
          %p261 = pneg %p58
        $region42: #{tpu_custom_call.1} parent=39 // pred_check_branch
          %263 = sbr.rel (%p261) target = $region44
        $region43: #{tpu_custom_call.1} parent=39 // pred_region
          %264 = dma.done %s257, 256
        $region44: #{tpu_custom_call.1} parent=39 // pred_fallthru
          _
        // Predicated region
        $region45: #{tpu_custom_call.1} parent=39 // pred_check
          %p265 = pneg %p79
        $region46: #{tpu_custom_call.1} parent=39 // pred_check_branch
          %267 = sbr.rel (%p265) target = $region48
        $region47: #{tpu_custom_call.1} parent=39 // pred_region
          %268 = dma.done [#allocation7], 2048
        $region48: #{tpu_custom_call.1} parent=39 // pred_fallthru
          _
        // Predicated region
        $region49: #{tpu_custom_call.1} parent=39 // pred_check
          %p269 = pneg %p100
        $region50: #{tpu_custom_call.1} parent=39 // pred_check_branch
          %271 = sbr.rel (%p269) target = $region52
        $region51: #{tpu_custom_call.1} parent=39 // pred_region
          %272 = dma.done [#allocation7], 2048
        $region52: #{tpu_custom_call.1} parent=39 // pred_fallthru
          _
        %s273 = sand.u32 %s45, 1
        %s274 = scalar_lea.sflag [#allocation4], %s273
        %s275 = sand.u32 %s45, 1
        %s276 = smul.addr %s275, 16
        %s277 = scalar_lea.vmem [#allocation3], %s276
        %p278 = pneg %p58
        %p279 = pneg %p55
        %p280 = pneg %p79
        %p281 = pneg %p76
        %p282 = pneg %p100
        %p283 = pneg %p97
        %p284 = pneg %p121
        %p285 = pneg %p118
        %p286 = scmp.lt.s32.totalorder %s27, 1
        %s287 = scalar_select %p286, %s27, 1
        %s288 = smul.addr %s287, 8
        %s289 = scalar_lea.vmem %s4, %s288
        %p290 = pneg %p147
        %p291 = pneg %p144
        %p292 = pneg %p173
        %p293 = pneg %p170
        %s294 = sand.u32 %s160, 1
        %s295 = scalar_lea.sflag [#allocation5], %s294
        %s296 = sand.u32 %s160, 1
        %s297 = smul.addr %s296, 8
        %s298 = scalar_lea.vmem [#allocation9], %s297
        %s299 = smul.u32 2, %s28
        %p300 = scmp.lt.s32.totalorder %s27, 1
        %s301 = scalar_select %p300, %s27, 1
        %s302 = smul.addr %s301, 8
        %s303 = scalar_lea.vmem %s4, %s302
        %p304 = scmp.eq.s32.totalorder %s28, 0
        // Predicated region
        $region53: #{tpu_custom_call.1} parent=39 // pred_check
          %p305 = pneg %p304
        $region54: #{tpu_custom_call.1} parent=39 // pred_check_branch
          %307 = sbr.rel (%p305) target = $region56
        $region55: #{tpu_custom_call.1} parent=39 // pred_region
          %308 = vst [vmem:[#allocation2] sm:$0xff] 0.0
          %309 = vst [vmem:[#allocation2 + $0x8] sm:$0xff] 0.0
        $region56: #{tpu_custom_call.1} parent=39 // pred_fallthru
          _
        %v310 = vld [vmem:[%s260] sm:$0xff]
        %v311 = vld [vmem:[%s260 + $0x8] sm:$0xff]
        %v312 = vlaneseq
        %v313 = vand.u32 %v312, 127
        %v314 = vadd.s32 %v313, 128
        %v315 = vlaneseq
        %v316 = vshrl.u32 %v315, 7
        %v317 = vsub.s32 0, %v316
        %v318 = vrot.slane %v310, %v317
        %320 = vbcast.lane.b32.xlu0 %v318, 256
        %v321 = vpop.permute.xlu0 %320
        %s323 = sor.u32 256, 8
        %324 = vbcast.lane.b32.xlu0 %v318, %s323
        %v325 = vpop.permute.xlu0 %324
        %s327 = sor.u32 256, 16
        %328 = vbcast.lane.b32.xlu0 %v318, %s327
        %v329 = vpop.permute.xlu0 %328
        %s331 = sor.u32 256, 24
        %332 = vbcast.lane.b32.xlu0 %v318, %s331
        %v333 = vpop.permute.xlu0 %332
        %s335 = sor.u32 256, 32
        %336 = vbcast.lane.b32.xlu0 %v318, %s335
        %v337 = vpop.permute.xlu0 %336
        %s339 = sor.u32 256, 40
        %340 = vbcast.lane.b32.xlu0 %v318, %s339
        %v341 = vpop.permute.xlu0 %340
        %s343 = sor.u32 256, 48
        %344 = vbcast.lane.b32.xlu0 %v318, %s343
        %v345 = vpop.permute.xlu0 %344
        %s347 = sor.u32 256, 56
        %348 = vbcast.lane.b32.xlu0 %v318, %s347
        %v349 = vpop.permute.xlu0 %348
        %s351 = sor.u32 256, 64
        %352 = vbcast.lane.b32.xlu0 %v318, %s351
        %v353 = vpop.permute.xlu0 %352
        %s355 = sor.u32 256, 72
        %356 = vbcast.lane.b32.xlu0 %v318, %s355
        %v357 = vpop.permute.xlu0 %356
        %s359 = sor.u32 256, 80
        %360 = vbcast.lane.b32.xlu0 %v318, %s359
        %v361 = vpop.permute.xlu0 %360
        %s363 = sor.u32 256, 88
        %364 = vbcast.lane.b32.xlu0 %v318, %s363
        %v365 = vpop.permute.xlu0 %364
        %s367 = sor.u32 256, 96
        %368 = vbcast.lane.b32.xlu0 %v318, %s367
        %v369 = vpop.permute.xlu0 %368
        %s371 = sor.u32 256, 104
        %372 = vbcast.lane.b32.xlu0 %v318, %s371
        %v373 = vpop.permute.xlu0 %372
        %s375 = sor.u32 256, 112
        %376 = vbcast.lane.b32.xlu0 %v318, %s375
        %v377 = vpop.permute.xlu0 %376
        %s379 = sor.u32 256, 120
        %380 = vbcast.lane.b32.xlu0 %v318, %s379
        %v381 = vpop.permute.xlu0 %380
        %v382 = vlaneseq
        %v383 = vshrl.u32 %v382, 7
        %v384 = vsub.s32 0, %v383
        %v385 = vrot.slane %v311, %v384
        %387 = vbcast.lane.b32.xlu0 %v385, 256
        %v388 = vpop.permute.xlu0 %387
        %s390 = sor.u32 256, 8
        %391 = vbcast.lane.b32.xlu0 %v385, %s390
        %v392 = vpop.permute.xlu0 %391
        %s394 = sor.u32 256, 16
        %395 = vbcast.lane.b32.xlu0 %v385, %s394
        %v396 = vpop.permute.xlu0 %395
        %s398 = sor.u32 256, 24
        %399 = vbcast.lane.b32.xlu0 %v385, %s398
        %v400 = vpop.permute.xlu0 %399
        %s402 = sor.u32 256, 32
        %403 = vbcast.lane.b32.xlu0 %v385, %s402
        %v404 = vpop.permute.xlu0 %403
        %s406 = sor.u32 256, 40
        %407 = vbcast.lane.b32.xlu0 %v385, %s406
        %v408 = vpop.permute.xlu0 %407
        %s410 = sor.u32 256, 48
        %411 = vbcast.lane.b32.xlu0 %v385, %s410
        %v412 = vpop.permute.xlu0 %411
        %s414 = sor.u32 256, 56
        %415 = vbcast.lane.b32.xlu0 %v385, %s414
        %v416 = vpop.permute.xlu0 %415
        %s418 = sor.u32 256, 64
        %419 = vbcast.lane.b32.xlu0 %v385, %s418
        %v420 = vpop.permute.xlu0 %419
        %s422 = sor.u32 256, 72
        %423 = vbcast.lane.b32.xlu0 %v385, %s422
        %v424 = vpop.permute.xlu0 %423
        %s426 = sor.u32 256, 80
        %427 = vbcast.lane.b32.xlu0 %v385, %s426
        %v428 = vpop.permute.xlu0 %427
        %s430 = sor.u32 256, 88
        %431 = vbcast.lane.b32.xlu0 %v385, %s430
        %v432 = vpop.permute.xlu0 %431
        %s434 = sor.u32 256, 96
        %435 = vbcast.lane.b32.xlu0 %v385, %s434
        %v436 = vpop.permute.xlu0 %435
        %s438 = sor.u32 256, 104
        %439 = vbcast.lane.b32.xlu0 %v385, %s438
        %v440 = vpop.permute.xlu0 %439
        %s442 = sor.u32 256, 112
        %443 = vbcast.lane.b32.xlu0 %v385, %s442
        %v444 = vpop.permute.xlu0 %443
        %s446 = sor.u32 256, 120
        %447 = vbcast.lane.b32.xlu0 %v385, %s446
        %v448 = vpop.permute.xlu0 %447
        %v449 = vlaneseq
        %v450 = vshrl.u32 %v449, 7
        %v451 = vsub.s32 1, %v450
        %v452 = vrot.slane %v310, %v451
        %454 = vbcast.lane.b32.xlu0 %v452, 256
        %v455 = vpop.permute.xlu0 %454
        %s457 = sor.u32 256, 8
        %458 = vbcast.lane.b32.xlu0 %v452, %s457
        %v459 = vpop.permute.xlu0 %458
        %s461 = sor.u32 256, 16
        %462 = vbcast.lane.b32.xlu0 %v452, %s461
        %v463 = vpop.permute.xlu0 %462
        %s465 = sor.u32 256, 24
        %466 = vbcast.lane.b32.xlu0 %v452, %s465
        %v467 = vpop.permute.xlu0 %466
        %s469 = sor.u32 256, 32
        %470 = vbcast.lane.b32.xlu0 %v452, %s469
        %v471 = vpop.permute.xlu0 %470
        %s473 = sor.u32 256, 40
        %474 = vbcast.lane.b32.xlu0 %v452, %s473
        %v475 = vpop.permute.xlu0 %474
        %s477 = sor.u32 256, 48
        %478 = vbcast.lane.b32.xlu0 %v452, %s477
        %v479 = vpop.permute.xlu0 %478
        %s481 = sor.u32 256, 56
        %482 = vbcast.lane.b32.xlu0 %v452, %s481
        %v483 = vpop.permute.xlu0 %482
        %s485 = sor.u32 256, 64
        %486 = vbcast.lane.b32.xlu0 %v452, %s485
        %v487 = vpop.permute.xlu0 %486
        %s489 = sor.u32 256, 72
        %490 = vbcast.lane.b32.xlu0 %v452, %s489
        %v491 = vpop.permute.xlu0 %490
        %s493 = sor.u32 256, 80
        %494 = vbcast.lane.b32.xlu0 %v452, %s493
        %v495 = vpop.permute.xlu0 %494
        %s497 = sor.u32 256, 88
        %498 = vbcast.lane.b32.xlu0 %v452, %s497
        %v499 = vpop.permute.xlu0 %498
        %s501 = sor.u32 256, 96
        %502 = vbcast.lane.b32.xlu0 %v452, %s501
        %v503 = vpop.permute.xlu0 %502
        %s505 = sor.u32 256, 104
        %506 = vbcast.lane.b32.xlu0 %v452, %s505
        %v507 = vpop.permute.xlu0 %506
        %s509 = sor.u32 256, 112
        %510 = vbcast.lane.b32.xlu0 %v452, %s509
        %v511 = vpop.permute.xlu0 %510
        %s513 = sor.u32 256, 120
        %514 = vbcast.lane.b32.xlu0 %v452, %s513
        %v515 = vpop.permute.xlu0 %514
        %v516 = vlaneseq
        %v517 = vshrl.u32 %v516, 7
        %v518 = vsub.s32 1, %v517
        %v519 = vrot.slane %v311, %v518
        %521 = vbcast.lane.b32.xlu0 %v519, 256
        %v522 = vpop.permute.xlu0 %521
        %s524 = sor.u32 256, 8
        %525 = vbcast.lane.b32.xlu0 %v519, %s524
        %v526 = vpop.permute.xlu0 %525
        %s528 = sor.u32 256, 16
        %529 = vbcast.lane.b32.xlu0 %v519, %s528
        %v530 = vpop.permute.xlu0 %529
        %s532 = sor.u32 256, 24
        %533 = vbcast.lane.b32.xlu0 %v519, %s532
        %v534 = vpop.permute.xlu0 %533
        %s536 = sor.u32 256, 32
        %537 = vbcast.lane.b32.xlu0 %v519, %s536
        %v538 = vpop.permute.xlu0 %537
        %s540 = sor.u32 256, 40
        %541 = vbcast.lane.b32.xlu0 %v519, %s540
        %v542 = vpop.permute.xlu0 %541
        %s544 = sor.u32 256, 48
        %545 = vbcast.lane.b32.xlu0 %v519, %s544
        %v546 = vpop.permute.xlu0 %545
        %s548 = sor.u32 256, 56
        %549 = vbcast.lane.b32.xlu0 %v519, %s548
        %v550 = vpop.permute.xlu0 %549
        %s552 = sor.u32 256, 64
        %553 = vbcast.lane.b32.xlu0 %v519, %s552
        %v554 = vpop.permute.xlu0 %553
        %s556 = sor.u32 256, 72
        %557 = vbcast.lane.b32.xlu0 %v519, %s556
        %v558 = vpop.permute.xlu0 %557
        %s560 = sor.u32 256, 80
        %561 = vbcast.lane.b32.xlu0 %v519, %s560
        %v562 = vpop.permute.xlu0 %561
        %s564 = sor.u32 256, 88
        %565 = vbcast.lane.b32.xlu0 %v519, %s564
        %v566 = vpop.permute.xlu0 %565
        %s568 = sor.u32 256, 96
        %569 = vbcast.lane.b32.xlu0 %v519, %s568
        %v570 = vpop.permute.xlu0 %569
        %s572 = sor.u32 256, 104
        %573 = vbcast.lane.b32.xlu0 %v519, %s572
        %v574 = vpop.permute.xlu0 %573
        %s576 = sor.u32 256, 112
        %577 = vbcast.lane.b32.xlu0 %v519, %s576
        %v578 = vpop.permute.xlu0 %577
        %s580 = sor.u32 256, 120
        %581 = vbcast.lane.b32.xlu0 %v519, %s580
        %v582 = vpop.permute.xlu0 %581
        %v583 = vlaneseq
        %v584 = vshrl.u32 %v583, 7
        %v585 = vsub.s32 2, %v584
        %v586 = vrot.slane %v310, %v585
        %588 = vbcast.lane.b32.xlu0 %v586, 256
        %v589 = vpop.permute.xlu0 %588
        %s591 = sor.u32 256, 8
        %592 = vbcast.lane.b32.xlu0 %v586, %s591
        %v593 = vpop.permute.xlu0 %592
        %s595 = sor.u32 256, 16
        %596 = vbcast.lane.b32.xlu0 %v586, %s595
        %v597 = vpop.permute.xlu0 %596
        %s599 = sor.u32 256, 24
        %600 = vbcast.lane.b32.xlu0 %v586, %s599
        %v601 = vpop.permute.xlu0 %600
        %s603 = sor.u32 256, 32
        %604 = vbcast.lane.b32.xlu0 %v586, %s603
        %v605 = vpop.permute.xlu0 %604
        %s607 = sor.u32 256, 40
        %608 = vbcast.lane.b32.xlu0 %v586, %s607
        %v609 = vpop.permute.xlu0 %608
        %s611 = sor.u32 256, 48
        %612 = vbcast.lane.b32.xlu0 %v586, %s611
        %v613 = vpop.permute.xlu0 %612
        %s615 = sor.u32 256, 56
        %616 = vbcast.lane.b32.xlu0 %v586, %s615
        %v617 = vpop.permute.xlu0 %616
        %s619 = sor.u32 256, 64
        %620 = vbcast.lane.b32.xlu0 %v586, %s619
        %v621 = vpop.permute.xlu0 %620
        %s623 = sor.u32 256, 72
        %624 = vbcast.lane.b32.xlu0 %v586, %s623
        %v625 = vpop.permute.xlu0 %624
        %s627 = sor.u32 256, 80
        %628 = vbcast.lane.b32.xlu0 %v586, %s627
        %v629 = vpop.permute.xlu0 %628
        %s631 = sor.u32 256, 88
        %632 = vbcast.lane.b32.xlu0 %v586, %s631
        %v633 = vpop.permute.xlu0 %632
        %s635 = sor.u32 256, 96
        %636 = vbcast.lane.b32.xlu0 %v586, %s635
        %v637 = vpop.permute.xlu0 %636
        %s639 = sor.u32 256, 104
        %640 = vbcast.lane.b32.xlu0 %v586, %s639
        %v641 = vpop.permute.xlu0 %640
        %s643 = sor.u32 256, 112
        %644 = vbcast.lane.b32.xlu0 %v586, %s643
        %v645 = vpop.permute.xlu0 %644
        %s647 = sor.u32 256, 120
        %648 = vbcast.lane.b32.xlu0 %v586, %s647
        %v649 = vpop.permute.xlu0 %648
        %v650 = vlaneseq
        %v651 = vshrl.u32 %v650, 7
        %v652 = vsub.s32 2, %v651
        %v653 = vrot.slane %v311, %v652
        %655 = vbcast.lane.b32.xlu0 %v653, 256
        %v656 = vpop.permute.xlu0 %655
        %s658 = sor.u32 256, 8
        %659 = vbcast.lane.b32.xlu0 %v653, %s658
        %v660 = vpop.permute.xlu0 %659
        %s662 = sor.u32 256, 16
        %663 = vbcast.lane.b32.xlu0 %v653, %s662
        %v664 = vpop.permute.xlu0 %663
        %s666 = sor.u32 256, 24
        %667 = vbcast.lane.b32.xlu0 %v653, %s666
        %v668 = vpop.permute.xlu0 %667
        %s670 = sor.u32 256, 32
        %671 = vbcast.lane.b32.xlu0 %v653, %s670
        %v672 = vpop.permute.xlu0 %671
        %s674 = sor.u32 256, 40
        %675 = vbcast.lane.b32.xlu0 %v653, %s674
        %v676 = vpop.permute.xlu0 %675
        %s678 = sor.u32 256, 48
        %679 = vbcast.lane.b32.xlu0 %v653, %s678
        %v680 = vpop.permute.xlu0 %679
        %s682 = sor.u32 256, 56
        %683 = vbcast.lane.b32.xlu0 %v653, %s682
        %v684 = vpop.permute.xlu0 %683
        %s686 = sor.u32 256, 64
        %687 = vbcast.lane.b32.xlu0 %v653, %s686
        %v688 = vpop.permute.xlu0 %687
        %s690 = sor.u32 256, 72
        %691 = vbcast.lane.b32.xlu0 %v653, %s690
        %v692 = vpop.permute.xlu0 %691
        %s694 = sor.u32 256, 80
        %695 = vbcast.lane.b32.xlu0 %v653, %s694
        %v696 = vpop.permute.xlu0 %695
        %s698 = sor.u32 256, 88
        %699 = vbcast.lane.b32.xlu0 %v653, %s698
        %v700 = vpop.permute.xlu0 %699
        %s702 = sor.u32 256, 96
        %703 = vbcast.lane.b32.xlu0 %v653, %s702
        %v704 = vpop.permute.xlu0 %703
        %s706 = sor.u32 256, 104
        %707 = vbcast.lane.b32.xlu0 %v653, %s706
        %v708 = vpop.permute.xlu0 %707
        %s710 = sor.u32 256, 112
        %711 = vbcast.lane.b32.xlu0 %v653, %s710
        %v712 = vpop.permute.xlu0 %711
        %s714 = sor.u32 256, 120
        %715 = vbcast.lane.b32.xlu0 %v653, %s714
        %v716 = vpop.permute.xlu0 %715
        %v717 = vlaneseq
        %v718 = vshrl.u32 %v717, 7
        %v719 = vsub.s32 3, %v718
        %v720 = vrot.slane %v310, %v719
        %722 = vbcast.lane.b32.xlu0 %v720, 256
        %v723 = vpop.permute.xlu0 %722
        %s725 = sor.u32 256, 8
        %726 = vbcast.lane.b32.xlu0 %v720, %s725
        %v727 = vpop.permute.xlu0 %726
        %s729 = sor.u32 256, 16
        %730 = vbcast.lane.b32.xlu0 %v720, %s729
        %v731 = vpop.permute.xlu0 %730
        %s733 = sor.u32 256, 24
        %734 = vbcast.lane.b32.xlu0 %v720, %s733
        %v735 = vpop.permute.xlu0 %734
        %s737 = sor.u32 256, 32
        %738 = vbcast.lane.b32.xlu0 %v720, %s737
        %v739 = vpop.permute.xlu0 %738
        %s741 = sor.u32 256, 40
        %742 = vbcast.lane.b32.xlu0 %v720, %s741
        %v743 = vpop.permute.xlu0 %742
        %s745 = sor.u32 256, 48
        %746 = vbcast.lane.b32.xlu0 %v720, %s745
        %v747 = vpop.permute.xlu0 %746
        %s749 = sor.u32 256, 56
        %750 = vbcast.lane.b32.xlu0 %v720, %s749
        %v751 = vpop.permute.xlu0 %750
        %s753 = sor.u32 256, 64
        %754 = vbcast.lane.b32.xlu0 %v720, %s753
        %v755 = vpop.permute.xlu0 %754
        %s757 = sor.u32 256, 72
        %758 = vbcast.lane.b32.xlu0 %v720, %s757
        %v759 = vpop.permute.xlu0 %758
        %s761 = sor.u32 256, 80
        %762 = vbcast.lane.b32.xlu0 %v720, %s761
        %v763 = vpop.permute.xlu0 %762
        %s765 = sor.u32 256, 88
        %766 = vbcast.lane.b32.xlu0 %v720, %s765
        %v767 = vpop.permute.xlu0 %766
        %s769 = sor.u32 256, 96
        %770 = vbcast.lane.b32.xlu0 %v720, %s769
        %v771 = vpop.permute.xlu0 %770
        %s773 = sor.u32 256, 104
        %774 = vbcast.lane.b32.xlu0 %v720, %s773
        %v775 = vpop.permute.xlu0 %774
        %s777 = sor.u32 256, 112
        %778 = vbcast.lane.b32.xlu0 %v720, %s777
        %v779 = vpop.permute.xlu0 %778
        %s781 = sor.u32 256, 120
        %782 = vbcast.lane.b32.xlu0 %v720, %s781
        %v783 = vpop.permute.xlu0 %782
        %v784 = vlaneseq
        %v785 = vshrl.u32 %v784, 7
        %v786 = vsub.s32 3, %v785
        %v787 = vrot.slane %v311, %v786
        %789 = vbcast.lane.b32.xlu0 %v787, 256
        %v790 = vpop.permute.xlu0 %789
        %s792 = sor.u32 256, 8
        %793 = vbcast.lane.b32.xlu0 %v787, %s792
        %v794 = vpop.permute.xlu0 %793
        %s796 = sor.u32 256, 16
        %797 = vbcast.lane.b32.xlu0 %v787, %s796
        %v798 = vpop.permute.xlu0 %797
        %s800 = sor.u32 256, 24
        %801 = vbcast.lane.b32.xlu0 %v787, %s800
        %v802 = vpop.permute.xlu0 %801
        %s804 = sor.u32 256, 32
        %805 = vbcast.lane.b32.xlu0 %v787, %s804
        %v806 = vpop.permute.xlu0 %805
        %s808 = sor.u32 256, 40
        %809 = vbcast.lane.b32.xlu0 %v787, %s808
        %v810 = vpop.permute.xlu0 %809
        %s812 = sor.u32 256, 48
        %813 = vbcast.lane.b32.xlu0 %v787, %s812
        %v814 = vpop.permute.xlu0 %813
        %s816 = sor.u32 256, 56
        %817 = vbcast.lane.b32.xlu0 %v787, %s816
        %v818 = vpop.permute.xlu0 %817
        %s820 = sor.u32 256, 64
        %821 = vbcast.lane.b32.xlu0 %v787, %s820
        %v822 = vpop.permute.xlu0 %821
        %s824 = sor.u32 256, 72
        %825 = vbcast.lane.b32.xlu0 %v787, %s824
        %v826 = vpop.permute.xlu0 %825
        %s828 = sor.u32 256, 80
        %829 = vbcast.lane.b32.xlu0 %v787, %s828
        %v830 = vpop.permute.xlu0 %829
        %s832 = sor.u32 256, 88
        %833 = vbcast.lane.b32.xlu0 %v787, %s832
        %v834 = vpop.permute.xlu0 %833
        %s836 = sor.u32 256, 96
        %837 = vbcast.lane.b32.xlu0 %v787, %s836
        %v838 = vpop.permute.xlu0 %837
        %s840 = sor.u32 256, 104
        %841 = vbcast.lane.b32.xlu0 %v787, %s840
        %v842 = vpop.permute.xlu0 %841
        %s844 = sor.u32 256, 112
        %845 = vbcast.lane.b32.xlu0 %v787, %s844
        %v846 = vpop.permute.xlu0 %845
        %s848 = sor.u32 256, 120
        %849 = vbcast.lane.b32.xlu0 %v787, %s848
        %v850 = vpop.permute.xlu0 %849
        %v851 = vlaneseq
        %v852 = vshrl.u32 %v851, 7
        %v853 = vsub.s32 4, %v852
        %v854 = vrot.slane %v310, %v853
        %856 = vbcast.lane.b32.xlu0 %v854, 256
        %v857 = vpop.permute.xlu0 %856
        %s859 = sor.u32 256, 8
        %860 = vbcast.lane.b32.xlu0 %v854, %s859
        %v861 = vpop.permute.xlu0 %860
        %s863 = sor.u32 256, 16
        %864 = vbcast.lane.b32.xlu0 %v854, %s863
        %v865 = vpop.permute.xlu0 %864
        %s867 = sor.u32 256, 24
        %868 = vbcast.lane.b32.xlu0 %v854, %s867
        %v869 = vpop.permute.xlu0 %868
        %s871 = sor.u32 256, 32
        %872 = vbcast.lane.b32.xlu0 %v854, %s871
        %v873 = vpop.permute.xlu0 %872
        %s875 = sor.u32 256, 40
        %876 = vbcast.lane.b32.xlu0 %v854, %s875
        %v877 = vpop.permute.xlu0 %876
        %s879 = sor.u32 256, 48
        %880 = vbcast.lane.b32.xlu0 %v854, %s879
        %v881 = vpop.permute.xlu0 %880
        %s883 = sor.u32 256, 56
        %884 = vbcast.lane.b32.xlu0 %v854, %s883
        %v885 = vpop.permute.xlu0 %884
        %s887 = sor.u32 256, 64
        %888 = vbcast.lane.b32.xlu0 %v854, %s887
        %v889 = vpop.permute.xlu0 %888
        %s891 = sor.u32 256, 72
        %892 = vbcast.lane.b32.xlu0 %v854, %s891
        %v893 = vpop.permute.xlu0 %892
        %s895 = sor.u32 256, 80
        %896 = vbcast.lane.b32.xlu0 %v854, %s895
        %v897 = vpop.permute.xlu0 %896
        %s899 = sor.u32 256, 88
        %900 = vbcast.lane.b32.xlu0 %v854, %s899
        %v901 = vpop.permute.xlu0 %900
        %s903 = sor.u32 256, 96
        %904 = vbcast.lane.b32.xlu0 %v854, %s903
        %v905 = vpop.permute.xlu0 %904
        %s907 = sor.u32 256, 104
        %908 = vbcast.lane.b32.xlu0 %v854, %s907
        %v909 = vpop.permute.xlu0 %908
        %s911 = sor.u32 256, 112
        %912 = vbcast.lane.b32.xlu0 %v854, %s911
        %v913 = vpop.permute.xlu0 %912
        %s915 = sor.u32 256, 120
        %916 = vbcast.lane.b32.xlu0 %v854, %s915
        %v917 = vpop.permute.xlu0 %916
        %v918 = vlaneseq
        %v919 = vshrl.u32 %v918, 7
        %v920 = vsub.s32 4, %v919
        %v921 = vrot.slane %v311, %v920
        %923 = vbcast.lane.b32.xlu0 %v921, 256
        %v924 = vpop.permute.xlu0 %923
        %s926 = sor.u32 256, 8
        %927 = vbcast.lane.b32.xlu0 %v921, %s926
        %v928 = vpop.permute.xlu0 %927
        %s930 = sor.u32 256, 16
        %931 = vbcast.lane.b32.xlu0 %v921, %s930
        %v932 = vpop.permute.xlu0 %931
        %s934 = sor.u32 256, 24
        %935 = vbcast.lane.b32.xlu0 %v921, %s934
        %v936 = vpop.permute.xlu0 %935
        %s938 = sor.u32 256, 32
        %939 = vbcast.lane.b32.xlu0 %v921, %s938
        %v940 = vpop.permute.xlu0 %939
        %s942 = sor.u32 256, 40
        %943 = vbcast.lane.b32.xlu0 %v921, %s942
        %v944 = vpop.permute.xlu0 %943
        %s946 = sor.u32 256, 48
        %947 = vbcast.lane.b32.xlu0 %v921, %s946
        %v948 = vpop.permute.xlu0 %947
        %s950 = sor.u32 256, 56
        %951 = vbcast.lane.b32.xlu0 %v921, %s950
        %v952 = vpop.permute.xlu0 %951
        %s954 = sor.u32 256, 64
        %955 = vbcast.lane.b32.xlu0 %v921, %s954
        %v956 = vpop.permute.xlu0 %955
        %s958 = sor.u32 256, 72
        %959 = vbcast.lane.b32.xlu0 %v921, %s958
        %v960 = vpop.permute.xlu0 %959
        %s962 = sor.u32 256, 80
        %963 = vbcast.lane.b32.xlu0 %v921, %s962
        %v964 = vpop.permute.xlu0 %963
        %s966 = sor.u32 256, 88
        %967 = vbcast.lane.b32.xlu0 %v921, %s966
        %v968 = vpop.permute.xlu0 %967
        %s970 = sor.u32 256, 96
        %971 = vbcast.lane.b32.xlu0 %v921, %s970
        %v972 = vpop.permute.xlu0 %971
        %s974 = sor.u32 256, 104
        %975 = vbcast.lane.b32.xlu0 %v921, %s974
        %v976 = vpop.permute.xlu0 %975
        %s978 = sor.u32 256, 112
        %979 = vbcast.lane.b32.xlu0 %v921, %s978
        %v980 = vpop.permute.xlu0 %979
        %s982 = sor.u32 256, 120
        %983 = vbcast.lane.b32.xlu0 %v921, %s982
        %v984 = vpop.permute.xlu0 %983
        %v985 = vlaneseq
        %v986 = vshrl.u32 %v985, 7
        %v987 = vsub.s32 5, %v986
        %v988 = vrot.slane %v310, %v987
        %990 = vbcast.lane.b32.xlu0 %v988, 256
        %v991 = vpop.permute.xlu0 %990
        %s993 = sor.u32 256, 8
        %994 = vbcast.lane.b32.xlu0 %v988, %s993
        %v995 = vpop.permute.xlu0 %994
        %s997 = sor.u32 256, 16
        %998 = vbcast.lane.b32.xlu0 %v988, %s997
        %v999 = vpop.permute.xlu0 %998
        %s1001 = sor.u32 256, 24
        %1002 = vbcast.lane.b32.xlu0 %v988, %s1001
        %v1003 = vpop.permute.xlu0 %1002
        %s1005 = sor.u32 256, 32
        %1006 = vbcast.lane.b32.xlu0 %v988, %s1005
        %v1007 = vpop.permute.xlu0 %1006
        %s1009 = sor.u32 256, 40
        %1010 = vbcast.lane.b32.xlu0 %v988, %s1009
        %v1011 = vpop.permute.xlu0 %1010
        %s1013 = sor.u32 256, 48
        %1014 = vbcast.lane.b32.xlu0 %v988, %s1013
        %v1015 = vpop.permute.xlu0 %1014
        %s1017 = sor.u32 256, 56
        %1018 = vbcast.lane.b32.xlu0 %v988, %s1017
        %v1019 = vpop.permute.xlu0 %1018
        %s1021 = sor.u32 256, 64
        %1022 = vbcast.lane.b32.xlu0 %v988, %s1021
        %v1023 = vpop.permute.xlu0 %1022
        %s1025 = sor.u32 256, 72
        %1026 = vbcast.lane.b32.xlu0 %v988, %s1025
        %v1027 = vpop.permute.xlu0 %1026
        %s1029 = sor.u32 256, 80
        %1030 = vbcast.lane.b32.xlu0 %v988, %s1029
        %v1031 = vpop.permute.xlu0 %1030
        %s1033 = sor.u32 256, 88
        %1034 = vbcast.lane.b32.xlu0 %v988, %s1033
        %v1035 = vpop.permute.xlu0 %1034
        %s1037 = sor.u32 256, 96
        %1038 = vbcast.lane.b32.xlu0 %v988, %s1037
        %v1039 = vpop.permute.xlu0 %1038
        %s1041 = sor.u32 256, 104
        %1042 = vbcast.lane.b32.xlu0 %v988, %s1041
        %v1043 = vpop.permute.xlu0 %1042
        %s1045 = sor.u32 256, 112
        %1046 = vbcast.lane.b32.xlu0 %v988, %s1045
        %v1047 = vpop.permute.xlu0 %1046
        %s1049 = sor.u32 256, 120
        %1050 = vbcast.lane.b32.xlu0 %v988, %s1049
        %v1051 = vpop.permute.xlu0 %1050
        %v1052 = vlaneseq
        %v1053 = vshrl.u32 %v1052, 7
        %v1054 = vsub.s32 5, %v1053
        %v1055 = vrot.slane %v311, %v1054
        %1057 = vbcast.lane.b32.xlu0 %v1055, 256
        %v1058 = vpop.permute.xlu0 %1057
        %s1060 = sor.u32 256, 8
        %1061 = vbcast.lane.b32.xlu0 %v1055, %s1060
        %v1062 = vpop.permute.xlu0 %1061
        %s1064 = sor.u32 256, 16
        %1065 = vbcast.lane.b32.xlu0 %v1055, %s1064
        %v1066 = vpop.permute.xlu0 %1065
        %s1068 = sor.u32 256, 24
        %1069 = vbcast.lane.b32.xlu0 %v1055, %s1068
        %v1070 = vpop.permute.xlu0 %1069
        %s1072 = sor.u32 256, 32
        %1073 = vbcast.lane.b32.xlu0 %v1055, %s1072
        %v1074 = vpop.permute.xlu0 %1073
        %s1076 = sor.u32 256, 40
        %1077 = vbcast.lane.b32.xlu0 %v1055, %s1076
        %v1078 = vpop.permute.xlu0 %1077
        %s1080 = sor.u32 256, 48
        %1081 = vbcast.lane.b32.xlu0 %v1055, %s1080
        %v1082 = vpop.permute.xlu0 %1081
        %s1084 = sor.u32 256, 56
        %1085 = vbcast.lane.b32.xlu0 %v1055, %s1084
        %v1086 = vpop.permute.xlu0 %1085
        %s1088 = sor.u32 256, 64
        %1089 = vbcast.lane.b32.xlu0 %v1055, %s1088
        %v1090 = vpop.permute.xlu0 %1089
        %s1092 = sor.u32 256, 72
        %1093 = vbcast.lane.b32.xlu0 %v1055, %s1092
        %v1094 = vpop.permute.xlu0 %1093
        %s1096 = sor.u32 256, 80
        %1097 = vbcast.lane.b32.xlu0 %v1055, %s1096
        %v1098 = vpop.permute.xlu0 %1097
        %s1100 = sor.u32 256, 88
        %1101 = vbcast.lane.b32.xlu0 %v1055, %s1100
        %v1102 = vpop.permute.xlu0 %1101
        %s1104 = sor.u32 256, 96
        %1105 = vbcast.lane.b32.xlu0 %v1055, %s1104
        %v1106 = vpop.permute.xlu0 %1105
        %s1108 = sor.u32 256, 104
        %1109 = vbcast.lane.b32.xlu0 %v1055, %s1108
        %v1110 = vpop.permute.xlu0 %1109
        %s1112 = sor.u32 256, 112
        %1113 = vbcast.lane.b32.xlu0 %v1055, %s1112
        %v1114 = vpop.permute.xlu0 %1113
        %s1116 = sor.u32 256, 120
        %1117 = vbcast.lane.b32.xlu0 %v1055, %s1116
        %v1118 = vpop.permute.xlu0 %1117
        %v1119 = vlaneseq
        %v1120 = vshrl.u32 %v1119, 7
        %v1121 = vsub.s32 6, %v1120
        %v1122 = vrot.slane %v310, %v1121
        %1124 = vbcast.lane.b32.xlu0 %v1122, 256
        %v1125 = vpop.permute.xlu0 %1124
        %s1127 = sor.u32 256, 8
        %1128 = vbcast.lane.b32.xlu0 %v1122, %s1127
        %v1129 = vpop.permute.xlu0 %1128
        %s1131 = sor.u32 256, 16
        %1132 = vbcast.lane.b32.xlu0 %v1122, %s1131
        %v1133 = vpop.permute.xlu0 %1132
        %s1135 = sor.u32 256, 24
        %1136 = vbcast.lane.b32.xlu0 %v1122, %s1135
        %v1137 = vpop.permute.xlu0 %1136
        %s1139 = sor.u32 256, 32
        %1140 = vbcast.lane.b32.xlu0 %v1122, %s1139
        %v1141 = vpop.permute.xlu0 %1140
        %s1143 = sor.u32 256, 40
        %1144 = vbcast.lane.b32.xlu0 %v1122, %s1143
        %v1145 = vpop.permute.xlu0 %1144
        %s1147 = sor.u32 256, 48
        %1148 = vbcast.lane.b32.xlu0 %v1122, %s1147
        %v1149 = vpop.permute.xlu0 %1148
        %s1151 = sor.u32 256, 56
        %1152 = vbcast.lane.b32.xlu0 %v1122, %s1151
        %v1153 = vpop.permute.xlu0 %1152
        %s1155 = sor.u32 256, 64
        %1156 = vbcast.lane.b32.xlu0 %v1122, %s1155
        %v1157 = vpop.permute.xlu0 %1156
        %s1159 = sor.u32 256, 72
        %1160 = vbcast.lane.b32.xlu0 %v1122, %s1159
        %v1161 = vpop.permute.xlu0 %1160
        %s1163 = sor.u32 256, 80
        %1164 = vbcast.lane.b32.xlu0 %v1122, %s1163
        %v1165 = vpop.permute.xlu0 %1164
        %s1167 = sor.u32 256, 88
        %1168 = vbcast.lane.b32.xlu0 %v1122, %s1167
        %v1169 = vpop.permute.xlu0 %1168
        %s1171 = sor.u32 256, 96
        %1172 = vbcast.lane.b32.xlu0 %v1122, %s1171
        %v1173 = vpop.permute.xlu0 %1172
        %s1175 = sor.u32 256, 104
        %1176 = vbcast.lane.b32.xlu0 %v1122, %s1175
        %v1177 = vpop.permute.xlu0 %1176
        %s1179 = sor.u32 256, 112
        %1180 = vbcast.lane.b32.xlu0 %v1122, %s1179
        %v1181 = vpop.permute.xlu0 %1180
        %s1183 = sor.u32 256, 120
        %1184 = vbcast.lane.b32.xlu0 %v1122, %s1183
        %v1185 = vpop.permute.xlu0 %1184
        %v1186 = vlaneseq
        %v1187 = vshrl.u32 %v1186, 7
        %v1188 = vsub.s32 6, %v1187
        %v1189 = vrot.slane %v311, %v1188
        %1191 = vbcast.lane.b32.xlu0 %v1189, 256
        %v1192 = vpop.permute.xlu0 %1191
        %s1194 = sor.u32 256, 8
        %1195 = vbcast.lane.b32.xlu0 %v1189, %s1194
        %v1196 = vpop.permute.xlu0 %1195
        %s1198 = sor.u32 256, 16
        %1199 = vbcast.lane.b32.xlu0 %v1189, %s1198
        %v1200 = vpop.permute.xlu0 %1199
        %s1202 = sor.u32 256, 24
        %1203 = vbcast.lane.b32.xlu0 %v1189, %s1202
        %v1204 = vpop.permute.xlu0 %1203
        %s1206 = sor.u32 256, 32
        %1207 = vbcast.lane.b32.xlu0 %v1189, %s1206
        %v1208 = vpop.permute.xlu0 %1207
        %s1210 = sor.u32 256, 40
        %1211 = vbcast.lane.b32.xlu0 %v1189, %s1210
        %v1212 = vpop.permute.xlu0 %1211
        %s1214 = sor.u32 256, 48
        %1215 = vbcast.lane.b32.xlu0 %v1189, %s1214
        %v1216 = vpop.permute.xlu0 %1215
        %s1218 = sor.u32 256, 56
        %1219 = vbcast.lane.b32.xlu0 %v1189, %s1218
        %v1220 = vpop.permute.xlu0 %1219
        %s1222 = sor.u32 256, 64
        %1223 = vbcast.lane.b32.xlu0 %v1189, %s1222
        %v1224 = vpop.permute.xlu0 %1223
        %s1226 = sor.u32 256, 72
        %1227 = vbcast.lane.b32.xlu0 %v1189, %s1226
        %v1228 = vpop.permute.xlu0 %1227
        %s1230 = sor.u32 256, 80
        %1231 = vbcast.lane.b32.xlu0 %v1189, %s1230
        %v1232 = vpop.permute.xlu0 %1231
        %s1234 = sor.u32 256, 88
        %1235 = vbcast.lane.b32.xlu0 %v1189, %s1234
        %v1236 = vpop.permute.xlu0 %1235
        %s1238 = sor.u32 256, 96
        %1239 = vbcast.lane.b32.xlu0 %v1189, %s1238
        %v1240 = vpop.permute.xlu0 %1239
        %s1242 = sor.u32 256, 104
        %1243 = vbcast.lane.b32.xlu0 %v1189, %s1242
        %v1244 = vpop.permute.xlu0 %1243
        %s1246 = sor.u32 256, 112
        %1247 = vbcast.lane.b32.xlu0 %v1189, %s1246
        %v1248 = vpop.permute.xlu0 %1247
        %s1250 = sor.u32 256, 120
        %1251 = vbcast.lane.b32.xlu0 %v1189, %s1250
        %v1252 = vpop.permute.xlu0 %1251
        %v1253 = vlaneseq
        %v1254 = vshrl.u32 %v1253, 7
        %v1255 = vsub.s32 7, %v1254
        %v1256 = vrot.slane %v310, %v1255
        %1258 = vbcast.lane.b32.xlu0 %v1256, 256
        %v1259 = vpop.permute.xlu0 %1258
        %s1261 = sor.u32 256, 8
        %1262 = vbcast.lane.b32.xlu0 %v1256, %s1261
        %v1263 = vpop.permute.xlu0 %1262
        %s1265 = sor.u32 256, 16
        %1266 = vbcast.lane.b32.xlu0 %v1256, %s1265
        %v1267 = vpop.permute.xlu0 %1266
        %s1269 = sor.u32 256, 24
        %1270 = vbcast.lane.b32.xlu0 %v1256, %s1269
        %v1271 = vpop.permute.xlu0 %1270
        %s1273 = sor.u32 256, 32
        %1274 = vbcast.lane.b32.xlu0 %v1256, %s1273
        %v1275 = vpop.permute.xlu0 %1274
        %s1277 = sor.u32 256, 40
        %1278 = vbcast.lane.b32.xlu0 %v1256, %s1277
        %v1279 = vpop.permute.xlu0 %1278
        %s1281 = sor.u32 256, 48
        %1282 = vbcast.lane.b32.xlu0 %v1256, %s1281
        %v1283 = vpop.permute.xlu0 %1282
        %s1285 = sor.u32 256, 56
        %1286 = vbcast.lane.b32.xlu0 %v1256, %s1285
        %v1287 = vpop.permute.xlu0 %1286
        %s1289 = sor.u32 256, 64
        %1290 = vbcast.lane.b32.xlu0 %v1256, %s1289
        %v1291 = vpop.permute.xlu0 %1290
        %s1293 = sor.u32 256, 72
        %1294 = vbcast.lane.b32.xlu0 %v1256, %s1293
        %v1295 = vpop.permute.xlu0 %1294
        %s1297 = sor.u32 256, 80
        %1298 = vbcast.lane.b32.xlu0 %v1256, %s1297
        %v1299 = vpop.permute.xlu0 %1298
        %s1301 = sor.u32 256, 88
        %1302 = vbcast.lane.b32.xlu0 %v1256, %s1301
        %v1303 = vpop.permute.xlu0 %1302
        %s1305 = sor.u32 256, 96
        %1306 = vbcast.lane.b32.xlu0 %v1256, %s1305
        %v1307 = vpop.permute.xlu0 %1306
        %s1309 = sor.u32 256, 104
        %1310 = vbcast.lane.b32.xlu0 %v1256, %s1309
        %v1311 = vpop.permute.xlu0 %1310
        %s1313 = sor.u32 256, 112
        %1314 = vbcast.lane.b32.xlu0 %v1256, %s1313
        %v1315 = vpop.permute.xlu0 %1314
        %s1317 = sor.u32 256, 120
        %1318 = vbcast.lane.b32.xlu0 %v1256, %s1317
        %v1319 = vpop.permute.xlu0 %1318
        %v1320 = vlaneseq
        %v1321 = vshrl.u32 %v1320, 7
        %v1322 = vsub.s32 7, %v1321
        %v1323 = vrot.slane %v311, %v1322
        %1325 = vbcast.lane.b32.xlu0 %v1323, 256
        %v1326 = vpop.permute.xlu0 %1325
        %s1328 = sor.u32 256, 8
        %1329 = vbcast.lane.b32.xlu0 %v1323, %s1328
        %v1330 = vpop.permute.xlu0 %1329
        %s1332 = sor.u32 256, 16
        %1333 = vbcast.lane.b32.xlu0 %v1323, %s1332
        %v1334 = vpop.permute.xlu0 %1333
        %s1336 = sor.u32 256, 24
        %1337 = vbcast.lane.b32.xlu0 %v1323, %s1336
        %v1338 = vpop.permute.xlu0 %1337
        %s1340 = sor.u32 256, 32
        %1341 = vbcast.lane.b32.xlu0 %v1323, %s1340
        %v1342 = vpop.permute.xlu0 %1341
        %s1344 = sor.u32 256, 40
        %1345 = vbcast.lane.b32.xlu0 %v1323, %s1344
        %v1346 = vpop.permute.xlu0 %1345
        %s1348 = sor.u32 256, 48
        %1349 = vbcast.lane.b32.xlu0 %v1323, %s1348
        %v1350 = vpop.permute.xlu0 %1349
        %s1352 = sor.u32 256, 56
        %1353 = vbcast.lane.b32.xlu0 %v1323, %s1352
        %v1354 = vpop.permute.xlu0 %1353
        %s1356 = sor.u32 256, 64
        %1357 = vbcast.lane.b32.xlu0 %v1323, %s1356
        %v1358 = vpop.permute.xlu0 %1357
        %s1360 = sor.u32 256, 72
        %1361 = vbcast.lane.b32.xlu0 %v1323, %s1360
        %v1362 = vpop.permute.xlu0 %1361
        %s1364 = sor.u32 256, 80
        %1365 = vbcast.lane.b32.xlu0 %v1323, %s1364
        %v1366 = vpop.permute.xlu0 %1365
        %s1368 = sor.u32 256, 88
        %1369 = vbcast.lane.b32.xlu0 %v1323, %s1368
        %v1370 = vpop.permute.xlu0 %1369
        %s1372 = sor.u32 256, 96
        %1373 = vbcast.lane.b32.xlu0 %v1323, %s1372
        %v1374 = vpop.permute.xlu0 %1373
        %s1376 = sor.u32 256, 104
        %1377 = vbcast.lane.b32.xlu0 %v1323, %s1376
        %v1378 = vpop.permute.xlu0 %1377
        %s1380 = sor.u32 256, 112
        %1381 = vbcast.lane.b32.xlu0 %v1323, %s1380
        %v1382 = vpop.permute.xlu0 %1381
        %s1384 = sor.u32 256, 120
        %1385 = vbcast.lane.b32.xlu0 %v1323, %s1384
        %v1386 = vpop.permute.xlu0 %1385
        %vm1387 = vcmp.eq.s32.totalorder %v321, %v313
        %vm1388 = vcmp.eq.s32.totalorder %v321, %v314
        %vm1389 = vcmp.eq.s32.totalorder %v325, %v313
        %vm1390 = vcmp.eq.s32.totalorder %v325, %v314
        %vm1391 = vcmp.eq.s32.totalorder %v329, %v313
        %vm1392 = vcmp.eq.s32.totalorder %v329, %v314
        %vm1393 = vcmp.eq.s32.totalorder %v333, %v313
        %vm1394 = vcmp.eq.s32.totalorder %v333, %v314
        %vm1395 = vcmp.eq.s32.totalorder %v337, %v313
        %vm1396 = vcmp.eq.s32.totalorder %v337, %v314
        %vm1397 = vcmp.eq.s32.totalorder %v341, %v313
        %vm1398 = vcmp.eq.s32.totalorder %v341, %v314
        %vm1399 = vcmp.eq.s32.totalorder %v345, %v313
        %vm1400 = vcmp.eq.s32.totalorder %v345, %v314
        %vm1401 = vcmp.eq.s32.totalorder %v349, %v313
        %vm1402 = vcmp.eq.s32.totalorder %v349, %v314
        %vm1403 = vcmp.eq.s32.totalorder %v353, %v313
        %vm1404 = vcmp.eq.s32.totalorder %v353, %v314
        %vm1405 = vcmp.eq.s32.totalorder %v357, %v313
        %vm1406 = vcmp.eq.s32.totalorder %v357, %v314
        %vm1407 = vcmp.eq.s32.totalorder %v361, %v313
        %vm1408 = vcmp.eq.s32.totalorder %v361, %v314
        %vm1409 = vcmp.eq.s32.totalorder %v365, %v313
        %vm1410 = vcmp.eq.s32.totalorder %v365, %v314
        %vm1411 = vcmp.eq.s32.totalorder %v369, %v313
        %vm1412 = vcmp.eq.s32.totalorder %v369, %v314
        %vm1413 = vcmp.eq.s32.totalorder %v373, %v313
        %vm1414 = vcmp.eq.s32.totalorder %v373, %v314
        %vm1415 = vcmp.eq.s32.totalorder %v377, %v313
        %vm1416 = vcmp.eq.s32.totalorder %v377, %v314
        %vm1417 = vcmp.eq.s32.totalorder %v381, %v313
        %vm1418 = vcmp.eq.s32.totalorder %v381, %v314
        %vm1419 = vcmp.eq.s32.totalorder %v388, %v313
        %vm1420 = vcmp.eq.s32.totalorder %v388, %v314
        %vm1421 = vcmp.eq.s32.totalorder %v392, %v313
        %vm1422 = vcmp.eq.s32.totalorder %v392, %v314
        %vm1423 = vcmp.eq.s32.totalorder %v396, %v313
        %vm1424 = vcmp.eq.s32.totalorder %v396, %v314
        %vm1425 = vcmp.eq.s32.totalorder %v400, %v313
        %vm1426 = vcmp.eq.s32.totalorder %v400, %v314
        %vm1427 = vcmp.eq.s32.totalorder %v404, %v313
        %vm1428 = vcmp.eq.s32.totalorder %v404, %v314
        %vm1429 = vcmp.eq.s32.totalorder %v408, %v313
        %vm1430 = vcmp.eq.s32.totalorder %v408, %v314
        %vm1431 = vcmp.eq.s32.totalorder %v412, %v313
        %vm1432 = vcmp.eq.s32.totalorder %v412, %v314
        %vm1433 = vcmp.eq.s32.totalorder %v416, %v313
        %vm1434 = vcmp.eq.s32.totalorder %v416, %v314
        %vm1435 = vcmp.eq.s32.totalorder %v420, %v313
        %vm1436 = vcmp.eq.s32.totalorder %v420, %v314
        %vm1437 = vcmp.eq.s32.totalorder %v424, %v313
        %vm1438 = vcmp.eq.s32.totalorder %v424, %v314
        %vm1439 = vcmp.eq.s32.totalorder %v428, %v313
        %vm1440 = vcmp.eq.s32.totalorder %v428, %v314
        %vm1441 = vcmp.eq.s32.totalorder %v432, %v313
        %vm1442 = vcmp.eq.s32.totalorder %v432, %v314
        %vm1443 = vcmp.eq.s32.totalorder %v436, %v313
        %vm1444 = vcmp.eq.s32.totalorder %v436, %v314
        %vm1445 = vcmp.eq.s32.totalorder %v440, %v313
        %vm1446 = vcmp.eq.s32.totalorder %v440, %v314
        %vm1447 = vcmp.eq.s32.totalorder %v444, %v313
        %vm1448 = vcmp.eq.s32.totalorder %v444, %v314
        %vm1449 = vcmp.eq.s32.totalorder %v448, %v313
        %vm1450 = vcmp.eq.s32.totalorder %v448, %v314
        %vm1451 = vcmp.eq.s32.totalorder %v455, %v313
        %vm1452 = vcmp.eq.s32.totalorder %v455, %v314
        %vm1453 = vcmp.eq.s32.totalorder %v459, %v313
        %vm1454 = vcmp.eq.s32.totalorder %v459, %v314
        %vm1455 = vcmp.eq.s32.totalorder %v463, %v313
        %vm1456 = vcmp.eq.s32.totalorder %v463, %v314
        %vm1457 = vcmp.eq.s32.totalorder %v467, %v313
        %vm1458 = vcmp.eq.s32.totalorder %v467, %v314
        %vm1459 = vcmp.eq.s32.totalorder %v471, %v313
        %vm1460 = vcmp.eq.s32.totalorder %v471, %v314
        %vm1461 = vcmp.eq.s32.totalorder %v475, %v313
        %vm1462 = vcmp.eq.s32.totalorder %v475, %v314
        %vm1463 = vcmp.eq.s32.totalorder %v479, %v313
        %vm1464 = vcmp.eq.s32.totalorder %v479, %v314
        %vm1465 = vcmp.eq.s32.totalorder %v483, %v313
        %vm1466 = vcmp.eq.s32.totalorder %v483, %v314
        %vm1467 = vcmp.eq.s32.totalorder %v487, %v313
        %vm1468 = vcmp.eq.s32.totalorder %v487, %v314
        %vm1469 = vcmp.eq.s32.totalorder %v491, %v313
        %vm1470 = vcmp.eq.s32.totalorder %v491, %v314
        %vm1471 = vcmp.eq.s32.totalorder %v495, %v313
        %vm1472 = vcmp.eq.s32.totalorder %v495, %v314
        %vm1473 = vcmp.eq.s32.totalorder %v499, %v313
        %vm1474 = vcmp.eq.s32.totalorder %v499, %v314
        %vm1475 = vcmp.eq.s32.totalorder %v503, %v313
        %vm1476 = vcmp.eq.s32.totalorder %v503, %v314
        %vm1477 = vcmp.eq.s32.totalorder %v507, %v313
        %vm1478 = vcmp.eq.s32.totalorder %v507, %v314
        %vm1479 = vcmp.eq.s32.totalorder %v511, %v313
        %vm1480 = vcmp.eq.s32.totalorder %v511, %v314
        %vm1481 = vcmp.eq.s32.totalorder %v515, %v313
        %vm1482 = vcmp.eq.s32.totalorder %v515, %v314
        %vm1483 = vcmp.eq.s32.totalorder %v522, %v313
        %vm1484 = vcmp.eq.s32.totalorder %v522, %v314
        %vm1485 = vcmp.eq.s32.totalorder %v526, %v313
        %vm1486 = vcmp.eq.s32.totalorder %v526, %v314
        %vm1487 = vcmp.eq.s32.totalorder %v530, %v313
        %vm1488 = vcmp.eq.s32.totalorder %v530, %v314
        %vm1489 = vcmp.eq.s32.totalorder %v534, %v313
        %vm1490 = vcmp.eq.s32.totalorder %v534, %v314
        %vm1491 = vcmp.eq.s32.totalorder %v538, %v313
        %vm1492 = vcmp.eq.s32.totalorder %v538, %v314
        %vm1493 = vcmp.eq.s32.totalorder %v542, %v313
        %vm1494 = vcmp.eq.s32.totalorder %v542, %v314
        %vm1495 = vcmp.eq.s32.totalorder %v546, %v313
        %vm1496 = vcmp.eq.s32.totalorder %v546, %v314
        %vm1497 = vcmp.eq.s32.totalorder %v550, %v313
        %vm1498 = vcmp.eq.s32.totalorder %v550, %v314
        %vm1499 = vcmp.eq.s32.totalorder %v554, %v313
        %vm1500 = vcmp.eq.s32.totalorder %v554, %v314
        %vm1501 = vcmp.eq.s32.totalorder %v558, %v313
        %vm1502 = vcmp.eq.s32.totalorder %v558, %v314
        %vm1503 = vcmp.eq.s32.totalorder %v562, %v313
        %vm1504 = vcmp.eq.s32.totalorder %v562, %v314
        %vm1505 = vcmp.eq.s32.totalorder %v566, %v313
        %vm1506 = vcmp.eq.s32.totalorder %v566, %v314
        %vm1507 = vcmp.eq.s32.totalorder %v570, %v313
        %vm1508 = vcmp.eq.s32.totalorder %v570, %v314
        %vm1509 = vcmp.eq.s32.totalorder %v574, %v313
        %vm1510 = vcmp.eq.s32.totalorder %v574, %v314
        %vm1511 = vcmp.eq.s32.totalorder %v578, %v313
        %vm1512 = vcmp.eq.s32.totalorder %v578, %v314
        %vm1513 = vcmp.eq.s32.totalorder %v582, %v313
        %vm1514 = vcmp.eq.s32.totalorder %v582, %v314
        %vm1515 = vcmp.eq.s32.totalorder %v589, %v313
        %vm1516 = vcmp.eq.s32.totalorder %v589, %v314
        %vm1517 = vcmp.eq.s32.totalorder %v593, %v313
        %vm1518 = vcmp.eq.s32.totalorder %v593, %v314
        %vm1519 = vcmp.eq.s32.totalorder %v597, %v313
        %vm1520 = vcmp.eq.s32.totalorder %v597, %v314
        %vm1521 = vcmp.eq.s32.totalorder %v601, %v313
        %vm1522 = vcmp.eq.s32.totalorder %v601, %v314
        %vm1523 = vcmp.eq.s32.totalorder %v605, %v313
        %vm1524 = vcmp.eq.s32.totalorder %v605, %v314
        %vm1525 = vcmp.eq.s32.totalorder %v609, %v313
        %vm1526 = vcmp.eq.s32.totalorder %v609, %v314
        %vm1527 = vcmp.eq.s32.totalorder %v613, %v313
        %vm1528 = vcmp.eq.s32.totalorder %v613, %v314
        %vm1529 = vcmp.eq.s32.totalorder %v617, %v313
        %vm1530 = vcmp.eq.s32.totalorder %v617, %v314
        %vm1531 = vcmp.eq.s32.totalorder %v621, %v313
        %vm1532 = vcmp.eq.s32.totalorder %v621, %v314
        %vm1533 = vcmp.eq.s32.totalorder %v625, %v313
        %vm1534 = vcmp.eq.s32.totalorder %v625, %v314
        %vm1535 = vcmp.eq.s32.totalorder %v629, %v313
        %vm1536 = vcmp.eq.s32.totalorder %v629, %v314
        %vm1537 = vcmp.eq.s32.totalorder %v633, %v313
        %vm1538 = vcmp.eq.s32.totalorder %v633, %v314
        %vm1539 = vcmp.eq.s32.totalorder %v637, %v313
        %vm1540 = vcmp.eq.s32.totalorder %v637, %v314
        %vm1541 = vcmp.eq.s32.totalorder %v641, %v313
        %vm1542 = vcmp.eq.s32.totalorder %v641, %v314
        %vm1543 = vcmp.eq.s32.totalorder %v645, %v313
        %vm1544 = vcmp.eq.s32.totalorder %v645, %v314
        %vm1545 = vcmp.eq.s32.totalorder %v649, %v313
        %vm1546 = vcmp.eq.s32.totalorder %v649, %v314
        %vm1547 = vcmp.eq.s32.totalorder %v656, %v313
        %vm1548 = vcmp.eq.s32.totalorder %v656, %v314
        %vm1549 = vcmp.eq.s32.totalorder %v660, %v313
        %vm1550 = vcmp.eq.s32.totalorder %v660, %v314
        %vm1551 = vcmp.eq.s32.totalorder %v664, %v313
        %vm1552 = vcmp.eq.s32.totalorder %v664, %v314
        %vm1553 = vcmp.eq.s32.totalorder %v668, %v313
        %vm1554 = vcmp.eq.s32.totalorder %v668, %v314
        %vm1555 = vcmp.eq.s32.totalorder %v672, %v313
        %vm1556 = vcmp.eq.s32.totalorder %v672, %v314
        %vm1557 = vcmp.eq.s32.totalorder %v676, %v313
        %vm1558 = vcmp.eq.s32.totalorder %v676, %v314
        %vm1559 = vcmp.eq.s32.totalorder %v680, %v313
        %vm1560 = vcmp.eq.s32.totalorder %v680, %v314
        %vm1561 = vcmp.eq.s32.totalorder %v684, %v313
        %vm1562 = vcmp.eq.s32.totalorder %v684, %v314
        %vm1563 = vcmp.eq.s32.totalorder %v688, %v313
        %vm1564 = vcmp.eq.s32.totalorder %v688, %v314
        %vm1565 = vcmp.eq.s32.totalorder %v692, %v313
        %vm1566 = vcmp.eq.s32.totalorder %v692, %v314
        %vm1567 = vcmp.eq.s32.totalorder %v696, %v313
        %vm1568 = vcmp.eq.s32.totalorder %v696, %v314
        %vm1569 = vcmp.eq.s32.totalorder %v700, %v313
        %vm1570 = vcmp.eq.s32.totalorder %v700, %v314
        %vm1571 = vcmp.eq.s32.totalorder %v704, %v313
        %vm1572 = vcmp.eq.s32.totalorder %v704, %v314
        %vm1573 = vcmp.eq.s32.totalorder %v708, %v313
        %vm1574 = vcmp.eq.s32.totalorder %v708, %v314
        %vm1575 = vcmp.eq.s32.totalorder %v712, %v313
        %vm1576 = vcmp.eq.s32.totalorder %v712, %v314
        %vm1577 = vcmp.eq.s32.totalorder %v716, %v313
        %vm1578 = vcmp.eq.s32.totalorder %v716, %v314
        %vm1579 = vcmp.eq.s32.totalorder %v723, %v313
        %vm1580 = vcmp.eq.s32.totalorder %v723, %v314
        %vm1581 = vcmp.eq.s32.totalorder %v727, %v313
        %vm1582 = vcmp.eq.s32.totalorder %v727, %v314
        %vm1583 = vcmp.eq.s32.totalorder %v731, %v313
        %vm1584 = vcmp.eq.s32.totalorder %v731, %v314
        %vm1585 = vcmp.eq.s32.totalorder %v735, %v313
        %vm1586 = vcmp.eq.s32.totalorder %v735, %v314
        %vm1587 = vcmp.eq.s32.totalorder %v739, %v313
        %vm1588 = vcmp.eq.s32.totalorder %v739, %v314
        %vm1589 = vcmp.eq.s32.totalorder %v743, %v313
        %vm1590 = vcmp.eq.s32.totalorder %v743, %v314
        %vm1591 = vcmp.eq.s32.totalorder %v747, %v313
        %vm1592 = vcmp.eq.s32.totalorder %v747, %v314
        %vm1593 = vcmp.eq.s32.totalorder %v751, %v313
        %vm1594 = vcmp.eq.s32.totalorder %v751, %v314
        %vm1595 = vcmp.eq.s32.totalorder %v755, %v313
        %vm1596 = vcmp.eq.s32.totalorder %v755, %v314
        %vm1597 = vcmp.eq.s32.totalorder %v759, %v313
        %vm1598 = vcmp.eq.s32.totalorder %v759, %v314
        %vm1599 = vcmp.eq.s32.totalorder %v763, %v313
        %vm1600 = vcmp.eq.s32.totalorder %v763, %v314
        %vm1601 = vcmp.eq.s32.totalorder %v767, %v313
        %vm1602 = vcmp.eq.s32.totalorder %v767, %v314
        %vm1603 = vcmp.eq.s32.totalorder %v771, %v313
        %vm1604 = vcmp.eq.s32.totalorder %v771, %v314
        %vm1605 = vcmp.eq.s32.totalorder %v775, %v313
        %vm1606 = vcmp.eq.s32.totalorder %v775, %v314
        %vm1607 = vcmp.eq.s32.totalorder %v779, %v313
        %vm1608 = vcmp.eq.s32.totalorder %v779, %v314
        %vm1609 = vcmp.eq.s32.totalorder %v783, %v313
        %vm1610 = vcmp.eq.s32.totalorder %v783, %v314
        %vm1611 = vcmp.eq.s32.totalorder %v790, %v313
        %vm1612 = vcmp.eq.s32.totalorder %v790, %v314
        %vm1613 = vcmp.eq.s32.totalorder %v794, %v313
        %vm1614 = vcmp.eq.s32.totalorder %v794, %v314
        %vm1615 = vcmp.eq.s32.totalorder %v798, %v313
        %vm1616 = vcmp.eq.s32.totalorder %v798, %v314
        %vm1617 = vcmp.eq.s32.totalorder %v802, %v313
        %vm1618 = vcmp.eq.s32.totalorder %v802, %v314
        %vm1619 = vcmp.eq.s32.totalorder %v806, %v313
        %vm1620 = vcmp.eq.s32.totalorder %v806, %v314
        %vm1621 = vcmp.eq.s32.totalorder %v810, %v313
        %vm1622 = vcmp.eq.s32.totalorder %v810, %v314
        %vm1623 = vcmp.eq.s32.totalorder %v814, %v313
        %vm1624 = vcmp.eq.s32.totalorder %v814, %v314
        %vm1625 = vcmp.eq.s32.totalorder %v818, %v313
        %vm1626 = vcmp.eq.s32.totalorder %v818, %v314
        %vm1627 = vcmp.eq.s32.totalorder %v822, %v313
        %vm1628 = vcmp.eq.s32.totalorder %v822, %v314
        %vm1629 = vcmp.eq.s32.totalorder %v826, %v313
        %vm1630 = vcmp.eq.s32.totalorder %v826, %v314
        %vm1631 = vcmp.eq.s32.totalorder %v830, %v313
        %vm1632 = vcmp.eq.s32.totalorder %v830, %v314
        %vm1633 = vcmp.eq.s32.totalorder %v834, %v313
        %vm1634 = vcmp.eq.s32.totalorder %v834, %v314
        %vm1635 = vcmp.eq.s32.totalorder %v838, %v313
        %vm1636 = vcmp.eq.s32.totalorder %v838, %v314
        %vm1637 = vcmp.eq.s32.totalorder %v842, %v313
        %vm1638 = vcmp.eq.s32.totalorder %v842, %v314
        %vm1639 = vcmp.eq.s32.totalorder %v846, %v313
        %vm1640 = vcmp.eq.s32.totalorder %v846, %v314
        %vm1641 = vcmp.eq.s32.totalorder %v850, %v313
        %vm1642 = vcmp.eq.s32.totalorder %v850, %v314
        %vm1643 = vcmp.eq.s32.totalorder %v857, %v313
        %vm1644 = vcmp.eq.s32.totalorder %v857, %v314
        %vm1645 = vcmp.eq.s32.totalorder %v861, %v313
        %vm1646 = vcmp.eq.s32.totalorder %v861, %v314
        %vm1647 = vcmp.eq.s32.totalorder %v865, %v313
        %vm1648 = vcmp.eq.s32.totalorder %v865, %v314
        %vm1649 = vcmp.eq.s32.totalorder %v869, %v313
        %vm1650 = vcmp.eq.s32.totalorder %v869, %v314
        %vm1651 = vcmp.eq.s32.totalorder %v873, %v313
        %vm1652 = vcmp.eq.s32.totalorder %v873, %v314
        %vm1653 = vcmp.eq.s32.totalorder %v877, %v313
        %vm1654 = vcmp.eq.s32.totalorder %v877, %v314
        %vm1655 = vcmp.eq.s32.totalorder %v881, %v313
        %vm1656 = vcmp.eq.s32.totalorder %v881, %v314
        %vm1657 = vcmp.eq.s32.totalorder %v885, %v313
        %vm1658 = vcmp.eq.s32.totalorder %v885, %v314
        %vm1659 = vcmp.eq.s32.totalorder %v889, %v313
        %vm1660 = vcmp.eq.s32.totalorder %v889, %v314
        %vm1661 = vcmp.eq.s32.totalorder %v893, %v313
        %vm1662 = vcmp.eq.s32.totalorder %v893, %v314
        %vm1663 = vcmp.eq.s32.totalorder %v897, %v313
        %vm1664 = vcmp.eq.s32.totalorder %v897, %v314
        %vm1665 = vcmp.eq.s32.totalorder %v901, %v313
        %vm1666 = vcmp.eq.s32.totalorder %v901, %v314
        %vm1667 = vcmp.eq.s32.totalorder %v905, %v313
        %vm1668 = vcmp.eq.s32.totalorder %v905, %v314
        %vm1669 = vcmp.eq.s32.totalorder %v909, %v313
        %vm1670 = vcmp.eq.s32.totalorder %v909, %v314
        %vm1671 = vcmp.eq.s32.totalorder %v913, %v313
        %vm1672 = vcmp.eq.s32.totalorder %v913, %v314
        %vm1673 = vcmp.eq.s32.totalorder %v917, %v313
        %vm1674 = vcmp.eq.s32.totalorder %v917, %v314
        %vm1675 = vcmp.eq.s32.totalorder %v924, %v313
        %vm1676 = vcmp.eq.s32.totalorder %v924, %v314
        %vm1677 = vcmp.eq.s32.totalorder %v928, %v313
        %vm1678 = vcmp.eq.s32.totalorder %v928, %v314
        %vm1679 = vcmp.eq.s32.totalorder %v932, %v313
        %vm1680 = vcmp.eq.s32.totalorder %v932, %v314
        %vm1681 = vcmp.eq.s32.totalorder %v936, %v313
        %vm1682 = vcmp.eq.s32.totalorder %v936, %v314
        %vm1683 = vcmp.eq.s32.totalorder %v940, %v313
        %vm1684 = vcmp.eq.s32.totalorder %v940, %v314
        %vm1685 = vcmp.eq.s32.totalorder %v944, %v313
        %vm1686 = vcmp.eq.s32.totalorder %v944, %v314
        %vm1687 = vcmp.eq.s32.totalorder %v948, %v313
        %vm1688 = vcmp.eq.s32.totalorder %v948, %v314
        %vm1689 = vcmp.eq.s32.totalorder %v952, %v313
        %vm1690 = vcmp.eq.s32.totalorder %v952, %v314
        %vm1691 = vcmp.eq.s32.totalorder %v956, %v313
        %vm1692 = vcmp.eq.s32.totalorder %v956, %v314
        %vm1693 = vcmp.eq.s32.totalorder %v960, %v313
        %vm1694 = vcmp.eq.s32.totalorder %v960, %v314
        %vm1695 = vcmp.eq.s32.totalorder %v964, %v313
        %vm1696 = vcmp.eq.s32.totalorder %v964, %v314
        %vm1697 = vcmp.eq.s32.totalorder %v968, %v313
        %vm1698 = vcmp.eq.s32.totalorder %v968, %v314
        %vm1699 = vcmp.eq.s32.totalorder %v972, %v313
        %vm1700 = vcmp.eq.s32.totalorder %v972, %v314
        %vm1701 = vcmp.eq.s32.totalorder %v976, %v313
        %vm1702 = vcmp.eq.s32.totalorder %v976, %v314
        %vm1703 = vcmp.eq.s32.totalorder %v980, %v313
        %vm1704 = vcmp.eq.s32.totalorder %v980, %v314
        %vm1705 = vcmp.eq.s32.totalorder %v984, %v313
        %vm1706 = vcmp.eq.s32.totalorder %v984, %v314
        %vm1707 = vcmp.eq.s32.totalorder %v991, %v313
        %vm1708 = vcmp.eq.s32.totalorder %v991, %v314
        %vm1709 = vcmp.eq.s32.totalorder %v995, %v313
        %vm1710 = vcmp.eq.s32.totalorder %v995, %v314
        %vm1711 = vcmp.eq.s32.totalorder %v999, %v313
        %vm1712 = vcmp.eq.s32.totalorder %v999, %v314
        %vm1713 = vcmp.eq.s32.totalorder %v1003, %v313
        %vm1714 = vcmp.eq.s32.totalorder %v1003, %v314
        %vm1715 = vcmp.eq.s32.totalorder %v1007, %v313
        %vm1716 = vcmp.eq.s32.totalorder %v1007, %v314
        %vm1717 = vcmp.eq.s32.totalorder %v1011, %v313
        %vm1718 = vcmp.eq.s32.totalorder %v1011, %v314
        %vm1719 = vcmp.eq.s32.totalorder %v1015, %v313
        %vm1720 = vcmp.eq.s32.totalorder %v1015, %v314
        %vm1721 = vcmp.eq.s32.totalorder %v1019, %v313
        %vm1722 = vcmp.eq.s32.totalorder %v1019, %v314
        %vm1723 = vcmp.eq.s32.totalorder %v1023, %v313
        %vm1724 = vcmp.eq.s32.totalorder %v1023, %v314
        %vm1725 = vcmp.eq.s32.totalorder %v1027, %v313
        %vm1726 = vcmp.eq.s32.totalorder %v1027, %v314
        %vm1727 = vcmp.eq.s32.totalorder %v1031, %v313
        %vm1728 = vcmp.eq.s32.totalorder %v1031, %v314
        %vm1729 = vcmp.eq.s32.totalorder %v1035, %v313
        %vm1730 = vcmp.eq.s32.totalorder %v1035, %v314
        %vm1731 = vcmp.eq.s32.totalorder %v1039, %v313
        %vm1732 = vcmp.eq.s32.totalorder %v1039, %v314
        %vm1733 = vcmp.eq.s32.totalorder %v1043, %v313
        %vm1734 = vcmp.eq.s32.totalorder %v1043, %v314
        %vm1735 = vcmp.eq.s32.totalorder %v1047, %v313
        %vm1736 = vcmp.eq.s32.totalorder %v1047, %v314
        %vm1737 = vcmp.eq.s32.totalorder %v1051, %v313
        %vm1738 = vcmp.eq.s32.totalorder %v1051, %v314
        %vm1739 = vcmp.eq.s32.totalorder %v1058, %v313
        %vm1740 = vcmp.eq.s32.totalorder %v1058, %v314
        %vm1741 = vcmp.eq.s32.totalorder %v1062, %v313
        %vm1742 = vcmp.eq.s32.totalorder %v1062, %v314
        %vm1743 = vcmp.eq.s32.totalorder %v1066, %v313
        %vm1744 = vcmp.eq.s32.totalorder %v1066, %v314
        %vm1745 = vcmp.eq.s32.totalorder %v1070, %v313
        %vm1746 = vcmp.eq.s32.totalorder %v1070, %v314
        %vm1747 = vcmp.eq.s32.totalorder %v1074, %v313
        %vm1748 = vcmp.eq.s32.totalorder %v1074, %v314
        %vm1749 = vcmp.eq.s32.totalorder %v1078, %v313
        %vm1750 = vcmp.eq.s32.totalorder %v1078, %v314
        %vm1751 = vcmp.eq.s32.totalorder %v1082, %v313
        %vm1752 = vcmp.eq.s32.totalorder %v1082, %v314
        %vm1753 = vcmp.eq.s32.totalorder %v1086, %v313
        %vm1754 = vcmp.eq.s32.totalorder %v1086, %v314
        %vm1755 = vcmp.eq.s32.totalorder %v1090, %v313
        %vm1756 = vcmp.eq.s32.totalorder %v1090, %v314
        %vm1757 = vcmp.eq.s32.totalorder %v1094, %v313
        %vm1758 = vcmp.eq.s32.totalorder %v1094, %v314
        %vm1759 = vcmp.eq.s32.totalorder %v1098, %v313
        %vm1760 = vcmp.eq.s32.totalorder %v1098, %v314
        %vm1761 = vcmp.eq.s32.totalorder %v1102, %v313
        %vm1762 = vcmp.eq.s32.totalorder %v1102, %v314
        %vm1763 = vcmp.eq.s32.totalorder %v1106, %v313
        %vm1764 = vcmp.eq.s32.totalorder %v1106, %v314
        %vm1765 = vcmp.eq.s32.totalorder %v1110, %v313
        %vm1766 = vcmp.eq.s32.totalorder %v1110, %v314
        %vm1767 = vcmp.eq.s32.totalorder %v1114, %v313
        %vm1768 = vcmp.eq.s32.totalorder %v1114, %v314
        %vm1769 = vcmp.eq.s32.totalorder %v1118, %v313
        %vm1770 = vcmp.eq.s32.totalorder %v1118, %v314
        %vm1771 = vcmp.eq.s32.totalorder %v1125, %v313
        %vm1772 = vcmp.eq.s32.totalorder %v1125, %v314
        %vm1773 = vcmp.eq.s32.totalorder %v1129, %v313
        %vm1774 = vcmp.eq.s32.totalorder %v1129, %v314
        %vm1775 = vcmp.eq.s32.totalorder %v1133, %v313
        %vm1776 = vcmp.eq.s32.totalorder %v1133, %v314
        %vm1777 = vcmp.eq.s32.totalorder %v1137, %v313
        %vm1778 = vcmp.eq.s32.totalorder %v1137, %v314
        %vm1779 = vcmp.eq.s32.totalorder %v1141, %v313
        %vm1780 = vcmp.eq.s32.totalorder %v1141, %v314
        %vm1781 = vcmp.eq.s32.totalorder %v1145, %v313
        %vm1782 = vcmp.eq.s32.totalorder %v1145, %v314
        %vm1783 = vcmp.eq.s32.totalorder %v1149, %v313
        %vm1784 = vcmp.eq.s32.totalorder %v1149, %v314
        %vm1785 = vcmp.eq.s32.totalorder %v1153, %v313
        %vm1786 = vcmp.eq.s32.totalorder %v1153, %v314
        %vm1787 = vcmp.eq.s32.totalorder %v1157, %v313
        %vm1788 = vcmp.eq.s32.totalorder %v1157, %v314
        %vm1789 = vcmp.eq.s32.totalorder %v1161, %v313
        %vm1790 = vcmp.eq.s32.totalorder %v1161, %v314
        %vm1791 = vcmp.eq.s32.totalorder %v1165, %v313
        %vm1792 = vcmp.eq.s32.totalorder %v1165, %v314
        %vm1793 = vcmp.eq.s32.totalorder %v1169, %v313
        %vm1794 = vcmp.eq.s32.totalorder %v1169, %v314
        %vm1795 = vcmp.eq.s32.totalorder %v1173, %v313
        %vm1796 = vcmp.eq.s32.totalorder %v1173, %v314
        %vm1797 = vcmp.eq.s32.totalorder %v1177, %v313
        %vm1798 = vcmp.eq.s32.totalorder %v1177, %v314
        %vm1799 = vcmp.eq.s32.totalorder %v1181, %v313
        %vm1800 = vcmp.eq.s32.totalorder %v1181, %v314
        %vm1801 = vcmp.eq.s32.totalorder %v1185, %v313
        %vm1802 = vcmp.eq.s32.totalorder %v1185, %v314
        %vm1803 = vcmp.eq.s32.totalorder %v1192, %v313
        %vm1804 = vcmp.eq.s32.totalorder %v1192, %v314
        %vm1805 = vcmp.eq.s32.totalorder %v1196, %v313
        %vm1806 = vcmp.eq.s32.totalorder %v1196, %v314
        %vm1807 = vcmp.eq.s32.totalorder %v1200, %v313
        %vm1808 = vcmp.eq.s32.totalorder %v1200, %v314
        %vm1809 = vcmp.eq.s32.totalorder %v1204, %v313
        %vm1810 = vcmp.eq.s32.totalorder %v1204, %v314
        %vm1811 = vcmp.eq.s32.totalorder %v1208, %v313
        %vm1812 = vcmp.eq.s32.totalorder %v1208, %v314
        %vm1813 = vcmp.eq.s32.totalorder %v1212, %v313
        %vm1814 = vcmp.eq.s32.totalorder %v1212, %v314
        %vm1815 = vcmp.eq.s32.totalorder %v1216, %v313
        %vm1816 = vcmp.eq.s32.totalorder %v1216, %v314
        %vm1817 = vcmp.eq.s32.totalorder %v1220, %v313
        %vm1818 = vcmp.eq.s32.totalorder %v1220, %v314
        %vm1819 = vcmp.eq.s32.totalorder %v1224, %v313
        %vm1820 = vcmp.eq.s32.totalorder %v1224, %v314
        %vm1821 = vcmp.eq.s32.totalorder %v1228, %v313
        %vm1822 = vcmp.eq.s32.totalorder %v1228, %v314
        %vm1823 = vcmp.eq.s32.totalorder %v1232, %v313
        %vm1824 = vcmp.eq.s32.totalorder %v1232, %v314
        %vm1825 = vcmp.eq.s32.totalorder %v1236, %v313
        %vm1826 = vcmp.eq.s32.totalorder %v1236, %v314
        %vm1827 = vcmp.eq.s32.totalorder %v1240, %v313
        %vm1828 = vcmp.eq.s32.totalorder %v1240, %v314
        %vm1829 = vcmp.eq.s32.totalorder %v1244, %v313
        %vm1830 = vcmp.eq.s32.totalorder %v1244, %v314
        %vm1831 = vcmp.eq.s32.totalorder %v1248, %v313
        %vm1832 = vcmp.eq.s32.totalorder %v1248, %v314
        %vm1833 = vcmp.eq.s32.totalorder %v1252, %v313
        %vm1834 = vcmp.eq.s32.totalorder %v1252, %v314
        %vm1835 = vcmp.eq.s32.totalorder %v1259, %v313
        %vm1836 = vcmp.eq.s32.totalorder %v1259, %v314
        %vm1837 = vcmp.eq.s32.totalorder %v1263, %v313
        %vm1838 = vcmp.eq.s32.totalorder %v1263, %v314
        %vm1839 = vcmp.eq.s32.totalorder %v1267, %v313
        %vm1840 = vcmp.eq.s32.totalorder %v1267, %v314
        %vm1841 = vcmp.eq.s32.totalorder %v1271, %v313
        %vm1842 = vcmp.eq.s32.totalorder %v1271, %v314
        %vm1843 = vcmp.eq.s32.totalorder %v1275, %v313
        %vm1844 = vcmp.eq.s32.totalorder %v1275, %v314
        %vm1845 = vcmp.eq.s32.totalorder %v1279, %v313
        %vm1846 = vcmp.eq.s32.totalorder %v1279, %v314
        %vm1847 = vcmp.eq.s32.totalorder %v1283, %v313
        %vm1848 = vcmp.eq.s32.totalorder %v1283, %v314
        %vm1849 = vcmp.eq.s32.totalorder %v1287, %v313
        %vm1850 = vcmp.eq.s32.totalorder %v1287, %v314
        %vm1851 = vcmp.eq.s32.totalorder %v1291, %v313
        %vm1852 = vcmp.eq.s32.totalorder %v1291, %v314
        %vm1853 = vcmp.eq.s32.totalorder %v1295, %v313
        %vm1854 = vcmp.eq.s32.totalorder %v1295, %v314
        %vm1855 = vcmp.eq.s32.totalorder %v1299, %v313
        %vm1856 = vcmp.eq.s32.totalorder %v1299, %v314
        %vm1857 = vcmp.eq.s32.totalorder %v1303, %v313
        %vm1858 = vcmp.eq.s32.totalorder %v1303, %v314
        %vm1859 = vcmp.eq.s32.totalorder %v1307, %v313
        %vm1860 = vcmp.eq.s32.totalorder %v1307, %v314
        %vm1861 = vcmp.eq.s32.totalorder %v1311, %v313
        %vm1862 = vcmp.eq.s32.totalorder %v1311, %v314
        %vm1863 = vcmp.eq.s32.totalorder %v1315, %v313
        %vm1864 = vcmp.eq.s32.totalorder %v1315, %v314
        %vm1865 = vcmp.eq.s32.totalorder %v1319, %v313
        %vm1866 = vcmp.eq.s32.totalorder %v1319, %v314
        %vm1867 = vcmp.eq.s32.totalorder %v1326, %v313
        %vm1868 = vcmp.eq.s32.totalorder %v1326, %v314
        %vm1869 = vcmp.eq.s32.totalorder %v1330, %v313
        %vm1870 = vcmp.eq.s32.totalorder %v1330, %v314
        %vm1871 = vcmp.eq.s32.totalorder %v1334, %v313
        %vm1872 = vcmp.eq.s32.totalorder %v1334, %v314
        %vm1873 = vcmp.eq.s32.totalorder %v1338, %v313
        %vm1874 = vcmp.eq.s32.totalorder %v1338, %v314
        %vm1875 = vcmp.eq.s32.totalorder %v1342, %v313
        %vm1876 = vcmp.eq.s32.totalorder %v1342, %v314
        %vm1877 = vcmp.eq.s32.totalorder %v1346, %v313
        %vm1878 = vcmp.eq.s32.totalorder %v1346, %v314
        %vm1879 = vcmp.eq.s32.totalorder %v1350, %v313
        %vm1880 = vcmp.eq.s32.totalorder %v1350, %v314
        %vm1881 = vcmp.eq.s32.totalorder %v1354, %v313
        %vm1882 = vcmp.eq.s32.totalorder %v1354, %v314
        %vm1883 = vcmp.eq.s32.totalorder %v1358, %v313
        %vm1884 = vcmp.eq.s32.totalorder %v1358, %v314
        %vm1885 = vcmp.eq.s32.totalorder %v1362, %v313
        %vm1886 = vcmp.eq.s32.totalorder %v1362, %v314
        %vm1887 = vcmp.eq.s32.totalorder %v1366, %v313
        %vm1888 = vcmp.eq.s32.totalorder %v1366, %v314
        %vm1889 = vcmp.eq.s32.totalorder %v1370, %v313
        %vm1890 = vcmp.eq.s32.totalorder %v1370, %v314
        %vm1891 = vcmp.eq.s32.totalorder %v1374, %v313
        %vm1892 = vcmp.eq.s32.totalorder %v1374, %v314
        %vm1893 = vcmp.eq.s32.totalorder %v1378, %v313
        %vm1894 = vcmp.eq.s32.totalorder %v1378, %v314
        %vm1895 = vcmp.eq.s32.totalorder %v1382, %v313
        %vm1896 = vcmp.eq.s32.totalorder %v1382, %v314
        %vm1897 = vcmp.eq.s32.totalorder %v1386, %v313
        %vm1898 = vcmp.eq.s32.totalorder %v1386, %v314
        %v1899 = vsel %vm1387, 1, 0
        %v1900 = vsel %vm1388, 1, 0
        %v1901 = vsel %vm1389, 1, 0
        %v1902 = vsel %vm1390, 1, 0
        %v1903 = vsel %vm1391, 1, 0
        %v1904 = vsel %vm1392, 1, 0
        %v1905 = vsel %vm1393, 1, 0
        %v1906 = vsel %vm1394, 1, 0
        %v1907 = vsel %vm1395, 1, 0
        %v1908 = vsel %vm1396, 1, 0
        %v1909 = vsel %vm1397, 1, 0
        %v1910 = vsel %vm1398, 1, 0
        %v1911 = vsel %vm1399, 1, 0
        %v1912 = vsel %vm1400, 1, 0
        %v1913 = vsel %vm1401, 1, 0
        %v1914 = vsel %vm1402, 1, 0
        %v1915 = vsel %vm1403, 1, 0
        %v1916 = vsel %vm1404, 1, 0
        %v1917 = vsel %vm1405, 1, 0
        %v1918 = vsel %vm1406, 1, 0
        %v1919 = vsel %vm1407, 1, 0
        %v1920 = vsel %vm1408, 1, 0
        %v1921 = vsel %vm1409, 1, 0
        %v1922 = vsel %vm1410, 1, 0
        %v1923 = vsel %vm1411, 1, 0
        %v1924 = vsel %vm1412, 1, 0
        %v1925 = vsel %vm1413, 1, 0
        %v1926 = vsel %vm1414, 1, 0
        %v1927 = vsel %vm1415, 1, 0
        %v1928 = vsel %vm1416, 1, 0
        %v1929 = vsel %vm1417, 1, 0
        %v1930 = vsel %vm1418, 1, 0
        %v1931 = vsel %vm1419, 1, 0
        %v1932 = vsel %vm1420, 1, 0
        %v1933 = vsel %vm1421, 1, 0
        %v1934 = vsel %vm1422, 1, 0
        %v1935 = vsel %vm1423, 1, 0
        %v1936 = vsel %vm1424, 1, 0
        %v1937 = vsel %vm1425, 1, 0
        %v1938 = vsel %vm1426, 1, 0
        %v1939 = vsel %vm1427, 1, 0
        %v1940 = vsel %vm1428, 1, 0
        %v1941 = vsel %vm1429, 1, 0
        %v1942 = vsel %vm1430, 1, 0
        %v1943 = vsel %vm1431, 1, 0
        %v1944 = vsel %vm1432, 1, 0
        %v1945 = vsel %vm1433, 1, 0
        %v1946 = vsel %vm1434, 1, 0
        %v1947 = vsel %vm1435, 1, 0
        %v1948 = vsel %vm1436, 1, 0
        %v1949 = vsel %vm1437, 1, 0
        %v1950 = vsel %vm1438, 1, 0
        %v1951 = vsel %vm1439, 1, 0
        %v1952 = vsel %vm1440, 1, 0
        %v1953 = vsel %vm1441, 1, 0
        %v1954 = vsel %vm1442, 1, 0
        %v1955 = vsel %vm1443, 1, 0
        %v1956 = vsel %vm1444, 1, 0
        %v1957 = vsel %vm1445, 1, 0
        %v1958 = vsel %vm1446, 1, 0
        %v1959 = vsel %vm1447, 1, 0
        %v1960 = vsel %vm1448, 1, 0
        %v1961 = vsel %vm1449, 1, 0
        %v1962 = vsel %vm1450, 1, 0
        %v1963 = vsel %vm1451, 1, 0
        %v1964 = vsel %vm1452, 1, 0
        %v1965 = vsel %vm1453, 1, 0
        %v1966 = vsel %vm1454, 1, 0
        %v1967 = vsel %vm1455, 1, 0
        %v1968 = vsel %vm1456, 1, 0
        %v1969 = vsel %vm1457, 1, 0
        %v1970 = vsel %vm1458, 1, 0
        %v1971 = vsel %vm1459, 1, 0
        %v1972 = vsel %vm1460, 1, 0
        %v1973 = vsel %vm1461, 1, 0
        %v1974 = vsel %vm1462, 1, 0
        %v1975 = vsel %vm1463, 1, 0
        %v1976 = vsel %vm1464, 1, 0
        %v1977 = vsel %vm1465, 1, 0
        %v1978 = vsel %vm1466, 1, 0
        %v1979 = vsel %vm1467, 1, 0
        %v1980 = vsel %vm1468, 1, 0
        %v1981 = vsel %vm1469, 1, 0
        %v1982 = vsel %vm1470, 1, 0
        %v1983 = vsel %vm1471, 1, 0
        %v1984 = vsel %vm1472, 1, 0
        %v1985 = vsel %vm1473, 1, 0
        %v1986 = vsel %vm1474, 1, 0
        %v1987 = vsel %vm1475, 1, 0
        %v1988 = vsel %vm1476, 1, 0
        %v1989 = vsel %vm1477, 1, 0
        %v1990 = vsel %vm1478, 1, 0
        %v1991 = vsel %vm1479, 1, 0
        %v1992 = vsel %vm1480, 1, 0
        %v1993 = vsel %vm1481, 1, 0
        %v1994 = vsel %vm1482, 1, 0
        %v1995 = vsel %vm1483, 1, 0
        %v1996 = vsel %vm1484, 1, 0
        %v1997 = vsel %vm1485, 1, 0
        %v1998 = vsel %vm1486, 1, 0
        %v1999 = vsel %vm1487, 1, 0
        %v2000 = vsel %vm1488, 1, 0
        %v2001 = vsel %vm1489, 1, 0
        %v2002 = vsel %vm1490, 1, 0
        %v2003 = vsel %vm1491, 1, 0
        %v2004 = vsel %vm1492, 1, 0
        %v2005 = vsel %vm1493, 1, 0
        %v2006 = vsel %vm1494, 1, 0
        %v2007 = vsel %vm1495, 1, 0
        %v2008 = vsel %vm1496, 1, 0
        %v2009 = vsel %vm1497, 1, 0
        %v2010 = vsel %vm1498, 1, 0
        %v2011 = vsel %vm1499, 1, 0
        %v2012 = vsel %vm1500, 1, 0
        %v2013 = vsel %vm1501, 1, 0
        %v2014 = vsel %vm1502, 1, 0
        %v2015 = vsel %vm1503, 1, 0
        %v2016 = vsel %vm1504, 1, 0
        %v2017 = vsel %vm1505, 1, 0
        %v2018 = vsel %vm1506, 1, 0
        %v2019 = vsel %vm1507, 1, 0
        %v2020 = vsel %vm1508, 1, 0
        %v2021 = vsel %vm1509, 1, 0
        %v2022 = vsel %vm1510, 1, 0
        %v2023 = vsel %vm1511, 1, 0
        %v2024 = vsel %vm1512, 1, 0
        %v2025 = vsel %vm1513, 1, 0
        %v2026 = vsel %vm1514, 1, 0
        %v2027 = vsel %vm1515, 1, 0
        %v2028 = vsel %vm1516, 1, 0
        %v2029 = vsel %vm1517, 1, 0
        %v2030 = vsel %vm1518, 1, 0
        %v2031 = vsel %vm1519, 1, 0
        %v2032 = vsel %vm1520, 1, 0
        %v2033 = vsel %vm1521, 1, 0
        %v2034 = vsel %vm1522, 1, 0
        %v2035 = vsel %vm1523, 1, 0
        %v2036 = vsel %vm1524, 1, 0
        %v2037 = vsel %vm1525, 1, 0
        %v2038 = vsel %vm1526, 1, 0
        %v2039 = vsel %vm1527, 1, 0
        %v2040 = vsel %vm1528, 1, 0
        %v2041 = vsel %vm1529, 1, 0
        %v2042 = vsel %vm1530, 1, 0
        %v2043 = vsel %vm1531, 1, 0
        %v2044 = vsel %vm1532, 1, 0
        %v2045 = vsel %vm1533, 1, 0
        %v2046 = vsel %vm1534, 1, 0
        %v2047 = vsel %vm1535, 1, 0
        %v2048 = vsel %vm1536, 1, 0
        %v2049 = vsel %vm1537, 1, 0
        %v2050 = vsel %vm1538, 1, 0
        %v2051 = vsel %vm1539, 1, 0
        %v2052 = vsel %vm1540, 1, 0
        %v2053 = vsel %vm1541, 1, 0
        %v2054 = vsel %vm1542, 1, 0
        %v2055 = vsel %vm1543, 1, 0
        %v2056 = vsel %vm1544, 1, 0
        %v2057 = vsel %vm1545, 1, 0
        %v2058 = vsel %vm1546, 1, 0
        %v2059 = vsel %vm1547, 1, 0
        %v2060 = vsel %vm1548, 1, 0
        %v2061 = vsel %vm1549, 1, 0
        %v2062 = vsel %vm1550, 1, 0
        %v2063 = vsel %vm1551, 1, 0
        %v2064 = vsel %vm1552, 1, 0
        %v2065 = vsel %vm1553, 1, 0
        %v2066 = vsel %vm1554, 1, 0
        %v2067 = vsel %vm1555, 1, 0
        %v2068 = vsel %vm1556, 1, 0
        %v2069 = vsel %vm1557, 1, 0
        %v2070 = vsel %vm1558, 1, 0
        %v2071 = vsel %vm1559, 1, 0
        %v2072 = vsel %vm1560, 1, 0
        %v2073 = vsel %vm1561, 1, 0
        %v2074 = vsel %vm1562, 1, 0
        %v2075 = vsel %vm1563, 1, 0
        %v2076 = vsel %vm1564, 1, 0
        %v2077 = vsel %vm1565, 1, 0
        %v2078 = vsel %vm1566, 1, 0
        %v2079 = vsel %vm1567, 1, 0
        %v2080 = vsel %vm1568, 1, 0
        %v2081 = vsel %vm1569, 1, 0
        %v2082 = vsel %vm1570, 1, 0
        %v2083 = vsel %vm1571, 1, 0
        %v2084 = vsel %vm1572, 1, 0
        %v2085 = vsel %vm1573, 1, 0
        %v2086 = vsel %vm1574, 1, 0
        %v2087 = vsel %vm1575, 1, 0
        %v2088 = vsel %vm1576, 1, 0
        %v2089 = vsel %vm1577, 1, 0
        %v2090 = vsel %vm1578, 1, 0
        %v2091 = vsel %vm1579, 1, 0
        %v2092 = vsel %vm1580, 1, 0
        %v2093 = vsel %vm1581, 1, 0
        %v2094 = vsel %vm1582, 1, 0
        %v2095 = vsel %vm1583, 1, 0
        %v2096 = vsel %vm1584, 1, 0
        %v2097 = vsel %vm1585, 1, 0
        %v2098 = vsel %vm1586, 1, 0
        %v2099 = vsel %vm1587, 1, 0
        %v2100 = vsel %vm1588, 1, 0
        %v2101 = vsel %vm1589, 1, 0
        %v2102 = vsel %vm1590, 1, 0
        %v2103 = vsel %vm1591, 1, 0
        %v2104 = vsel %vm1592, 1, 0
        %v2105 = vsel %vm1593, 1, 0
        %v2106 = vsel %vm1594, 1, 0
        %v2107 = vsel %vm1595, 1, 0
        %v2108 = vsel %vm1596, 1, 0
        %v2109 = vsel %vm1597, 1, 0
        %v2110 = vsel %vm1598, 1, 0
        %v2111 = vsel %vm1599, 1, 0
        %v2112 = vsel %vm1600, 1, 0
        %v2113 = vsel %vm1601, 1, 0
        %v2114 = vsel %vm1602, 1, 0
        %v2115 = vsel %vm1603, 1, 0
        %v2116 = vsel %vm1604, 1, 0
        %v2117 = vsel %vm1605, 1, 0
        %v2118 = vsel %vm1606, 1, 0
        %v2119 = vsel %vm1607, 1, 0
        %v2120 = vsel %vm1608, 1, 0
        %v2121 = vsel %vm1609, 1, 0
        %v2122 = vsel %vm1610, 1, 0
        %v2123 = vsel %vm1611, 1, 0
        %v2124 = vsel %vm1612, 1, 0
        %v2125 = vsel %vm1613, 1, 0
        %v2126 = vsel %vm1614, 1, 0
        %v2127 = vsel %vm1615, 1, 0
        %v2128 = vsel %vm1616, 1, 0
        %v2129 = vsel %vm1617, 1, 0
        %v2130 = vsel %vm1618, 1, 0
        %v2131 = vsel %vm1619, 1, 0
        %v2132 = vsel %vm1620, 1, 0
        %v2133 = vsel %vm1621, 1, 0
        %v2134 = vsel %vm1622, 1, 0
        %v2135 = vsel %vm1623, 1, 0
        %v2136 = vsel %vm1624, 1, 0
        %v2137 = vsel %vm1625, 1, 0
        %v2138 = vsel %vm1626, 1, 0
        %v2139 = vsel %vm1627, 1, 0
        %v2140 = vsel %vm1628, 1, 0
        %v2141 = vsel %vm1629, 1, 0
        %v2142 = vsel %vm1630, 1, 0
        %v2143 = vsel %vm1631, 1, 0
        %v2144 = vsel %vm1632, 1, 0
        %v2145 = vsel %vm1633, 1, 0
        %v2146 = vsel %vm1634, 1, 0
        %v2147 = vsel %vm1635, 1, 0
        %v2148 = vsel %vm1636, 1, 0
        %v2149 = vsel %vm1637, 1, 0
        %v2150 = vsel %vm1638, 1, 0
        %v2151 = vsel %vm1639, 1, 0
        %v2152 = vsel %vm1640, 1, 0
        %v2153 = vsel %vm1641, 1, 0
        %v2154 = vsel %vm1642, 1, 0
        %v2155 = vsel %vm1643, 1, 0
        %v2156 = vsel %vm1644, 1, 0
        %v2157 = vsel %vm1645, 1, 0
        %v2158 = vsel %vm1646, 1, 0
        %v2159 = vsel %vm1647, 1, 0
        %v2160 = vsel %vm1648, 1, 0
        %v2161 = vsel %vm1649, 1, 0
        %v2162 = vsel %vm1650, 1, 0
        %v2163 = vsel %vm1651, 1, 0
        %v2164 = vsel %vm1652, 1, 0
        %v2165 = vsel %vm1653, 1, 0
        %v2166 = vsel %vm1654, 1, 0
        %v2167 = vsel %vm1655, 1, 0
        %v2168 = vsel %vm1656, 1, 0
        %v2169 = vsel %vm1657, 1, 0
        %v2170 = vsel %vm1658, 1, 0
        %v2171 = vsel %vm1659, 1, 0
        %v2172 = vsel %vm1660, 1, 0
        %v2173 = vsel %vm1661, 1, 0
        %v2174 = vsel %vm1662, 1, 0
        %v2175 = vsel %vm1663, 1, 0
        %v2176 = vsel %vm1664, 1, 0
        %v2177 = vsel %vm1665, 1, 0
        %v2178 = vsel %vm1666, 1, 0
        %v2179 = vsel %vm1667, 1, 0
        %v2180 = vsel %vm1668, 1, 0
        %v2181 = vsel %vm1669, 1, 0
        %v2182 = vsel %vm1670, 1, 0
        %v2183 = vsel %vm1671, 1, 0
        %v2184 = vsel %vm1672, 1, 0
        %v2185 = vsel %vm1673, 1, 0
        %v2186 = vsel %vm1674, 1, 0
        %v2187 = vsel %vm1675, 1, 0
        %v2188 = vsel %vm1676, 1, 0
        %v2189 = vsel %vm1677, 1, 0
        %v2190 = vsel %vm1678, 1, 0
        %v2191 = vsel %vm1679, 1, 0
        %v2192 = vsel %vm1680, 1, 0
        %v2193 = vsel %vm1681, 1, 0
        %v2194 = vsel %vm1682, 1, 0
        %v2195 = vsel %vm1683, 1, 0
        %v2196 = vsel %vm1684, 1, 0
        %v2197 = vsel %vm1685, 1, 0
        %v2198 = vsel %vm1686, 1, 0
        %v2199 = vsel %vm1687, 1, 0
        %v2200 = vsel %vm1688, 1, 0
        %v2201 = vsel %vm1689, 1, 0
        %v2202 = vsel %vm1690, 1, 0
        %v2203 = vsel %vm1691, 1, 0
        %v2204 = vsel %vm1692, 1, 0
        %v2205 = vsel %vm1693, 1, 0
        %v2206 = vsel %vm1694, 1, 0
        %v2207 = vsel %vm1695, 1, 0
        %v2208 = vsel %vm1696, 1, 0
        %v2209 = vsel %vm1697, 1, 0
        %v2210 = vsel %vm1698, 1, 0
        %v2211 = vsel %vm1699, 1, 0
        %v2212 = vsel %vm1700, 1, 0
        %v2213 = vsel %vm1701, 1, 0
        %v2214 = vsel %vm1702, 1, 0
        %v2215 = vsel %vm1703, 1, 0
        %v2216 = vsel %vm1704, 1, 0
        %v2217 = vsel %vm1705, 1, 0
        %v2218 = vsel %vm1706, 1, 0
        %v2219 = vsel %vm1707, 1, 0
        %v2220 = vsel %vm1708, 1, 0
        %v2221 = vsel %vm1709, 1, 0
        %v2222 = vsel %vm1710, 1, 0
        %v2223 = vsel %vm1711, 1, 0
        %v2224 = vsel %vm1712, 1, 0
        %v2225 = vsel %vm1713, 1, 0
        %v2226 = vsel %vm1714, 1, 0
        %v2227 = vsel %vm1715, 1, 0
        %v2228 = vsel %vm1716, 1, 0
        %v2229 = vsel %vm1717, 1, 0
        %v2230 = vsel %vm1718, 1, 0
        %v2231 = vsel %vm1719, 1, 0
        %v2232 = vsel %vm1720, 1, 0
        %v2233 = vsel %vm1721, 1, 0
        %v2234 = vsel %vm1722, 1, 0
        %v2235 = vsel %vm1723, 1, 0
        %v2236 = vsel %vm1724, 1, 0
        %v2237 = vsel %vm1725, 1, 0
        %v2238 = vsel %vm1726, 1, 0
        %v2239 = vsel %vm1727, 1, 0
        %v2240 = vsel %vm1728, 1, 0
        %v2241 = vsel %vm1729, 1, 0
        %v2242 = vsel %vm1730, 1, 0
        %v2243 = vsel %vm1731, 1, 0
        %v2244 = vsel %vm1732, 1, 0
        %v2245 = vsel %vm1733, 1, 0
        %v2246 = vsel %vm1734, 1, 0
        %v2247 = vsel %vm1735, 1, 0
        %v2248 = vsel %vm1736, 1, 0
        %v2249 = vsel %vm1737, 1, 0
        %v2250 = vsel %vm1738, 1, 0
        %v2251 = vsel %vm1739, 1, 0
        %v2252 = vsel %vm1740, 1, 0
        %v2253 = vsel %vm1741, 1, 0
        %v2254 = vsel %vm1742, 1, 0
        %v2255 = vsel %vm1743, 1, 0
        %v2256 = vsel %vm1744, 1, 0
        %v2257 = vsel %vm1745, 1, 0
        %v2258 = vsel %vm1746, 1, 0
        %v2259 = vsel %vm1747, 1, 0
        %v2260 = vsel %vm1748, 1, 0
        %v2261 = vsel %vm1749, 1, 0
        %v2262 = vsel %vm1750, 1, 0
        %v2263 = vsel %vm1751, 1, 0
        %v2264 = vsel %vm1752, 1, 0
        %v2265 = vsel %vm1753, 1, 0
        %v2266 = vsel %vm1754, 1, 0
        %v2267 = vsel %vm1755, 1, 0
        %v2268 = vsel %vm1756, 1, 0
        %v2269 = vsel %vm1757, 1, 0
        %v2270 = vsel %vm1758, 1, 0
        %v2271 = vsel %vm1759, 1, 0
        %v2272 = vsel %vm1760, 1, 0
        %v2273 = vsel %vm1761, 1, 0
        %v2274 = vsel %vm1762, 1, 0
        %v2275 = vsel %vm1763, 1, 0
        %v2276 = vsel %vm1764, 1, 0
        %v2277 = vsel %vm1765, 1, 0
        %v2278 = vsel %vm1766, 1, 0
        %v2279 = vsel %vm1767, 1, 0
        %v2280 = vsel %vm1768, 1, 0
        %v2281 = vsel %vm1769, 1, 0
        %v2282 = vsel %vm1770, 1, 0
        %v2283 = vsel %vm1771, 1, 0
        %v2284 = vsel %vm1772, 1, 0
        %v2285 = vsel %vm1773, 1, 0
        %v2286 = vsel %vm1774, 1, 0
        %v2287 = vsel %vm1775, 1, 0
        %v2288 = vsel %vm1776, 1, 0
        %v2289 = vsel %vm1777, 1, 0
        %v2290 = vsel %vm1778, 1, 0
        %v2291 = vsel %vm1779, 1, 0
        %v2292 = vsel %vm1780, 1, 0
        %v2293 = vsel %vm1781, 1, 0
        %v2294 = vsel %vm1782, 1, 0
        %v2295 = vsel %vm1783, 1, 0
        %v2296 = vsel %vm1784, 1, 0
        %v2297 = vsel %vm1785, 1, 0
        %v2298 = vsel %vm1786, 1, 0
        %v2299 = vsel %vm1787, 1, 0
        %v2300 = vsel %vm1788, 1, 0
        %v2301 = vsel %vm1789, 1, 0
        %v2302 = vsel %vm1790, 1, 0
        %v2303 = vsel %vm1791, 1, 0
        %v2304 = vsel %vm1792, 1, 0
        %v2305 = vsel %vm1793, 1, 0
        %v2306 = vsel %vm1794, 1, 0
        %v2307 = vsel %vm1795, 1, 0
        %v2308 = vsel %vm1796, 1, 0
        %v2309 = vsel %vm1797, 1, 0
        %v2310 = vsel %vm1798, 1, 0
        %v2311 = vsel %vm1799, 1, 0
        %v2312 = vsel %vm1800, 1, 0
        %v2313 = vsel %vm1801, 1, 0
        %v2314 = vsel %vm1802, 1, 0
        %v2315 = vsel %vm1803, 1, 0
        %v2316 = vsel %vm1804, 1, 0
        %v2317 = vsel %vm1805, 1, 0
        %v2318 = vsel %vm1806, 1, 0
        %v2319 = vsel %vm1807, 1, 0
        %v2320 = vsel %vm1808, 1, 0
        %v2321 = vsel %vm1809, 1, 0
        %v2322 = vsel %vm1810, 1, 0
        %v2323 = vsel %vm1811, 1, 0
        %v2324 = vsel %vm1812, 1, 0
        %v2325 = vsel %vm1813, 1, 0
        %v2326 = vsel %vm1814, 1, 0
        %v2327 = vsel %vm1815, 1, 0
        %v2328 = vsel %vm1816, 1, 0
        %v2329 = vsel %vm1817, 1, 0
        %v2330 = vsel %vm1818, 1, 0
        %v2331 = vsel %vm1819, 1, 0
        %v2332 = vsel %vm1820, 1, 0
        %v2333 = vsel %vm1821, 1, 0
        %v2334 = vsel %vm1822, 1, 0
        %v2335 = vsel %vm1823, 1, 0
        %v2336 = vsel %vm1824, 1, 0
        %v2337 = vsel %vm1825, 1, 0
        %v2338 = vsel %vm1826, 1, 0
        %v2339 = vsel %vm1827, 1, 0
        %v2340 = vsel %vm1828, 1, 0
        %v2341 = vsel %vm1829, 1, 0
        %v2342 = vsel %vm1830, 1, 0
        %v2343 = vsel %vm1831, 1, 0
        %v2344 = vsel %vm1832, 1, 0
        %v2345 = vsel %vm1833, 1, 0
        %v2346 = vsel %vm1834, 1, 0
        %v2347 = vsel %vm1835, 1, 0
        %v2348 = vsel %vm1836, 1, 0
        %v2349 = vsel %vm1837, 1, 0
        %v2350 = vsel %vm1838, 1, 0
        %v2351 = vsel %vm1839, 1, 0
        %v2352 = vsel %vm1840, 1, 0
        %v2353 = vsel %vm1841, 1, 0
        %v2354 = vsel %vm1842, 1, 0
        %v2355 = vsel %vm1843, 1, 0
        %v2356 = vsel %vm1844, 1, 0
        %v2357 = vsel %vm1845, 1, 0
        %v2358 = vsel %vm1846, 1, 0
        %v2359 = vsel %vm1847, 1, 0
        %v2360 = vsel %vm1848, 1, 0
        %v2361 = vsel %vm1849, 1, 0
        %v2362 = vsel %vm1850, 1, 0
        %v2363 = vsel %vm1851, 1, 0
        %v2364 = vsel %vm1852, 1, 0
        %v2365 = vsel %vm1853, 1, 0
        %v2366 = vsel %vm1854, 1, 0
        %v2367 = vsel %vm1855, 1, 0
        %v2368 = vsel %vm1856, 1, 0
        %v2369 = vsel %vm1857, 1, 0
        %v2370 = vsel %vm1858, 1, 0
        %v2371 = vsel %vm1859, 1, 0
        %v2372 = vsel %vm1860, 1, 0
        %v2373 = vsel %vm1861, 1, 0
        %v2374 = vsel %vm1862, 1, 0
        %v2375 = vsel %vm1863, 1, 0
        %v2376 = vsel %vm1864, 1, 0
        %v2377 = vsel %vm1865, 1, 0
        %v2378 = vsel %vm1866, 1, 0
        %v2379 = vsel %vm1867, 1, 0
        %v2380 = vsel %vm1868, 1, 0
        %v2381 = vsel %vm1869, 1, 0
        %v2382 = vsel %vm1870, 1, 0
        %v2383 = vsel %vm1871, 1, 0
        %v2384 = vsel %vm1872, 1, 0
        %v2385 = vsel %vm1873, 1, 0
        %v2386 = vsel %vm1874, 1, 0
        %v2387 = vsel %vm1875, 1, 0
        %v2388 = vsel %vm1876, 1, 0
        %v2389 = vsel %vm1877, 1, 0
        %v2390 = vsel %vm1878, 1, 0
        %v2391 = vsel %vm1879, 1, 0
        %v2392 = vsel %vm1880, 1, 0
        %v2393 = vsel %vm1881, 1, 0
        %v2394 = vsel %vm1882, 1, 0
        %v2395 = vsel %vm1883, 1, 0
        %v2396 = vsel %vm1884, 1, 0
        %v2397 = vsel %vm1885, 1, 0
        %v2398 = vsel %vm1886, 1, 0
        %v2399 = vsel %vm1887, 1, 0
        %v2400 = vsel %vm1888, 1, 0
        %v2401 = vsel %vm1889, 1, 0
        %v2402 = vsel %vm1890, 1, 0
        %v2403 = vsel %vm1891, 1, 0
        %v2404 = vsel %vm1892, 1, 0
        %v2405 = vsel %vm1893, 1, 0
        %v2406 = vsel %vm1894, 1, 0
        %v2407 = vsel %vm1895, 1, 0
        %v2408 = vsel %vm1896, 1, 0
        %v2409 = vsel %vm1897, 1, 0
        %v2410 = vsel %vm1898, 1, 0
        %v2411 = vcvt.s32.f32 %v1899
        %v2412 = vcvt.s32.f32 %v1900
        %v2413 = vcvt.s32.f32 %v1901
        %v2414 = vcvt.s32.f32 %v1902
        %v2415 = vcvt.s32.f32 %v1903
        %v2416 = vcvt.s32.f32 %v1904
        %v2417 = vcvt.s32.f32 %v1905
        %v2418 = vcvt.s32.f32 %v1906
        %v2419 = vcvt.s32.f32 %v1907
        %v2420 = vcvt.s32.f32 %v1908
        %v2421 = vcvt.s32.f32 %v1909
        %v2422 = vcvt.s32.f32 %v1910
        %v2423 = vcvt.s32.f32 %v1911
        %v2424 = vcvt.s32.f32 %v1912
        %v2425 = vcvt.s32.f32 %v1913
        %v2426 = vcvt.s32.f32 %v1914
        %v2427 = vcvt.s32.f32 %v1915
        %v2428 = vcvt.s32.f32 %v1916
        %v2429 = vcvt.s32.f32 %v1917
        %v2430 = vcvt.s32.f32 %v1918
        %v2431 = vcvt.s32.f32 %v1919
        %v2432 = vcvt.s32.f32 %v1920
        %v2433 = vcvt.s32.f32 %v1921
        %v2434 = vcvt.s32.f32 %v1922
        %v2435 = vcvt.s32.f32 %v1923
        %v2436 = vcvt.s32.f32 %v1924
        %v2437 = vcvt.s32.f32 %v1925
        %v2438 = vcvt.s32.f32 %v1926
        %v2439 = vcvt.s32.f32 %v1927
        %v2440 = vcvt.s32.f32 %v1928
        %v2441 = vcvt.s32.f32 %v1929
        %v2442 = vcvt.s32.f32 %v1930
        %v2443 = vcvt.s32.f32 %v1931
        %v2444 = vcvt.s32.f32 %v1932
        %v2445 = vcvt.s32.f32 %v1933
        %v2446 = vcvt.s32.f32 %v1934
        %v2447 = vcvt.s32.f32 %v1935
        %v2448 = vcvt.s32.f32 %v1936
        %v2449 = vcvt.s32.f32 %v1937
        %v2450 = vcvt.s32.f32 %v1938
        %v2451 = vcvt.s32.f32 %v1939
        %v2452 = vcvt.s32.f32 %v1940
        %v2453 = vcvt.s32.f32 %v1941
        %v2454 = vcvt.s32.f32 %v1942
        %v2455 = vcvt.s32.f32 %v1943
        %v2456 = vcvt.s32.f32 %v1944
        %v2457 = vcvt.s32.f32 %v1945
        %v2458 = vcvt.s32.f32 %v1946
        %v2459 = vcvt.s32.f32 %v1947
        %v2460 = vcvt.s32.f32 %v1948
        %v2461 = vcvt.s32.f32 %v1949
        %v2462 = vcvt.s32.f32 %v1950
        %v2463 = vcvt.s32.f32 %v1951
        %v2464 = vcvt.s32.f32 %v1952
        %v2465 = vcvt.s32.f32 %v1953
        %v2466 = vcvt.s32.f32 %v1954
        %v2467 = vcvt.s32.f32 %v1955
        %v2468 = vcvt.s32.f32 %v1956
        %v2469 = vcvt.s32.f32 %v1957
        %v2470 = vcvt.s32.f32 %v1958
        %v2471 = vcvt.s32.f32 %v1959
        %v2472 = vcvt.s32.f32 %v1960
        %v2473 = vcvt.s32.f32 %v1961
        %v2474 = vcvt.s32.f32 %v1962
        %v2475 = vcvt.s32.f32 %v1963
        %v2476 = vcvt.s32.f32 %v1964
        %v2477 = vcvt.s32.f32 %v1965
        %v2478 = vcvt.s32.f32 %v1966
        %v2479 = vcvt.s32.f32 %v1967
        %v2480 = vcvt.s32.f32 %v1968
        %v2481 = vcvt.s32.f32 %v1969
        %v2482 = vcvt.s32.f32 %v1970
        %v2483 = vcvt.s32.f32 %v1971
        %v2484 = vcvt.s32.f32 %v1972
        %v2485 = vcvt.s32.f32 %v1973
        %v2486 = vcvt.s32.f32 %v1974
        %v2487 = vcvt.s32.f32 %v1975
        %v2488 = vcvt.s32.f32 %v1976
        %v2489 = vcvt.s32.f32 %v1977
        %v2490 = vcvt.s32.f32 %v1978
        %v2491 = vcvt.s32.f32 %v1979
        %v2492 = vcvt.s32.f32 %v1980
        %v2493 = vcvt.s32.f32 %v1981
        %v2494 = vcvt.s32.f32 %v1982
        %v2495 = vcvt.s32.f32 %v1983
        %v2496 = vcvt.s32.f32 %v1984
        %v2497 = vcvt.s32.f32 %v1985
        %v2498 = vcvt.s32.f32 %v1986
        %v2499 = vcvt.s32.f32 %v1987
        %v2500 = vcvt.s32.f32 %v1988
        %v2501 = vcvt.s32.f32 %v1989
        %v2502 = vcvt.s32.f32 %v1990
        %v2503 = vcvt.s32.f32 %v1991
        %v2504 = vcvt.s32.f32 %v1992
        %v2505 = vcvt.s32.f32 %v1993
        %v2506 = vcvt.s32.f32 %v1994
        %v2507 = vcvt.s32.f32 %v1995
        %v2508 = vcvt.s32.f32 %v1996
        %v2509 = vcvt.s32.f32 %v1997
        %v2510 = vcvt.s32.f32 %v1998
        %v2511 = vcvt.s32.f32 %v1999
        %v2512 = vcvt.s32.f32 %v2000
        %v2513 = vcvt.s32.f32 %v2001
        %v2514 = vcvt.s32.f32 %v2002
        %v2515 = vcvt.s32.f32 %v2003
        %v2516 = vcvt.s32.f32 %v2004
        %v2517 = vcvt.s32.f32 %v2005
        %v2518 = vcvt.s32.f32 %v2006
        %v2519 = vcvt.s32.f32 %v2007
        %v2520 = vcvt.s32.f32 %v2008
        %v2521 = vcvt.s32.f32 %v2009
        %v2522 = vcvt.s32.f32 %v2010
        %v2523 = vcvt.s32.f32 %v2011
        %v2524 = vcvt.s32.f32 %v2012
        %v2525 = vcvt.s32.f32 %v2013
        %v2526 = vcvt.s32.f32 %v2014
        %v2527 = vcvt.s32.f32 %v2015
        %v2528 = vcvt.s32.f32 %v2016
        %v2529 = vcvt.s32.f32 %v2017
        %v2530 = vcvt.s32.f32 %v2018
        %v2531 = vcvt.s32.f32 %v2019
        %v2532 = vcvt.s32.f32 %v2020
        %v2533 = vcvt.s32.f32 %v2021
        %v2534 = vcvt.s32.f32 %v2022
        %v2535 = vcvt.s32.f32 %v2023
        %v2536 = vcvt.s32.f32 %v2024
        %v2537 = vcvt.s32.f32 %v2025
        %v2538 = vcvt.s32.f32 %v2026
        %v2539 = vcvt.s32.f32 %v2027
        %v2540 = vcvt.s32.f32 %v2028
        %v2541 = vcvt.s32.f32 %v2029
        %v2542 = vcvt.s32.f32 %v2030
        %v2543 = vcvt.s32.f32 %v2031
        %v2544 = vcvt.s32.f32 %v2032
        %v2545 = vcvt.s32.f32 %v2033
        %v2546 = vcvt.s32.f32 %v2034
        %v2547 = vcvt.s32.f32 %v2035
        %v2548 = vcvt.s32.f32 %v2036
        %v2549 = vcvt.s32.f32 %v2037
        %v2550 = vcvt.s32.f32 %v2038
        %v2551 = vcvt.s32.f32 %v2039
        %v2552 = vcvt.s32.f32 %v2040
        %v2553 = vcvt.s32.f32 %v2041
        %v2554 = vcvt.s32.f32 %v2042
        %v2555 = vcvt.s32.f32 %v2043
        %v2556 = vcvt.s32.f32 %v2044
        %v2557 = vcvt.s32.f32 %v2045
        %v2558 = vcvt.s32.f32 %v2046
        %v2559 = vcvt.s32.f32 %v2047
        %v2560 = vcvt.s32.f32 %v2048
        %v2561 = vcvt.s32.f32 %v2049
        %v2562 = vcvt.s32.f32 %v2050
        %v2563 = vcvt.s32.f32 %v2051
        %v2564 = vcvt.s32.f32 %v2052
        %v2565 = vcvt.s32.f32 %v2053
        %v2566 = vcvt.s32.f32 %v2054
        %v2567 = vcvt.s32.f32 %v2055
        %v2568 = vcvt.s32.f32 %v2056
        %v2569 = vcvt.s32.f32 %v2057
        %v2570 = vcvt.s32.f32 %v2058
        %v2571 = vcvt.s32.f32 %v2059
        %v2572 = vcvt.s32.f32 %v2060
        %v2573 = vcvt.s32.f32 %v2061
        %v2574 = vcvt.s32.f32 %v2062
        %v2575 = vcvt.s32.f32 %v2063
        %v2576 = vcvt.s32.f32 %v2064
        %v2577 = vcvt.s32.f32 %v2065
        %v2578 = vcvt.s32.f32 %v2066
        %v2579 = vcvt.s32.f32 %v2067
        %v2580 = vcvt.s32.f32 %v2068
        %v2581 = vcvt.s32.f32 %v2069
        %v2582 = vcvt.s32.f32 %v2070
        %v2583 = vcvt.s32.f32 %v2071
        %v2584 = vcvt.s32.f32 %v2072
        %v2585 = vcvt.s32.f32 %v2073
        %v2586 = vcvt.s32.f32 %v2074
        %v2587 = vcvt.s32.f32 %v2075
        %v2588 = vcvt.s32.f32 %v2076
        %v2589 = vcvt.s32.f32 %v2077
        %v2590 = vcvt.s32.f32 %v2078
        %v2591 = vcvt.s32.f32 %v2079
        %v2592 = vcvt.s32.f32 %v2080
        %v2593 = vcvt.s32.f32 %v2081
        %v2594 = vcvt.s32.f32 %v2082
        %v2595 = vcvt.s32.f32 %v2083
        %v2596 = vcvt.s32.f32 %v2084
        %v2597 = vcvt.s32.f32 %v2085
        %v2598 = vcvt.s32.f32 %v2086
        %v2599 = vcvt.s32.f32 %v2087
        %v2600 = vcvt.s32.f32 %v2088
        %v2601 = vcvt.s32.f32 %v2089
        %v2602 = vcvt.s32.f32 %v2090
        %v2603 = vcvt.s32.f32 %v2091
        %v2604 = vcvt.s32.f32 %v2092
        %v2605 = vcvt.s32.f32 %v2093
        %v2606 = vcvt.s32.f32 %v2094
        %v2607 = vcvt.s32.f32 %v2095
        %v2608 = vcvt.s32.f32 %v2096
        %v2609 = vcvt.s32.f32 %v2097
        %v2610 = vcvt.s32.f32 %v2098
        %v2611 = vcvt.s32.f32 %v2099
        %v2612 = vcvt.s32.f32 %v2100
        %v2613 = vcvt.s32.f32 %v2101
        %v2614 = vcvt.s32.f32 %v2102
        %v2615 = vcvt.s32.f32 %v2103
        %v2616 = vcvt.s32.f32 %v2104
        %v2617 = vcvt.s32.f32 %v2105
        %v2618 = vcvt.s32.f32 %v2106
        %v2619 = vcvt.s32.f32 %v2107
        %v2620 = vcvt.s32.f32 %v2108
        %v2621 = vcvt.s32.f32 %v2109
        %v2622 = vcvt.s32.f32 %v2110
        %v2623 = vcvt.s32.f32 %v2111
        %v2624 = vcvt.s32.f32 %v2112
        %v2625 = vcvt.s32.f32 %v2113
        %v2626 = vcvt.s32.f32 %v2114
        %v2627 = vcvt.s32.f32 %v2115
        %v2628 = vcvt.s32.f32 %v2116
        %v2629 = vcvt.s32.f32 %v2117
        %v2630 = vcvt.s32.f32 %v2118
        %v2631 = vcvt.s32.f32 %v2119
        %v2632 = vcvt.s32.f32 %v2120
        %v2633 = vcvt.s32.f32 %v2121
        %v2634 = vcvt.s32.f32 %v2122
        %v2635 = vcvt.s32.f32 %v2123
        %v2636 = vcvt.s32.f32 %v2124
        %v2637 = vcvt.s32.f32 %v2125
        %v2638 = vcvt.s32.f32 %v2126
        %v2639 = vcvt.s32.f32 %v2127
        %v2640 = vcvt.s32.f32 %v2128
        %v2641 = vcvt.s32.f32 %v2129
        %v2642 = vcvt.s32.f32 %v2130
        %v2643 = vcvt.s32.f32 %v2131
        %v2644 = vcvt.s32.f32 %v2132
        %v2645 = vcvt.s32.f32 %v2133
        %v2646 = vcvt.s32.f32 %v2134
        %v2647 = vcvt.s32.f32 %v2135
        %v2648 = vcvt.s32.f32 %v2136
        %v2649 = vcvt.s32.f32 %v2137
        %v2650 = vcvt.s32.f32 %v2138
        %v2651 = vcvt.s32.f32 %v2139
        %v2652 = vcvt.s32.f32 %v2140
        %v2653 = vcvt.s32.f32 %v2141
        %v2654 = vcvt.s32.f32 %v2142
        %v2655 = vcvt.s32.f32 %v2143
        %v2656 = vcvt.s32.f32 %v2144
        %v2657 = vcvt.s32.f32 %v2145
        %v2658 = vcvt.s32.f32 %v2146
        %v2659 = vcvt.s32.f32 %v2147
        %v2660 = vcvt.s32.f32 %v2148
        %v2661 = vcvt.s32.f32 %v2149
        %v2662 = vcvt.s32.f32 %v2150
        %v2663 = vcvt.s32.f32 %v2151
        %v2664 = vcvt.s32.f32 %v2152
        %v2665 = vcvt.s32.f32 %v2153
        %v2666 = vcvt.s32.f32 %v2154
        %v2667 = vcvt.s32.f32 %v2155
        %v2668 = vcvt.s32.f32 %v2156
        %v2669 = vcvt.s32.f32 %v2157
        %v2670 = vcvt.s32.f32 %v2158
        %v2671 = vcvt.s32.f32 %v2159
        %v2672 = vcvt.s32.f32 %v2160
        %v2673 = vcvt.s32.f32 %v2161
        %v2674 = vcvt.s32.f32 %v2162
        %v2675 = vcvt.s32.f32 %v2163
        %v2676 = vcvt.s32.f32 %v2164
        %v2677 = vcvt.s32.f32 %v2165
        %v2678 = vcvt.s32.f32 %v2166
        %v2679 = vcvt.s32.f32 %v2167
        %v2680 = vcvt.s32.f32 %v2168
        %v2681 = vcvt.s32.f32 %v2169
        %v2682 = vcvt.s32.f32 %v2170
        %v2683 = vcvt.s32.f32 %v2171
        %v2684 = vcvt.s32.f32 %v2172
        %v2685 = vcvt.s32.f32 %v2173
        %v2686 = vcvt.s32.f32 %v2174
        %v2687 = vcvt.s32.f32 %v2175
        %v2688 = vcvt.s32.f32 %v2176
        %v2689 = vcvt.s32.f32 %v2177
        %v2690 = vcvt.s32.f32 %v2178
        %v2691 = vcvt.s32.f32 %v2179
        %v2692 = vcvt.s32.f32 %v2180
        %v2693 = vcvt.s32.f32 %v2181
        %v2694 = vcvt.s32.f32 %v2182
        %v2695 = vcvt.s32.f32 %v2183
        %v2696 = vcvt.s32.f32 %v2184
        %v2697 = vcvt.s32.f32 %v2185
        %v2698 = vcvt.s32.f32 %v2186
        %v2699 = vcvt.s32.f32 %v2187
        %v2700 = vcvt.s32.f32 %v2188
        %v2701 = vcvt.s32.f32 %v2189
        %v2702 = vcvt.s32.f32 %v2190
        %v2703 = vcvt.s32.f32 %v2191
        %v2704 = vcvt.s32.f32 %v2192
        %v2705 = vcvt.s32.f32 %v2193
        %v2706 = vcvt.s32.f32 %v2194
        %v2707 = vcvt.s32.f32 %v2195
        %v2708 = vcvt.s32.f32 %v2196
        %v2709 = vcvt.s32.f32 %v2197
        %v2710 = vcvt.s32.f32 %v2198
        %v2711 = vcvt.s32.f32 %v2199
        %v2712 = vcvt.s32.f32 %v2200
        %v2713 = vcvt.s32.f32 %v2201
        %v2714 = vcvt.s32.f32 %v2202
        %v2715 = vcvt.s32.f32 %v2203
        %v2716 = vcvt.s32.f32 %v2204
        %v2717 = vcvt.s32.f32 %v2205
        %v2718 = vcvt.s32.f32 %v2206
        %v2719 = vcvt.s32.f32 %v2207
        %v2720 = vcvt.s32.f32 %v2208
        %v2721 = vcvt.s32.f32 %v2209
        %v2722 = vcvt.s32.f32 %v2210
        %v2723 = vcvt.s32.f32 %v2211
        %v2724 = vcvt.s32.f32 %v2212
        %v2725 = vcvt.s32.f32 %v2213
        %v2726 = vcvt.s32.f32 %v2214
        %v2727 = vcvt.s32.f32 %v2215
        %v2728 = vcvt.s32.f32 %v2216
        %v2729 = vcvt.s32.f32 %v2217
        %v2730 = vcvt.s32.f32 %v2218
        %v2731 = vcvt.s32.f32 %v2219
        %v2732 = vcvt.s32.f32 %v2220
        %v2733 = vcvt.s32.f32 %v2221
        %v2734 = vcvt.s32.f32 %v2222
        %v2735 = vcvt.s32.f32 %v2223
        %v2736 = vcvt.s32.f32 %v2224
        %v2737 = vcvt.s32.f32 %v2225
        %v2738 = vcvt.s32.f32 %v2226
        %v2739 = vcvt.s32.f32 %v2227
        %v2740 = vcvt.s32.f32 %v2228
        %v2741 = vcvt.s32.f32 %v2229
        %v2742 = vcvt.s32.f32 %v2230
        %v2743 = vcvt.s32.f32 %v2231
        %v2744 = vcvt.s32.f32 %v2232
        %v2745 = vcvt.s32.f32 %v2233
        %v2746 = vcvt.s32.f32 %v2234
        %v2747 = vcvt.s32.f32 %v2235
        %v2748 = vcvt.s32.f32 %v2236
        %v2749 = vcvt.s32.f32 %v2237
        %v2750 = vcvt.s32.f32 %v2238
        %v2751 = vcvt.s32.f32 %v2239
        %v2752 = vcvt.s32.f32 %v2240
        %v2753 = vcvt.s32.f32 %v2241
        %v2754 = vcvt.s32.f32 %v2242
        %v2755 = vcvt.s32.f32 %v2243
        %v2756 = vcvt.s32.f32 %v2244
        %v2757 = vcvt.s32.f32 %v2245
        %v2758 = vcvt.s32.f32 %v2246
        %v2759 = vcvt.s32.f32 %v2247
        %v2760 = vcvt.s32.f32 %v2248
        %v2761 = vcvt.s32.f32 %v2249
        %v2762 = vcvt.s32.f32 %v2250
        %v2763 = vcvt.s32.f32 %v2251
        %v2764 = vcvt.s32.f32 %v2252
        %v2765 = vcvt.s32.f32 %v2253
        %v2766 = vcvt.s32.f32 %v2254
        %v2767 = vcvt.s32.f32 %v2255
        %v2768 = vcvt.s32.f32 %v2256
        %v2769 = vcvt.s32.f32 %v2257
        %v2770 = vcvt.s32.f32 %v2258
        %v2771 = vcvt.s32.f32 %v2259
        %v2772 = vcvt.s32.f32 %v2260
        %v2773 = vcvt.s32.f32 %v2261
        %v2774 = vcvt.s32.f32 %v2262
        %v2775 = vcvt.s32.f32 %v2263
        %v2776 = vcvt.s32.f32 %v2264
        %v2777 = vcvt.s32.f32 %v2265
        %v2778 = vcvt.s32.f32 %v2266
        %v2779 = vcvt.s32.f32 %v2267
        %v2780 = vcvt.s32.f32 %v2268
        %v2781 = vcvt.s32.f32 %v2269
        %v2782 = vcvt.s32.f32 %v2270
        %v2783 = vcvt.s32.f32 %v2271
        %v2784 = vcvt.s32.f32 %v2272
        %v2785 = vcvt.s32.f32 %v2273
        %v2786 = vcvt.s32.f32 %v2274
        %v2787 = vcvt.s32.f32 %v2275
        %v2788 = vcvt.s32.f32 %v2276
        %v2789 = vcvt.s32.f32 %v2277
        %v2790 = vcvt.s32.f32 %v2278
        %v2791 = vcvt.s32.f32 %v2279
        %v2792 = vcvt.s32.f32 %v2280
        %v2793 = vcvt.s32.f32 %v2281
        %v2794 = vcvt.s32.f32 %v2282
        %v2795 = vcvt.s32.f32 %v2283
        %v2796 = vcvt.s32.f32 %v2284
        %v2797 = vcvt.s32.f32 %v2285
        %v2798 = vcvt.s32.f32 %v2286
        %v2799 = vcvt.s32.f32 %v2287
        %v2800 = vcvt.s32.f32 %v2288
        %v2801 = vcvt.s32.f32 %v2289
        %v2802 = vcvt.s32.f32 %v2290
        %v2803 = vcvt.s32.f32 %v2291
        %v2804 = vcvt.s32.f32 %v2292
        %v2805 = vcvt.s32.f32 %v2293
        %v2806 = vcvt.s32.f32 %v2294
        %v2807 = vcvt.s32.f32 %v2295
        %v2808 = vcvt.s32.f32 %v2296
        %v2809 = vcvt.s32.f32 %v2297
        %v2810 = vcvt.s32.f32 %v2298
        %v2811 = vcvt.s32.f32 %v2299
        %v2812 = vcvt.s32.f32 %v2300
        %v2813 = vcvt.s32.f32 %v2301
        %v2814 = vcvt.s32.f32 %v2302
        %v2815 = vcvt.s32.f32 %v2303
        %v2816 = vcvt.s32.f32 %v2304
        %v2817 = vcvt.s32.f32 %v2305
        %v2818 = vcvt.s32.f32 %v2306
        %v2819 = vcvt.s32.f32 %v2307
        %v2820 = vcvt.s32.f32 %v2308
        %v2821 = vcvt.s32.f32 %v2309
        %v2822 = vcvt.s32.f32 %v2310
        %v2823 = vcvt.s32.f32 %v2311
        %v2824 = vcvt.s32.f32 %v2312
        %v2825 = vcvt.s32.f32 %v2313
        %v2826 = vcvt.s32.f32 %v2314
        %v2827 = vcvt.s32.f32 %v2315
        %v2828 = vcvt.s32.f32 %v2316
        %v2829 = vcvt.s32.f32 %v2317
        %v2830 = vcvt.s32.f32 %v2318
        %v2831 = vcvt.s32.f32 %v2319
        %v2832 = vcvt.s32.f32 %v2320
        %v2833 = vcvt.s32.f32 %v2321
        %v2834 = vcvt.s32.f32 %v2322
        %v2835 = vcvt.s32.f32 %v2323
        %v2836 = vcvt.s32.f32 %v2324
        %v2837 = vcvt.s32.f32 %v2325
        %v2838 = vcvt.s32.f32 %v2326
        %v2839 = vcvt.s32.f32 %v2327
        %v2840 = vcvt.s32.f32 %v2328
        %v2841 = vcvt.s32.f32 %v2329
        %v2842 = vcvt.s32.f32 %v2330
        %v2843 = vcvt.s32.f32 %v2331
        %v2844 = vcvt.s32.f32 %v2332
        %v2845 = vcvt.s32.f32 %v2333
        %v2846 = vcvt.s32.f32 %v2334
        %v2847 = vcvt.s32.f32 %v2335
        %v2848 = vcvt.s32.f32 %v2336
        %v2849 = vcvt.s32.f32 %v2337
        %v2850 = vcvt.s32.f32 %v2338
        %v2851 = vcvt.s32.f32 %v2339
        %v2852 = vcvt.s32.f32 %v2340
        %v2853 = vcvt.s32.f32 %v2341
        %v2854 = vcvt.s32.f32 %v2342
        %v2855 = vcvt.s32.f32 %v2343
        %v2856 = vcvt.s32.f32 %v2344
        %v2857 = vcvt.s32.f32 %v2345
        %v2858 = vcvt.s32.f32 %v2346
        %v2859 = vcvt.s32.f32 %v2347
        %v2860 = vcvt.s32.f32 %v2348
        %v2861 = vcvt.s32.f32 %v2349
        %v2862 = vcvt.s32.f32 %v2350
        %v2863 = vcvt.s32.f32 %v2351
        %v2864 = vcvt.s32.f32 %v2352
        %v2865 = vcvt.s32.f32 %v2353
        %v2866 = vcvt.s32.f32 %v2354
        %v2867 = vcvt.s32.f32 %v2355
        %v2868 = vcvt.s32.f32 %v2356
        %v2869 = vcvt.s32.f32 %v2357
        %v2870 = vcvt.s32.f32 %v2358
        %v2871 = vcvt.s32.f32 %v2359
        %v2872 = vcvt.s32.f32 %v2360
        %v2873 = vcvt.s32.f32 %v2361
        %v2874 = vcvt.s32.f32 %v2362
        %v2875 = vcvt.s32.f32 %v2363
        %v2876 = vcvt.s32.f32 %v2364
        %v2877 = vcvt.s32.f32 %v2365
        %v2878 = vcvt.s32.f32 %v2366
        %v2879 = vcvt.s32.f32 %v2367
        %v2880 = vcvt.s32.f32 %v2368
        %v2881 = vcvt.s32.f32 %v2369
        %v2882 = vcvt.s32.f32 %v2370
        %v2883 = vcvt.s32.f32 %v2371
        %v2884 = vcvt.s32.f32 %v2372
        %v2885 = vcvt.s32.f32 %v2373
        %v2886 = vcvt.s32.f32 %v2374
        %v2887 = vcvt.s32.f32 %v2375
        %v2888 = vcvt.s32.f32 %v2376
        %v2889 = vcvt.s32.f32 %v2377
        %v2890 = vcvt.s32.f32 %v2378
        %v2891 = vcvt.s32.f32 %v2379
        %v2892 = vcvt.s32.f32 %v2380
        %v2893 = vcvt.s32.f32 %v2381
        %v2894 = vcvt.s32.f32 %v2382
        %v2895 = vcvt.s32.f32 %v2383
        %v2896 = vcvt.s32.f32 %v2384
        %v2897 = vcvt.s32.f32 %v2385
        %v2898 = vcvt.s32.f32 %v2386
        %v2899 = vcvt.s32.f32 %v2387
        %v2900 = vcvt.s32.f32 %v2388
        %v2901 = vcvt.s32.f32 %v2389
        %v2902 = vcvt.s32.f32 %v2390
        %v2903 = vcvt.s32.f32 %v2391
        %v2904 = vcvt.s32.f32 %v2392
        %v2905 = vcvt.s32.f32 %v2393
        %v2906 = vcvt.s32.f32 %v2394
        %v2907 = vcvt.s32.f32 %v2395
        %v2908 = vcvt.s32.f32 %v2396
        %v2909 = vcvt.s32.f32 %v2397
        %v2910 = vcvt.s32.f32 %v2398
        %v2911 = vcvt.s32.f32 %v2399
        %v2912 = vcvt.s32.f32 %v2400
        %v2913 = vcvt.s32.f32 %v2401
        %v2914 = vcvt.s32.f32 %v2402
        %v2915 = vcvt.s32.f32 %v2403
        %v2916 = vcvt.s32.f32 %v2404
        %v2917 = vcvt.s32.f32 %v2405
        %v2918 = vcvt.s32.f32 %v2406
        %v2919 = vcvt.s32.f32 %v2407
        %v2920 = vcvt.s32.f32 %v2408
        %v2921 = vcvt.s32.f32 %v2409
        %v2922 = vcvt.s32.f32 %v2410
        %v2923 = vld [vmem:[#allocation2] sm:$0xff]
        %v2924 = vld [vmem:[#allocation2 + $0x8] sm:$0xff]
        %v2925 = vadd.f32 %v2411, %v2413
        %v2926 = vadd.f32 %v2925, %v2415
        %v2927 = vadd.f32 %v2926, %v2417
        %v2928 = vadd.f32 %v2927, %v2419
        %v2929 = vadd.f32 %v2928, %v2421
        %v2930 = vadd.f32 %v2929, %v2423
        %v2931 = vadd.f32 %v2930, %v2425
        %v2932 = vadd.f32 %v2931, %v2427
        %v2933 = vadd.f32 %v2932, %v2429
        %v2934 = vadd.f32 %v2933, %v2431
        %v2935 = vadd.f32 %v2934, %v2433
        %v2936 = vadd.f32 %v2935, %v2435
        %v2937 = vadd.f32 %v2936, %v2437
        %v2938 = vadd.f32 %v2937, %v2439
        %v2939 = vadd.f32 %v2938, %v2441
        %v2940 = vadd.f32 %v2939, %v2443
        %v2941 = vadd.f32 %v2940, %v2445
        %v2942 = vadd.f32 %v2941, %v2447
        %v2943 = vadd.f32 %v2942, %v2449
        %v2944 = vadd.f32 %v2943, %v2451
        %v2945 = vadd.f32 %v2944, %v2453
        %v2946 = vadd.f32 %v2945, %v2455
        %v2947 = vadd.f32 %v2946, %v2457
        %v2948 = vadd.f32 %v2947, %v2459
        %v2949 = vadd.f32 %v2948, %v2461
        %v2950 = vadd.f32 %v2949, %v2463
        %v2951 = vadd.f32 %v2950, %v2465
        %v2952 = vadd.f32 %v2951, %v2467
        %v2953 = vadd.f32 %v2952, %v2469
        %v2954 = vadd.f32 %v2953, %v2471
        %v2955 = vadd.f32 %v2954, %v2473
        %v2956 = vrot.slane %v2955, 4
        %v2957 = vadd.f32 %v2955, %v2956
        %v2958 = vrot.slane %v2957, 2
        %v2959 = vadd.f32 %v2957, %v2958
        %v2960 = vrot.slane %v2959, 1
        %v2961 = vadd.f32 %v2959, %v2960
        %v2962 = vadd.f32 %v2412, %v2414
        %v2963 = vadd.f32 %v2962, %v2416
        %v2964 = vadd.f32 %v2963, %v2418
        %v2965 = vadd.f32 %v2964, %v2420
        %v2966 = vadd.f32 %v2965, %v2422
        %v2967 = vadd.f32 %v2966, %v2424
        %v2968 = vadd.f32 %v2967, %v2426
        %v2969 = vadd.f32 %v2968, %v2428
        %v2970 = vadd.f32 %v2969, %v2430
        %v2971 = vadd.f32 %v2970, %v2432
        %v2972 = vadd.f32 %v2971, %v2434
        %v2973 = vadd.f32 %v2972, %v2436
        %v2974 = vadd.f32 %v2973, %v2438
        %v2975 = vadd.f32 %v2974, %v2440
        %v2976 = vadd.f32 %v2975, %v2442
        %v2977 = vadd.f32 %v2976, %v2444
        %v2978 = vadd.f32 %v2977, %v2446
        %v2979 = vadd.f32 %v2978, %v2448
        %v2980 = vadd.f32 %v2979, %v2450
        %v2981 = vadd.f32 %v2980, %v2452
        %v2982 = vadd.f32 %v2981, %v2454
        %v2983 = vadd.f32 %v2982, %v2456
        %v2984 = vadd.f32 %v2983, %v2458
        %v2985 = vadd.f32 %v2984, %v2460
        %v2986 = vadd.f32 %v2985, %v2462
        %v2987 = vadd.f32 %v2986, %v2464
        %v2988 = vadd.f32 %v2987, %v2466
        %v2989 = vadd.f32 %v2988, %v2468
        %v2990 = vadd.f32 %v2989, %v2470
        %v2991 = vadd.f32 %v2990, %v2472
        %v2992 = vadd.f32 %v2991, %v2474
        %v2993 = vrot.slane %v2992, 4
        %v2994 = vadd.f32 %v2992, %v2993
        %v2995 = vrot.slane %v2994, 2
        %v2996 = vadd.f32 %v2994, %v2995
        %v2997 = vrot.slane %v2996, 1
        %v2998 = vadd.f32 %v2996, %v2997
        %v2999 = vadd.f32 %v2475, %v2477
        %v3000 = vadd.f32 %v2999, %v2479
        %v3001 = vadd.f32 %v3000, %v2481
        %v3002 = vadd.f32 %v3001, %v2483
        %v3003 = vadd.f32 %v3002, %v2485
        %v3004 = vadd.f32 %v3003, %v2487
        %v3005 = vadd.f32 %v3004, %v2489
        %v3006 = vadd.f32 %v3005, %v2491
        %v3007 = vadd.f32 %v3006, %v2493
        %v3008 = vadd.f32 %v3007, %v2495
        %v3009 = vadd.f32 %v3008, %v2497
        %v3010 = vadd.f32 %v3009, %v2499
        %v3011 = vadd.f32 %v3010, %v2501
        %v3012 = vadd.f32 %v3011, %v2503
        %v3013 = vadd.f32 %v3012, %v2505
        %v3014 = vadd.f32 %v3013, %v2507
        %v3015 = vadd.f32 %v3014, %v2509
        %v3016 = vadd.f32 %v3015, %v2511
        %v3017 = vadd.f32 %v3016, %v2513
        %v3018 = vadd.f32 %v3017, %v2515
        %v3019 = vadd.f32 %v3018, %v2517
        %v3020 = vadd.f32 %v3019, %v2519
        %v3021 = vadd.f32 %v3020, %v2521
        %v3022 = vadd.f32 %v3021, %v2523
        %v3023 = vadd.f32 %v3022, %v2525
        %v3024 = vadd.f32 %v3023, %v2527
        %v3025 = vadd.f32 %v3024, %v2529
        %v3026 = vadd.f32 %v3025, %v2531
        %v3027 = vadd.f32 %v3026, %v2533
        %v3028 = vadd.f32 %v3027, %v2535
        %v3029 = vadd.f32 %v3028, %v2537
        %v3030 = vrot.slane %v3029, 4
        %v3031 = vadd.f32 %v3029, %v3030
        %v3032 = vrot.slane %v3031, 2
        %v3033 = vadd.f32 %v3031, %v3032
        %v3034 = vrot.slane %v3033, 1
        %v3035 = vadd.f32 %v3033, %v3034
        %v3036 = vadd.f32 %v2476, %v2478
        %v3037 = vadd.f32 %v3036, %v2480
        %v3038 = vadd.f32 %v3037, %v2482
        %v3039 = vadd.f32 %v3038, %v2484
        %v3040 = vadd.f32 %v3039, %v2486
        %v3041 = vadd.f32 %v3040, %v2488
        %v3042 = vadd.f32 %v3041, %v2490
        %v3043 = vadd.f32 %v3042, %v2492
        %v3044 = vadd.f32 %v3043, %v2494
        %v3045 = vadd.f32 %v3044, %v2496
        %v3046 = vadd.f32 %v3045, %v2498
        %v3047 = vadd.f32 %v3046, %v2500
        %v3048 = vadd.f32 %v3047, %v2502
        %v3049 = vadd.f32 %v3048, %v2504
        %v3050 = vadd.f32 %v3049, %v2506
        %v3051 = vadd.f32 %v3050, %v2508
        %v3052 = vadd.f32 %v3051, %v2510
        %v3053 = vadd.f32 %v3052, %v2512
        %v3054 = vadd.f32 %v3053, %v2514
        %v3055 = vadd.f32 %v3054, %v2516
        %v3056 = vadd.f32 %v3055, %v2518
        %v3057 = vadd.f32 %v3056, %v2520
        %v3058 = vadd.f32 %v3057, %v2522
        %v3059 = vadd.f32 %v3058, %v2524
        %v3060 = vadd.f32 %v3059, %v2526
        %v3061 = vadd.f32 %v3060, %v2528
        %v3062 = vadd.f32 %v3061, %v2530
        %v3063 = vadd.f32 %v3062, %v2532
        %v3064 = vadd.f32 %v3063, %v2534
        %v3065 = vadd.f32 %v3064, %v2536
        %v3066 = vadd.f32 %v3065, %v2538
        %v3067 = vrot.slane %v3066, 4
        %v3068 = vadd.f32 %v3066, %v3067
        %v3069 = vrot.slane %v3068, 2
        %v3070 = vadd.f32 %v3068, %v3069
        %v3071 = vrot.slane %v3070, 1
        %v3072 = vadd.f32 %v3070, %v3071
        %v3073 = vadd.f32 %v2539, %v2541
        %v3074 = vadd.f32 %v3073, %v2543
        %v3075 = vadd.f32 %v3074, %v2545
        %v3076 = vadd.f32 %v3075, %v2547
        %v3077 = vadd.f32 %v3076, %v2549
        %v3078 = vadd.f32 %v3077, %v2551
        %v3079 = vadd.f32 %v3078, %v2553
        %v3080 = vadd.f32 %v3079, %v2555
        %v3081 = vadd.f32 %v3080, %v2557
        %v3082 = vadd.f32 %v3081, %v2559
        %v3083 = vadd.f32 %v3082, %v2561
        %v3084 = vadd.f32 %v3083, %v2563
        %v3085 = vadd.f32 %v3084, %v2565
        %v3086 = vadd.f32 %v3085, %v2567
        %v3087 = vadd.f32 %v3086, %v2569
        %v3088 = vadd.f32 %v3087, %v2571
        %v3089 = vadd.f32 %v3088, %v2573
        %v3090 = vadd.f32 %v3089, %v2575
        %v3091 = vadd.f32 %v3090, %v2577
        %v3092 = vadd.f32 %v3091, %v2579
        %v3093 = vadd.f32 %v3092, %v2581
        %v3094 = vadd.f32 %v3093, %v2583
        %v3095 = vadd.f32 %v3094, %v2585
        %v3096 = vadd.f32 %v3095, %v2587
        %v3097 = vadd.f32 %v3096, %v2589
        %v3098 = vadd.f32 %v3097, %v2591
        %v3099 = vadd.f32 %v3098, %v2593
        %v3100 = vadd.f32 %v3099, %v2595
        %v3101 = vadd.f32 %v3100, %v2597
        %v3102 = vadd.f32 %v3101, %v2599
        %v3103 = vadd.f32 %v3102, %v2601
        %v3104 = vrot.slane %v3103, 4
        %v3105 = vadd.f32 %v3103, %v3104
        %v3106 = vrot.slane %v3105, 2
        %v3107 = vadd.f32 %v3105, %v3106
        %v3108 = vrot.slane %v3107, 1
        %v3109 = vadd.f32 %v3107, %v3108
        %v3110 = vadd.f32 %v2540, %v2542
        %v3111 = vadd.f32 %v3110, %v2544
        %v3112 = vadd.f32 %v3111, %v2546
        %v3113 = vadd.f32 %v3112, %v2548
        %v3114 = vadd.f32 %v3113, %v2550
        %v3115 = vadd.f32 %v3114, %v2552
        %v3116 = vadd.f32 %v3115, %v2554
        %v3117 = vadd.f32 %v3116, %v2556
        %v3118 = vadd.f32 %v3117, %v2558
        %v3119 = vadd.f32 %v3118, %v2560
        %v3120 = vadd.f32 %v3119, %v2562
        %v3121 = vadd.f32 %v3120, %v2564
        %v3122 = vadd.f32 %v3121, %v2566
        %v3123 = vadd.f32 %v3122, %v2568
        %v3124 = vadd.f32 %v3123, %v2570
        %v3125 = vadd.f32 %v3124, %v2572
        %v3126 = vadd.f32 %v3125, %v2574
        %v3127 = vadd.f32 %v3126, %v2576
        %v3128 = vadd.f32 %v3127, %v2578
        %v3129 = vadd.f32 %v3128, %v2580
        %v3130 = vadd.f32 %v3129, %v2582
        %v3131 = vadd.f32 %v3130, %v2584
        %v3132 = vadd.f32 %v3131, %v2586
        %v3133 = vadd.f32 %v3132, %v2588
        %v3134 = vadd.f32 %v3133, %v2590
        %v3135 = vadd.f32 %v3134, %v2592
        %v3136 = vadd.f32 %v3135, %v2594
        %v3137 = vadd.f32 %v3136, %v2596
        %v3138 = vadd.f32 %v3137, %v2598
        %v3139 = vadd.f32 %v3138, %v2600
        %v3140 = vadd.f32 %v3139, %v2602
        %v3141 = vrot.slane %v3140, 4
        %v3142 = vadd.f32 %v3140, %v3141
        %v3143 = vrot.slane %v3142, 2
        %v3144 = vadd.f32 %v3142, %v3143
        %v3145 = vrot.slane %v3144, 1
        %v3146 = vadd.f32 %v3144, %v3145
        %v3147 = vadd.f32 %v2603, %v2605
        %v3148 = vadd.f32 %v3147, %v2607
        %v3149 = vadd.f32 %v3148, %v2609
        %v3150 = vadd.f32 %v3149, %v2611
        %v3151 = vadd.f32 %v3150, %v2613
        %v3152 = vadd.f32 %v3151, %v2615
        %v3153 = vadd.f32 %v3152, %v2617
        %v3154 = vadd.f32 %v3153, %v2619
        %v3155 = vadd.f32 %v3154, %v2621
        %v3156 = vadd.f32 %v3155, %v2623
        %v3157 = vadd.f32 %v3156, %v2625
        %v3158 = vadd.f32 %v3157, %v2627
        %v3159 = vadd.f32 %v3158, %v2629
        %v3160 = vadd.f32 %v3159, %v2631
        %v3161 = vadd.f32 %v3160, %v2633
        %v3162 = vadd.f32 %v3161, %v2635
        %v3163 = vadd.f32 %v3162, %v2637
        %v3164 = vadd.f32 %v3163, %v2639
        %v3165 = vadd.f32 %v3164, %v2641
        %v3166 = vadd.f32 %v3165, %v2643
        %v3167 = vadd.f32 %v3166, %v2645
        %v3168 = vadd.f32 %v3167, %v2647
        %v3169 = vadd.f32 %v3168, %v2649
        %v3170 = vadd.f32 %v3169, %v2651
        %v3171 = vadd.f32 %v3170, %v2653
        %v3172 = vadd.f32 %v3171, %v2655
        %v3173 = vadd.f32 %v3172, %v2657
        %v3174 = vadd.f32 %v3173, %v2659
        %v3175 = vadd.f32 %v3174, %v2661
        %v3176 = vadd.f32 %v3175, %v2663
        %v3177 = vadd.f32 %v3176, %v2665
        %v3178 = vrot.slane %v3177, 4
        %v3179 = vadd.f32 %v3177, %v3178
        %v3180 = vrot.slane %v3179, 2
        %v3181 = vadd.f32 %v3179, %v3180
        %v3182 = vrot.slane %v3181, 1
        %v3183 = vadd.f32 %v3181, %v3182
        %v3184 = vadd.f32 %v2604, %v2606
        %v3185 = vadd.f32 %v3184, %v2608
        %v3186 = vadd.f32 %v3185, %v2610
        %v3187 = vadd.f32 %v3186, %v2612
        %v3188 = vadd.f32 %v3187, %v2614
        %v3189 = vadd.f32 %v3188, %v2616
        %v3190 = vadd.f32 %v3189, %v2618
        %v3191 = vadd.f32 %v3190, %v2620
        %v3192 = vadd.f32 %v3191, %v2622
        %v3193 = vadd.f32 %v3192, %v2624
        %v3194 = vadd.f32 %v3193, %v2626
        %v3195 = vadd.f32 %v3194, %v2628
        %v3196 = vadd.f32 %v3195, %v2630
        %v3197 = vadd.f32 %v3196, %v2632
        %v3198 = vadd.f32 %v3197, %v2634
        %v3199 = vadd.f32 %v3198, %v2636
        %v3200 = vadd.f32 %v3199, %v2638
        %v3201 = vadd.f32 %v3200, %v2640
        %v3202 = vadd.f32 %v3201, %v2642
        %v3203 = vadd.f32 %v3202, %v2644
        %v3204 = vadd.f32 %v3203, %v2646
        %v3205 = vadd.f32 %v3204, %v2648
        %v3206 = vadd.f32 %v3205, %v2650
        %v3207 = vadd.f32 %v3206, %v2652
        %v3208 = vadd.f32 %v3207, %v2654
        %v3209 = vadd.f32 %v3208, %v2656
        %v3210 = vadd.f32 %v3209, %v2658
        %v3211 = vadd.f32 %v3210, %v2660
        %v3212 = vadd.f32 %v3211, %v2662
        %v3213 = vadd.f32 %v3212, %v2664
        %v3214 = vadd.f32 %v3213, %v2666
        %v3215 = vrot.slane %v3214, 4
        %v3216 = vadd.f32 %v3214, %v3215
        %v3217 = vrot.slane %v3216, 2
        %v3218 = vadd.f32 %v3216, %v3217
        %v3219 = vrot.slane %v3218, 1
        %v3220 = vadd.f32 %v3218, %v3219
        %v3221 = vadd.f32 %v2667, %v2669
        %v3222 = vadd.f32 %v3221, %v2671
        %v3223 = vadd.f32 %v3222, %v2673
        %v3224 = vadd.f32 %v3223, %v2675
        %v3225 = vadd.f32 %v3224, %v2677
        %v3226 = vadd.f32 %v3225, %v2679
        %v3227 = vadd.f32 %v3226, %v2681
        %v3228 = vadd.f32 %v3227, %v2683
        %v3229 = vadd.f32 %v3228, %v2685
        %v3230 = vadd.f32 %v3229, %v2687
        %v3231 = vadd.f32 %v3230, %v2689
        %v3232 = vadd.f32 %v3231, %v2691
        %v3233 = vadd.f32 %v3232, %v2693
        %v3234 = vadd.f32 %v3233, %v2695
        %v3235 = vadd.f32 %v3234, %v2697
        %v3236 = vadd.f32 %v3235, %v2699
        %v3237 = vadd.f32 %v3236, %v2701
        %v3238 = vadd.f32 %v3237, %v2703
        %v3239 = vadd.f32 %v3238, %v2705
        %v3240 = vadd.f32 %v3239, %v2707
        %v3241 = vadd.f32 %v3240, %v2709
        %v3242 = vadd.f32 %v3241, %v2711
        %v3243 = vadd.f32 %v3242, %v2713
        %v3244 = vadd.f32 %v3243, %v2715
        %v3245 = vadd.f32 %v3244, %v2717
        %v3246 = vadd.f32 %v3245, %v2719
        %v3247 = vadd.f32 %v3246, %v2721
        %v3248 = vadd.f32 %v3247, %v2723
        %v3249 = vadd.f32 %v3248, %v2725
        %v3250 = vadd.f32 %v3249, %v2727
        %v3251 = vadd.f32 %v3250, %v2729
        %v3252 = vrot.slane %v3251, 4
        %v3253 = vadd.f32 %v3251, %v3252
        %v3254 = vrot.slane %v3253, 2
        %v3255 = vadd.f32 %v3253, %v3254
        %v3256 = vrot.slane %v3255, 1
        %v3257 = vadd.f32 %v3255, %v3256
        %v3258 = vadd.f32 %v2668, %v2670
        %v3259 = vadd.f32 %v3258, %v2672
        %v3260 = vadd.f32 %v3259, %v2674
        %v3261 = vadd.f32 %v3260, %v2676
        %v3262 = vadd.f32 %v3261, %v2678
        %v3263 = vadd.f32 %v3262, %v2680
        %v3264 = vadd.f32 %v3263, %v2682
        %v3265 = vadd.f32 %v3264, %v2684
        %v3266 = vadd.f32 %v3265, %v2686
        %v3267 = vadd.f32 %v3266, %v2688
        %v3268 = vadd.f32 %v3267, %v2690
        %v3269 = vadd.f32 %v3268, %v2692
        %v3270 = vadd.f32 %v3269, %v2694
        %v3271 = vadd.f32 %v3270, %v2696
        %v3272 = vadd.f32 %v3271, %v2698
        %v3273 = vadd.f32 %v3272, %v2700
        %v3274 = vadd.f32 %v3273, %v2702
        %v3275 = vadd.f32 %v3274, %v2704
        %v3276 = vadd.f32 %v3275, %v2706
        %v3277 = vadd.f32 %v3276, %v2708
        %v3278 = vadd.f32 %v3277, %v2710
        %v3279 = vadd.f32 %v3278, %v2712
        %v3280 = vadd.f32 %v3279, %v2714
        %v3281 = vadd.f32 %v3280, %v2716
        %v3282 = vadd.f32 %v3281, %v2718
        %v3283 = vadd.f32 %v3282, %v2720
        %v3284 = vadd.f32 %v3283, %v2722
        %v3285 = vadd.f32 %v3284, %v2724
        %v3286 = vadd.f32 %v3285, %v2726
        %v3287 = vadd.f32 %v3286, %v2728
        %v3288 = vadd.f32 %v3287, %v2730
        %v3289 = vrot.slane %v3288, 4
        %v3290 = vadd.f32 %v3288, %v3289
        %v3291 = vrot.slane %v3290, 2
        %v3292 = vadd.f32 %v3290, %v3291
        %v3293 = vrot.slane %v3292, 1
        %v3294 = vadd.f32 %v3292, %v3293
        %v3295 = vadd.f32 %v2731, %v2733
        %v3296 = vadd.f32 %v3295, %v2735
        %v3297 = vadd.f32 %v3296, %v2737
        %v3298 = vadd.f32 %v3297, %v2739
        %v3299 = vadd.f32 %v3298, %v2741
        %v3300 = vadd.f32 %v3299, %v2743
        %v3301 = vadd.f32 %v3300, %v2745
        %v3302 = vadd.f32 %v3301, %v2747
        %v3303 = vadd.f32 %v3302, %v2749
        %v3304 = vadd.f32 %v3303, %v2751
        %v3305 = vadd.f32 %v3304, %v2753
        %v3306 = vadd.f32 %v3305, %v2755
        %v3307 = vadd.f32 %v3306, %v2757
        %v3308 = vadd.f32 %v3307, %v2759
        %v3309 = vadd.f32 %v3308, %v2761
        %v3310 = vadd.f32 %v3309, %v2763
        %v3311 = vadd.f32 %v3310, %v2765
        %v3312 = vadd.f32 %v3311, %v2767
        %v3313 = vadd.f32 %v3312, %v2769
        %v3314 = vadd.f32 %v3313, %v2771
        %v3315 = vadd.f32 %v3314, %v2773
        %v3316 = vadd.f32 %v3315, %v2775
        %v3317 = vadd.f32 %v3316, %v2777
        %v3318 = vadd.f32 %v3317, %v2779
        %v3319 = vadd.f32 %v3318, %v2781
        %v3320 = vadd.f32 %v3319, %v2783
        %v3321 = vadd.f32 %v3320, %v2785
        %v3322 = vadd.f32 %v3321, %v2787
        %v3323 = vadd.f32 %v3322, %v2789
        %v3324 = vadd.f32 %v3323, %v2791
        %v3325 = vadd.f32 %v3324, %v2793
        %v3326 = vrot.slane %v3325, 4
        %v3327 = vadd.f32 %v3325, %v3326
        %v3328 = vrot.slane %v3327, 2
        %v3329 = vadd.f32 %v3327, %v3328
        %v3330 = vrot.slane %v3329, 1
        %v3331 = vadd.f32 %v3329, %v3330
        %v3332 = vadd.f32 %v2732, %v2734
        %v3333 = vadd.f32 %v3332, %v2736
        %v3334 = vadd.f32 %v3333, %v2738
        %v3335 = vadd.f32 %v3334, %v2740
        %v3336 = vadd.f32 %v3335, %v2742
        %v3337 = vadd.f32 %v3336, %v2744
        %v3338 = vadd.f32 %v3337, %v2746
        %v3339 = vadd.f32 %v3338, %v2748
        %v3340 = vadd.f32 %v3339, %v2750
        %v3341 = vadd.f32 %v3340, %v2752
        %v3342 = vadd.f32 %v3341, %v2754
        %v3343 = vadd.f32 %v3342, %v2756
        %v3344 = vadd.f32 %v3343, %v2758
        %v3345 = vadd.f32 %v3344, %v2760
        %v3346 = vadd.f32 %v3345, %v2762
        %v3347 = vadd.f32 %v3346, %v2764
        %v3348 = vadd.f32 %v3347, %v2766
        %v3349 = vadd.f32 %v3348, %v2768
        %v3350 = vadd.f32 %v3349, %v2770
        %v3351 = vadd.f32 %v3350, %v2772
        %v3352 = vadd.f32 %v3351, %v2774
        %v3353 = vadd.f32 %v3352, %v2776
        %v3354 = vadd.f32 %v3353, %v2778
        %v3355 = vadd.f32 %v3354, %v2780
        %v3356 = vadd.f32 %v3355, %v2782
        %v3357 = vadd.f32 %v3356, %v2784
        %v3358 = vadd.f32 %v3357, %v2786
        %v3359 = vadd.f32 %v3358, %v2788
        %v3360 = vadd.f32 %v3359, %v2790
        %v3361 = vadd.f32 %v3360, %v2792
        %v3362 = vadd.f32 %v3361, %v2794
        %v3363 = vrot.slane %v3362, 4
        %v3364 = vadd.f32 %v3362, %v3363
        %v3365 = vrot.slane %v3364, 2
        %v3366 = vadd.f32 %v3364, %v3365
        %v3367 = vrot.slane %v3366, 1
        %v3368 = vadd.f32 %v3366, %v3367
        %v3369 = vadd.f32 %v2795, %v2797
        %v3370 = vadd.f32 %v3369, %v2799
        %v3371 = vadd.f32 %v3370, %v2801
        %v3372 = vadd.f32 %v3371, %v2803
        %v3373 = vadd.f32 %v3372, %v2805
        %v3374 = vadd.f32 %v3373, %v2807
        %v3375 = vadd.f32 %v3374, %v2809
        %v3376 = vadd.f32 %v3375, %v2811
        %v3377 = vadd.f32 %v3376, %v2813
        %v3378 = vadd.f32 %v3377, %v2815
        %v3379 = vadd.f32 %v3378, %v2817
        %v3380 = vadd.f32 %v3379, %v2819
        %v3381 = vadd.f32 %v3380, %v2821
        %v3382 = vadd.f32 %v3381, %v2823
        %v3383 = vadd.f32 %v3382, %v2825
        %v3384 = vadd.f32 %v3383, %v2827
        %v3385 = vadd.f32 %v3384, %v2829
        %v3386 = vadd.f32 %v3385, %v2831
        %v3387 = vadd.f32 %v3386, %v2833
        %v3388 = vadd.f32 %v3387, %v2835
        %v3389 = vadd.f32 %v3388, %v2837
        %v3390 = vadd.f32 %v3389, %v2839
        %v3391 = vadd.f32 %v3390, %v2841
        %v3392 = vadd.f32 %v3391, %v2843
        %v3393 = vadd.f32 %v3392, %v2845
        %v3394 = vadd.f32 %v3393, %v2847
        %v3395 = vadd.f32 %v3394, %v2849
        %v3396 = vadd.f32 %v3395, %v2851
        %v3397 = vadd.f32 %v3396, %v2853
        %v3398 = vadd.f32 %v3397, %v2855
        %v3399 = vadd.f32 %v3398, %v2857
        %v3400 = vrot.slane %v3399, 4
        %v3401 = vadd.f32 %v3399, %v3400
        %v3402 = vrot.slane %v3401, 2
        %v3403 = vadd.f32 %v3401, %v3402
        %v3404 = vrot.slane %v3403, 1
        %v3405 = vadd.f32 %v3403, %v3404
        %v3406 = vadd.f32 %v2796, %v2798
        %v3407 = vadd.f32 %v3406, %v2800
        %v3408 = vadd.f32 %v3407, %v2802
        %v3409 = vadd.f32 %v3408, %v2804
        %v3410 = vadd.f32 %v3409, %v2806
        %v3411 = vadd.f32 %v3410, %v2808
        %v3412 = vadd.f32 %v3411, %v2810
        %v3413 = vadd.f32 %v3412, %v2812
        %v3414 = vadd.f32 %v3413, %v2814
        %v3415 = vadd.f32 %v3414, %v2816
        %v3416 = vadd.f32 %v3415, %v2818
        %v3417 = vadd.f32 %v3416, %v2820
        %v3418 = vadd.f32 %v3417, %v2822
        %v3419 = vadd.f32 %v3418, %v2824
        %v3420 = vadd.f32 %v3419, %v2826
        %v3421 = vadd.f32 %v3420, %v2828
        %v3422 = vadd.f32 %v3421, %v2830
        %v3423 = vadd.f32 %v3422, %v2832
        %v3424 = vadd.f32 %v3423, %v2834
        %v3425 = vadd.f32 %v3424, %v2836
        %v3426 = vadd.f32 %v3425, %v2838
        %v3427 = vadd.f32 %v3426, %v2840
        %v3428 = vadd.f32 %v3427, %v2842
        %v3429 = vadd.f32 %v3428, %v2844
        %v3430 = vadd.f32 %v3429, %v2846
        %v3431 = vadd.f32 %v3430, %v2848
        %v3432 = vadd.f32 %v3431, %v2850
        %v3433 = vadd.f32 %v3432, %v2852
        %v3434 = vadd.f32 %v3433, %v2854
        %v3435 = vadd.f32 %v3434, %v2856
        %v3436 = vadd.f32 %v3435, %v2858
        %v3437 = vrot.slane %v3436, 4
        %v3438 = vadd.f32 %v3436, %v3437
        %v3439 = vrot.slane %v3438, 2
        %v3440 = vadd.f32 %v3438, %v3439
        %v3441 = vrot.slane %v3440, 1
        %v3442 = vadd.f32 %v3440, %v3441
        %v3443 = vadd.f32 %v2859, %v2861
        %v3444 = vadd.f32 %v3443, %v2863
        %v3445 = vadd.f32 %v3444, %v2865
        %v3446 = vadd.f32 %v3445, %v2867
        %v3447 = vadd.f32 %v3446, %v2869
        %v3448 = vadd.f32 %v3447, %v2871
        %v3449 = vadd.f32 %v3448, %v2873
        %v3450 = vadd.f32 %v3449, %v2875
        %v3451 = vadd.f32 %v3450, %v2877
        %v3452 = vadd.f32 %v3451, %v2879
        %v3453 = vadd.f32 %v3452, %v2881
        %v3454 = vadd.f32 %v3453, %v2883
        %v3455 = vadd.f32 %v3454, %v2885
        %v3456 = vadd.f32 %v3455, %v2887
        %v3457 = vadd.f32 %v3456, %v2889
        %v3458 = vadd.f32 %v3457, %v2891
        %v3459 = vadd.f32 %v3458, %v2893
        %v3460 = vadd.f32 %v3459, %v2895
        %v3461 = vadd.f32 %v3460, %v2897
        %v3462 = vadd.f32 %v3461, %v2899
        %v3463 = vadd.f32 %v3462, %v2901
        %v3464 = vadd.f32 %v3463, %v2903
        %v3465 = vadd.f32 %v3464, %v2905
        %v3466 = vadd.f32 %v3465, %v2907
        %v3467 = vadd.f32 %v3466, %v2909
        %v3468 = vadd.f32 %v3467, %v2911
        %v3469 = vadd.f32 %v3468, %v2913
        %v3470 = vadd.f32 %v3469, %v2915
        %v3471 = vadd.f32 %v3470, %v2917
        %v3472 = vadd.f32 %v3471, %v2919
        %v3473 = vadd.f32 %v3472, %v2921
        %v3474 = vrot.slane %v3473, 4
        %v3475 = vadd.f32 %v3473, %v3474
        %v3476 = vrot.slane %v3475, 2
        %v3477 = vadd.f32 %v3475, %v3476
        %v3478 = vrot.slane %v3477, 1
        %v3479 = vadd.f32 %v3477, %v3478
        %v3480 = vadd.f32 %v2860, %v2862
        %v3481 = vadd.f32 %v3480, %v2864
        %v3482 = vadd.f32 %v3481, %v2866
        %v3483 = vadd.f32 %v3482, %v2868
        %v3484 = vadd.f32 %v3483, %v2870
        %v3485 = vadd.f32 %v3484, %v2872
        %v3486 = vadd.f32 %v3485, %v2874
        %v3487 = vadd.f32 %v3486, %v2876
        %v3488 = vadd.f32 %v3487, %v2878
        %v3489 = vadd.f32 %v3488, %v2880
        %v3490 = vadd.f32 %v3489, %v2882
        %v3491 = vadd.f32 %v3490, %v2884
        %v3492 = vadd.f32 %v3491, %v2886
        %v3493 = vadd.f32 %v3492, %v2888
        %v3494 = vadd.f32 %v3493, %v2890
        %v3495 = vadd.f32 %v3494, %v2892
        %v3496 = vadd.f32 %v3495, %v2894
        %v3497 = vadd.f32 %v3496, %v2896
        %v3498 = vadd.f32 %v3497, %v2898
        %v3499 = vadd.f32 %v3498, %v2900
        %v3500 = vadd.f32 %v3499, %v2902
        %v3501 = vadd.f32 %v3500, %v2904
        %v3502 = vadd.f32 %v3501, %v2906
        %v3503 = vadd.f32 %v3502, %v2908
        %v3504 = vadd.f32 %v3503, %v2910
        %v3505 = vadd.f32 %v3504, %v2912
        %v3506 = vadd.f32 %v3505, %v2914
        %v3507 = vadd.f32 %v3506, %v2916
        %v3508 = vadd.f32 %v3507, %v2918
        %v3509 = vadd.f32 %v3508, %v2920
        %v3510 = vadd.f32 %v3509, %v2922
        %v3511 = vrot.slane %v3510, 4
        %v3512 = vadd.f32 %v3510, %v3511
        %v3513 = vrot.slane %v3512, 2
        %v3514 = vadd.f32 %v3512, %v3513
        %v3515 = vrot.slane %v3514, 1
        %v3516 = vadd.f32 %v3514, %v3515
        %vm3533 = vcmask 1041409
        %v3534 = vsel %vm3533, %v3035, %v2961
        %vm3535 = vcmask 1042434
        %v3536 = vsel %vm3535, %v3109, %v3534
        %vm3537 = vcmask 1043459
        %v3538 = vsel %vm3537, %v3183, %v3536
        %vm3539 = vcmask 1044484
        %v3540 = vsel %vm3539, %v3257, %v3538
        %vm3541 = vcmask 1045509
        %v3542 = vsel %vm3541, %v3331, %v3540
        %vm3543 = vcmask 1046534
        %v3544 = vsel %vm3543, %v3405, %v3542
        %vm3545 = vcmask 1047559
        %v3546 = vsel %vm3545, %v3479, %v3544
        %v3547 = vsel %vm3533, %v3072, %v2998
        %v3548 = vsel %vm3535, %v3146, %v3547
        %v3549 = vsel %vm3537, %v3220, %v3548
        %v3550 = vsel %vm3539, %v3294, %v3549
        %v3551 = vsel %vm3541, %v3368, %v3550
        %v3552 = vsel %vm3543, %v3442, %v3551
        %v3553 = vsel %vm3545, %v3516, %v3552
        %v3556 = vadd.f32 %v2923, %v3546
        %v3557 = vadd.f32 %v2924, %v3553
        %3558 = vst [vmem:[#allocation2] sm:$0xff] %v3556
        %3559 = vst [vmem:[#allocation2 + $0x8] sm:$0xff] %v3557
        // Predicated region
        $region57: #{tpu_custom_call.1} parent=39 // pred_check
          %p3560 = pneg %p304
        $region58: #{tpu_custom_call.1} parent=39 // pred_check_branch
          %3562 = sbr.rel (%p3560) target = $region60
        $region59: #{tpu_custom_call.1} parent=39 // pred_region
          %v3563 = vld [vmem:[#allocation2] sm:$0xff]
          %v3564 = vld [vmem:[#allocation2 + $0x8] sm:$0xff]
          %vm3565 = vcmp.eq.s32.totalorder %v313, 1
          %vm3566 = vcmp.eq.s32.totalorder %v314, 1
          %v3567 = vsel %vm3565, 0.0, %v3563
          %v3568 = vsel %vm3566, 0.0, %v3564
          %v3569 = vadd.f32 %v3567, %v3568
          %3570 = vadd.xlane.f32.xlu0 %v3569
          %v3571 = vpop.xlane.xlu0 %3570
          %v3572 = vld [vmem:[#allocation6] sm:$0xf]
          %v3573 = vld [vmem:[#allocation6 + $0x4] sm:$0xf]
          %v3574 = vld [vmem:[#allocation6 + $0x8] sm:$0xf]
          %v3575 = vld [vmem:[#allocation6 + $0xc] sm:$0xf]
          %v3576 = vld [vmem:[#allocation6 + $0x10] sm:$0xf]
          %v3577 = vld [vmem:[#allocation6 + $0x14] sm:$0xf]
          %v3578 = vld [vmem:[#allocation6 + $0x18] sm:$0xf]
          %v3579 = vld [vmem:[#allocation6 + $0x1c] sm:$0xf]
          %v3580 = vld [vmem:[#allocation6 + $0x20] sm:$0xf]
          %v3581 = vld [vmem:[#allocation6 + $0x24] sm:$0xf]
          %v3582 = vld [vmem:[#allocation6 + $0x28] sm:$0xf]
          %v3583 = vld [vmem:[#allocation6 + $0x2c] sm:$0xf]
          %v3584 = vld [vmem:[#allocation6 + $0x30] sm:$0xf]
          %v3585 = vld [vmem:[#allocation6 + $0x34] sm:$0xf]
          %v3586 = vld [vmem:[#allocation6 + $0x38] sm:$0xf]
          %v3587 = vld [vmem:[#allocation6 + $0x3c] sm:$0xf]
          %v3588 = vld [vmem:[#allocation6 + $0x40] sm:$0xf]
          %v3589 = vld [vmem:[#allocation6 + $0x44] sm:$0xf]
          %v3590 = vld [vmem:[#allocation6 + $0x48] sm:$0xf]
          %v3591 = vld [vmem:[#allocation6 + $0x4c] sm:$0xf]
          %v3592 = vld [vmem:[#allocation6 + $0x50] sm:$0xf]
          %v3593 = vld [vmem:[#allocation6 + $0x54] sm:$0xf]
          %v3594 = vld [vmem:[#allocation6 + $0x58] sm:$0xf]
          %v3595 = vld [vmem:[#allocation6 + $0x5c] sm:$0xf]
          %v3596 = vld [vmem:[#allocation6 + $0x60] sm:$0xf]
          %v3597 = vld [vmem:[#allocation6 + $0x64] sm:$0xf]
          %v3598 = vld [vmem:[#allocation6 + $0x68] sm:$0xf]
          %v3599 = vld [vmem:[#allocation6 + $0x6c] sm:$0xf]
          %v3600 = vld [vmem:[#allocation6 + $0x70] sm:$0xf]
          %v3601 = vld [vmem:[#allocation6 + $0x74] sm:$0xf]
          %v3602 = vld [vmem:[#allocation6 + $0x78] sm:$0xf]
          %v3603 = vld [vmem:[#allocation6 + $0x7c] sm:$0xf]
          %v3604 = vunpack.c.l.bf16 %v3572
          %v3605 = vunpack.c.l.bf16 %v3573
          %v3606 = vunpack.c.l.bf16 %v3574
          %v3607 = vunpack.c.l.bf16 %v3575
          %v3608 = vunpack.c.l.bf16 %v3576
          %v3609 = vunpack.c.l.bf16 %v3577
          %v3610 = vunpack.c.l.bf16 %v3578
          %v3611 = vunpack.c.l.bf16 %v3579
          %v3612 = vunpack.c.l.bf16 %v3580
          %v3613 = vunpack.c.l.bf16 %v3581
          %v3614 = vunpack.c.l.bf16 %v3582
          %v3615 = vunpack.c.l.bf16 %v3583
          %v3616 = vunpack.c.l.bf16 %v3584
          %v3617 = vunpack.c.l.bf16 %v3585
          %v3618 = vunpack.c.l.bf16 %v3586
          %v3619 = vunpack.c.l.bf16 %v3587
          %v3620 = vunpack.c.l.bf16 %v3588
          %v3621 = vunpack.c.l.bf16 %v3589
          %v3622 = vunpack.c.l.bf16 %v3590
          %v3623 = vunpack.c.l.bf16 %v3591
          %v3624 = vunpack.c.l.bf16 %v3592
          %v3625 = vunpack.c.l.bf16 %v3593
          %v3626 = vunpack.c.l.bf16 %v3594
          %v3627 = vunpack.c.l.bf16 %v3595
          %v3628 = vunpack.c.l.bf16 %v3596
          %v3629 = vunpack.c.l.bf16 %v3597
          %v3630 = vunpack.c.l.bf16 %v3598
          %v3631 = vunpack.c.l.bf16 %v3599
          %v3632 = vunpack.c.l.bf16 %v3600
          %v3633 = vunpack.c.l.bf16 %v3601
          %v3634 = vunpack.c.l.bf16 %v3602
          %v3635 = vunpack.c.l.bf16 %v3603
          %3636 = vmatprep.subr.mxu0 0.0
          %3637 = vmatpush1.msra.mxu0 %v3619
          %3638 = vmatprep.subr.mxu0 0.0
          %3639 = vmatpush1.msra.mxu0 %v3618
          %3640 = vmatprep.subr.mxu0 0.0
          %3641 = vmatpush1.msra.mxu0 %v3617
          %3642 = vmatprep.subr.mxu0 0.0
          %3643 = vmatpush1.msra.mxu0 %v3616
          %3644 = vmatprep.subr.mxu0 0.0
          %3645 = vmatpush1.msra.mxu0 %v3615
          %3646 = vmatprep.subr.mxu0 0.0
          %3647 = vmatpush1.msra.mxu0 %v3614
          %3648 = vmatprep.subr.mxu0 0.0
          %3649 = vmatpush1.msra.mxu0 %v3613
          %3650 = vmatprep.subr.mxu0 0.0
          %3651 = vmatpush1.msra.mxu0 %v3612
          %3652 = vmatprep.subr.mxu0 0.0
          %3653 = vmatpush1.msra.mxu0 %v3611
          %3654 = vmatprep.subr.mxu0 0.0
          %3655 = vmatpush1.msra.mxu0 %v3610
          %3656 = vmatprep.subr.mxu0 0.0
          %3657 = vmatpush1.msra.mxu0 %v3609
          %3658 = vmatprep.subr.mxu0 0.0
          %3659 = vmatpush1.msra.mxu0 %v3608
          %3660 = vmatprep.subr.mxu0 0.0
          %3661 = vmatpush1.msra.mxu0 %v3607
          %3662 = vmatprep.subr.mxu0 0.0
          %3663 = vmatpush1.msra.mxu0 %v3606
          %3664 = vmatprep.subr.mxu0 0.0
          %3665 = vmatpush1.msra.mxu0 %v3605
          %3666 = vmatprep.subr.mxu0 0.0
          %3667 = vmatpush1.msra.mxu0 %v3604
          %3668 = vmatprep.subr.mxu0 0.0
          %3669 = vmatpush2.msra.mxu0 %v3635
          %3670 = vmatprep.subr.mxu0 0.0
          %3671 = vmatpush2.msra.mxu0 %v3634
          %3672 = vmatprep.subr.mxu0 0.0
          %3673 = vmatpush2.msra.mxu0 %v3633
          %3674 = vmatprep.subr.mxu0 0.0
          %3675 = vmatpush2.msra.mxu0 %v3632
          %3676 = vmatprep.subr.mxu0 0.0
          %3677 = vmatpush2.msra.mxu0 %v3631
          %3678 = vmatprep.subr.mxu0 0.0
          %3679 = vmatpush2.msra.mxu0 %v3630
          %3680 = vmatprep.subr.mxu0 0.0
          %3681 = vmatpush2.msra.mxu0 %v3629
          %3682 = vmatprep.subr.mxu0 0.0
          %3683 = vmatpush2.msra.mxu0 %v3628
          %3684 = vmatprep.subr.mxu0 0.0
          %3685 = vmatpush2.msra.mxu0 %v3627
          %3686 = vmatprep.subr.mxu0 0.0
          %3687 = vmatpush2.msra.mxu0 %v3626
          %3688 = vmatprep.subr.mxu0 0.0
          %3689 = vmatpush2.msra.mxu0 %v3625
          %3690 = vmatprep.subr.mxu0 0.0
          %3691 = vmatpush2.msra.mxu0 %v3624
          %3692 = vmatprep.subr.mxu0 0.0
          %3693 = vmatpush2.msra.mxu0 %v3623
          %3694 = vmatprep.subr.mxu0 0.0
          %3695 = vmatpush2.msra.mxu0 %v3622
          %3696 = vmatprep.subr.mxu0 0.0
          %3697 = vmatpush2.msra.mxu0 %v3621
          %3698 = vmatprep.subr.mxu0 0.0
          %3699 = vmatpush2.msra.mxu0 %v3620
          %3700 = vmatprep.mubr.f32.mxu0 %v3568
          %3701 = vmatmul.mubr.f32.gmra.mxu0 %v3567
          %v3702 = vpop.f32.mrf.mxu0
          %v3703 = vadd.f32 0.0, %v3702
          %v3704 = vpop.f32.mrf.mxu0
          %3705 = vdwg.mxu0
          %v3706 = vmax.f32 %v3571, 1.0
          %v3707 = vrcp.pop %v3706
          %v3708 = vmul.f32 %v3703, %v3707
          %v3709 = vld [vmem:[#allocation8] sm:$0xff]
          %v3710 = vld [vmem:[#allocation8 + $0x8] sm:$0xff]
          %v3711 = vld [vmem:[#allocation8 + $0x10] sm:$0xff]
          %v3712 = vld [vmem:[#allocation8 + $0x18] sm:$0xff]
          %v3713 = vld [vmem:[#allocation8 + $0x20] sm:$0xff]
          %v3714 = vld [vmem:[#allocation8 + $0x28] sm:$0xff]
          %v3715 = vld [vmem:[#allocation8 + $0x30] sm:$0xff]
          %v3716 = vld [vmem:[#allocation8 + $0x38] sm:$0xff]
          %v3717 = vld [vmem:[#allocation8 + $0x40] sm:$0xff]
          %v3718 = vld [vmem:[#allocation8 + $0x48] sm:$0xff]
          %v3719 = vld [vmem:[#allocation8 + $0x50] sm:$0xff]
          %v3720 = vld [vmem:[#allocation8 + $0x58] sm:$0xff]
          %v3721 = vld [vmem:[#allocation8 + $0x60] sm:$0xff]
          %v3722 = vld [vmem:[#allocation8 + $0x68] sm:$0xff]
          %v3723 = vld [vmem:[#allocation8 + $0x70] sm:$0xff]
          %v3724 = vld [vmem:[#allocation8 + $0x78] sm:$0xff]
          %v3725 = vld [vmem:[%s3] sm:$0x1]
          %v3727 = vlaneseq
          %v3728 = vshrl.u32 %v3727, 7
          %v3729 = vsub.s32 0, %v3728
          %v3730 = vrot.slane %v3725, %v3729
          %3732 = vmatprep.subr.mxu0 0.0
          %3733 = vmatpush1.msra.mxu0 %v3724
          %3734 = vmatprep.subr.mxu0 0.0
          %3735 = vmatpush1.msra.mxu0 %v3723
          %3736 = vmatprep.subr.mxu0 0.0
          %3737 = vmatpush1.msra.mxu0 %v3722
          %3738 = vmatprep.subr.mxu0 0.0
          %3739 = vmatpush1.msra.mxu0 %v3721
          %3740 = vmatprep.subr.mxu0 0.0
          %3741 = vmatpush1.msra.mxu0 %v3720
          %3742 = vmatprep.subr.mxu0 0.0
          %3743 = vmatpush1.msra.mxu0 %v3719
          %3744 = vmatprep.subr.mxu0 0.0
          %3745 = vmatpush1.msra.mxu0 %v3718
          %3746 = vmatprep.subr.mxu0 0.0
          %3747 = vmatpush1.msra.mxu0 %v3717
          %3748 = vmatprep.subr.mxu0 0.0
          %3749 = vmatpush1.msra.mxu0 %v3716
          %3750 = vmatprep.subr.mxu0 0.0
          %3751 = vmatpush1.msra.mxu0 %v3715
          %3752 = vmatprep.subr.mxu0 0.0
          %3753 = vmatpush1.msra.mxu0 %v3714
          %3754 = vmatprep.subr.mxu0 0.0
          %3755 = vmatpush1.msra.mxu0 %v3713
          %3756 = vmatprep.subr.mxu0 0.0
          %3757 = vmatpush1.msra.mxu0 %v3712
          %3758 = vmatprep.subr.mxu0 0.0
          %3759 = vmatpush1.msra.mxu0 %v3711
          %3760 = vmatprep.subr.mxu0 0.0
          %3761 = vmatpush1.msra.mxu0 %v3710
          %3762 = vmatprep.subr.mxu0 0.0
          %3763 = vmatpush1.msra.mxu0 %v3709
          %3764 = vmatprep.subr.mxu0 0.0
          %3765 = vmatpush2.msra.mxu0 0.0
          %3766 = vmatprep.subr.mxu0 0.0
          %3767 = vmatpush2.msra.mxu0 0.0
          %3768 = vmatprep.subr.mxu0 0.0
          %3769 = vmatpush2.msra.mxu0 0.0
          %3770 = vmatprep.subr.mxu0 0.0
          %3771 = vmatpush2.msra.mxu0 0.0
          %3772 = vmatprep.subr.mxu0 0.0
          %3773 = vmatpush2.msra.mxu0 0.0
          %3774 = vmatprep.subr.mxu0 0.0
          %3775 = vmatpush2.msra.mxu0 0.0
          %3776 = vmatprep.subr.mxu0 0.0
          %3777 = vmatpush2.msra.mxu0 0.0
          %3778 = vmatprep.subr.mxu0 0.0
          %3779 = vmatpush2.msra.mxu0 0.0
          %3780 = vmatprep.subr.mxu0 0.0
          %3781 = vmatpush2.msra.mxu0 0.0
          %3782 = vmatprep.subr.mxu0 0.0
          %3783 = vmatpush2.msra.mxu0 0.0
          %3784 = vmatprep.subr.mxu0 0.0
          %3785 = vmatpush2.msra.mxu0 0.0
          %3786 = vmatprep.subr.mxu0 0.0
          %3787 = vmatpush2.msra.mxu0 0.0
          %3788 = vmatprep.subr.mxu0 0.0
          %3789 = vmatpush2.msra.mxu0 0.0
          %3790 = vmatprep.subr.mxu0 0.0
          %3791 = vmatpush2.msra.mxu0 0.0
          %3792 = vmatprep.subr.mxu0 0.0
          %3793 = vmatpush2.msra.mxu0 0.0
          %3794 = vmatprep.subr.mxu0 0.0
          %3795 = vmatpush2.msra.mxu0 0.0
          %3796 = vmatprep.mubr.f32.mxu0 0.0
          %3797 = vmatmul.mubr.f32.gmra.mxu0 %v3708
          %v3798 = vpop.f32.mrf.mxu0
          %v3799 = vadd.f32 %v3730, %v3798
          %v3800 = vpop.f32.mrf.mxu0
          %3801 = vdwg.mxu0
          %v3802 = vsub.f32 0.0, %v3799
          %v3803 = vmul.f32 %v3802, 1.442695
          %v3804 = vpow.pop %v3803
          %v3805 = vadd.f32 %v3804, 1.0
          %v3806 = vrcp.pop %v3805
          %v3807 = vmul.f32 1.0, %v3806
          %v3808 = vld [vmem:[%s303] sm:$0xff]
          %v3809 = vadd.f32 %v3807, 1e-10
          %v3810 = vlog2.pop %v3809
          %v3811 = vmul.f32 %v3810, 0.6931472
          %v3812 = vmul.f32 %v3811, %v3808
          %v3813 = vsub.f32 1.0, %v3807
          %v3814 = vadd.f32 %v3813, 1e-10
          %v3815 = vlog2.pop %v3814
          %v3816 = vmul.f32 %v3815, 0.6931472
          %v3817 = vsub.f32 1.0, %v3808
          %v3818 = vmul.f32 %v3816, %v3817
          %v3819 = vadd.f32 %v3812, %v3818
          %vm3820 = vcmp.eq.s32.totalorder %v313, 2
          %3822 = vset.pattern.permute.xlu0 0
          %3823 = vperm.xlu0 %3822, %v3819
          %v3824 = vpop.permute.xlu0 %3823
          %v3826 = vsel %vm3820, %v3824, %v3807
          %3827 = vst [vmem:[%s298] sm:$0xff] %v3826
        $region60: #{tpu_custom_call.1} parent=39 // pred_fallthru
          _
        %s3828 = sand.u32 %s160, 1
        %s3829 = scalar_lea.sflag [#allocation5], %s3828
        %s3830 = sand.u32 %s160, 1
        %s3831 = smul.addr %s3830, 8
        %s3832 = scalar_lea.vmem [#allocation9], %s3831
        // Predicated region
        $region61: #{tpu_custom_call.1} parent=39 // pred_check
          %p3833 = pneg %p170
        $region62: #{tpu_custom_call.1} parent=39 // pred_check_branch
          %3835 = sbr.rel (%p3833) target = $region64
        $region63: #{tpu_custom_call.1} parent=39 // pred_region
          %s3837 = ssub.s32 128, 128
          %3838 = vsyncadd %s3829, %s3837
          %s3839 = smul.addr %s27, 128
          %s3840 = scalar_lea.hbm %s5, %s3839
          %s3842 = sshll.u32 %s3832, 4
          %s3843 = int_to_ptr.vmem [resolvable:$true] %s3842
          %3845 = dma.vmem_to_hbm [thread:$0]  %s3843, 128, %s3840, %s3829
        $region64: #{tpu_custom_call.1} parent=39 // pred_fallthru
          _
      $region40: #{tpu_custom_call.1} parent=5 // pred_fallthru
        _
      %p3846 = scmp.le.s32.totalorder 2, %s18
      // Predicated region
      $region65: #{tpu_custom_call.1} parent=5 // pred_check
        %p3847 = pneg %p3846
      $region66: #{tpu_custom_call.1} parent=5 // pred_check_branch
        %3849 = sbr.rel (%p3847) target = $region68
      $region67: #{tpu_custom_call.1} parent=5 // pred_region
        %s3850 = ssub.s32 %s18, 2
        // Predicated region
        $region69: #{tpu_custom_call.1} parent=67 // pred_check
          %p3851 = pneg %p176
        $region70: #{tpu_custom_call.1} parent=67 // pred_check_branch
          %3853 = sbr.rel (%p3851) target = $region72
        $region71: #{tpu_custom_call.1} parent=67 // pred_region
          %s3854 = sand.u32 %s161, 1
          %s3855 = scalar_lea.sflag [#allocation5], %s3854
          %s3856 = sand.u32 %s161, 1
          %s3857 = smul.addr %s3856, 8
          %s3858 = scalar_lea.vmem [#allocation9], %s3857
          %3859 = dma.done %s3855, 128
        $region72: #{tpu_custom_call.1} parent=67 // pred_fallthru
          _
      $region68: #{tpu_custom_call.1} parent=5 // pred_fallthru
        _
    $region6: #{tpu_custom_call.1} parent=1 // loop_footer
      %s22 = sadd.s32 1, %s18
    $region7: #{tpu_custom_call.1} parent=1 // loop_footer_branch
      %17 = sbr.rel target = $region3
    $region8: #{tpu_custom_call.1} parent=1 // loop_exit
      _
    %3860 = vsyncpa [#allocation4], 1
    %s3861 = scalar_lea.sflag [#allocation4], 1
    %3862 = vsyncpa %s3861, 1
    %3863 = vsyncpa [#allocation7], 1
    %3864 = vsyncpa [#allocation5], 1
    %s3865 = scalar_lea.sflag [#allocation5], 1
    %3866 = vsyncpa %s3865, 1

</llo_original>
